<compile_context>
chip_gen: v7x
topology: tpu7x:2x2x1
jax: 0.10.0
libtpu: 0.0.40
codegen_flags: <defaults>
</compile_context>

<pallas_src>
import math

import jax
import jax.numpy as jnp
from jax.experimental import pallas as pl
from jax.experimental.pallas import tpu as pltpu

_LANE = 128        # lane width (last-dim alignment)
_SUBLANE = 8       # f32 sublane count (second-to-last-dim alignment)
_TIME_CHUNK = 8    # timesteps per streamed LSTM grid iteration
_VMEM_LIMIT = 48 * 1024 * 1024   # explicit scoped-VMEM budget (fits v7x's 64 MiB)


def _round_up(x, m):
    return (x + m - 1) // m * m


# ----------------------------------------------------------------------------
# Tiled matmul + bias kernel (used for the hoisted pre-gate GEMM and projection)
# ----------------------------------------------------------------------------
def _matmul_bias_kernel(x_ref, w_ref, b_ref, o_ref, acc_ref):
    @pl.when(pl.program_id(2) == 0)
    def _init():
        acc_ref[...] = jnp.zeros_like(acc_ref)

    acc_ref[...] += jnp.dot(x_ref[...], w_ref[...],
                            preferred_element_type=jnp.float32)

    @pl.when(pl.program_id(2) == pl.num_programs(2) - 1)
    def _finalize():
        o_ref[...] = (acc_ref[...] + b_ref[...]).astype(o_ref.dtype)


def _matmul_bias(x, w, b, *, out_dtype, tm=256, tn=512, tk=512):
    """(M, K) @ (K, N) + (N,) with a tiled, core-parallel grid.

    Tiles are multiples of (8, 128) (v5e MXU panels; also fine for v6e/v7x) and
    sized well inside the scoped VMEM limit.  Inputs are zero-padded up to tile
    multiples (zeros in K contribute nothing)."""
    M, K = x.shape
    _, N = w.shape
    tm = min(tm, _round_up(M, _SUBLANE))
    tn = min(tn, _round_up(N, _LANE))
    tk = min(tk, _round_up(K, _LANE))
    Mp, Kp, Np = _round_up(M, tm), _round_up(K, tk), _round_up(N, tn)

    xp = jnp.pad(x, ((0, Mp - M), (0, Kp - K)))
    wp = jnp.pad(w, ((0, Kp - K), (0, Np - N)))
    bp = jnp.pad(b.astype(jnp.float32).reshape(1, -1), ((0, 0), (0, Np - N)))

    out = pl.pallas_call(
        _matmul_bias_kernel,
        grid=(Mp // tm, Np // tn, Kp // tk),
        in_specs=[pl.BlockSpec((tm, tk), lambda i, j, k: (i, k)),
                  pl.BlockSpec((tk, tn), lambda i, j, k: (k, j)),
                  pl.BlockSpec((1, tn), lambda i, j, k: (0, j))],
        out_specs=pl.BlockSpec((tm, tn), lambda i, j, k: (i, j)),
        out_shape=jax.ShapeDtypeStruct((Mp, Np), out_dtype),
        scratch_shapes=[pltpu.VMEM((tm, tn), jnp.float32)],
        compiler_params=pltpu.CompilerParams(
            dimension_semantics=("parallel", "parallel", "arbitrary"),
            vmem_limit_bytes=_VMEM_LIMIT),
    )(xp, wp, bp)
    return out[:M, :N]


# ----------------------------------------------------------------------------
# Recurrent LSTM kernel: streams the time axis in chunks of _TIME_CHUNK steps.
# ----------------------------------------------------------------------------
def _lstm_chunk_kernel(nsteps_ref, lens_ref, z_ref, whh_ref, h0_ref, c0_ref,
                       out_ref, hN_ref, cN_ref, h_sc, c_sc):
    """One grid step == one chunk of timesteps.

    nsteps_ref : (1,)  i32 SMEM   max(lens)
    lens_ref   : (Bp, 1) i32      per-row lengths
    z_ref      : (TC, Bp, 4Hp)    pre-gates (x@W_ih^T + b, g-columns pre-scaled x2)
    whh_ref    : (Hp, 4Hp)        hidden->gate weights (g-columns pre-scaled x2)
    h0/c0      : (Bp, Hp) f32     initial state
    out_ref    : (TC, Bp, Hp)     per-step hidden, zero past each length
    hN/cN      : (Bp, Hp) f32     final state
    h_sc/c_sc  : (Bp, Hp) f32     VMEM carries, persist across grid steps
    """
    TC = z_ref.shape[0]
    Hp = h0_ref.shape[-1]
    chunk = pl.program_id(0)
    t0 = chunk * TC

    @pl.when(chunk == 0)
    def _init():
        h_sc[...] = h0_ref[...]
        c_sc[...] = c0_ref[...]

    nsteps = nsteps_ref[0]

    @pl.when(t0 >= nsteps)          # chunk is entirely past max(lens): zeros only
    def _skip():
        out_ref[...] = jnp.zeros_like(out_ref)

    @pl.when(t0 < nsteps)
    def _active():
        lens_v = lens_ref[...]                                    # (Bp, 1) i32
        for s in range(TC):                                       # static full unroll
            z = z_ref[s].astype(jnp.float32)                      # (Bp, 4Hp)
            gates = z + jnp.dot(h_sc[...].astype(whh_ref.dtype), whh_ref[...],
                                preferred_element_type=jnp.float32)
            sg = jax.nn.sigmoid(gates)                            # single wide EUP pass
            i = sg[:, 0 * Hp:1 * Hp]
            f = sg[:, 1 * Hp:2 * Hp]
            g = 2.0 * sg[:, 2 * Hp:3 * Hp] - 1.0                  # tanh(x)=2*sigmoid(2x)-1
            o = sg[:, 3 * Hp:4 * Hp]
            c_new = f * c_sc[...] + i * g
            h_new = o * jnp.tanh(c_new)
            mask = (t0 + s) < lens_v                              # (Bp, 1) bool
            c_sc[...] = jnp.where(mask, c_new, c_sc[...])
            h_sc[...] = jnp.where(mask, h_new, h_sc[...])
            out_ref[s] = jnp.where(mask, h_new,
                                   jnp.zeros_like(h_new)).astype(out_ref.dtype)

    @pl.when(chunk == pl.num_programs(0) - 1)
    def _final():
        hN_ref[...] = h_sc[...]
        cN_ref[...] = c_sc[...]


# ----------------------------------------------------------------------------
# Parameter preparation: gate-block padding to Hp, tanh-by-sigmoid pre-scaling,
# optional bf16 cast of matmul operands.
# ----------------------------------------------------------------------------
def _pad_and_scale_gates(w, H, Hp):
    """w: (4H, X), rows in gate order [i, f, g, o].  Pad each gate block of H rows
    to Hp rows with zeros and scale the g block by 2 (tanh via sigmoid)."""
    blocks = []
    for k in range(4):
        blk = w[k * H:(k + 1) * H]
        if k == 2:
            blk = blk * 2.0
        blocks.append(jnp.pad(blk, ((0, Hp - H), (0, 0))))
    return jnp.concatenate(blocks, axis=0)                        # (4Hp, X)


def _pad_and_scale_bias(b, H, Hp):
    blocks = []
    for k in range(4):
        blk = b[k * H:(k + 1) * H]
        if k == 2:
            blk = blk * 2.0
        blocks.append(jnp.pad(blk, (0, Hp - H)))
    return jnp.concatenate(blocks)                                # (4Hp,)


def prepare_params(raw, compute_dtype=jnp.float32):
    """Build kernel-ready (padded / pre-scaled / possibly bf16) parameters."""
    H = raw["w_hh"].shape[1]
    Hp = _round_up(H, _LANE)
    w_ih_p = _pad_and_scale_gates(raw["w_ih"], H, Hp)                       # (4Hp, E)
    w_hh_p = _pad_and_scale_gates(
        jnp.pad(raw["w_hh"], ((0, 0), (0, Hp - H))), H, Hp)                 # (4Hp, Hp)
    b_p = _pad_and_scale_bias(raw["b_gates"], H, Hp)                        # (4Hp,)
    w_proj_t = jnp.pad(raw["w_proj"].T, ((0, Hp - H), (0, 0)))              # (Hp, V)
    return {
        "embed": raw["embed"].astype(compute_dtype),
        "w_ih_t": w_ih_p.T.astype(compute_dtype),      # (E, 4Hp)
        "w_hh_t": w_hh_p.T.astype(compute_dtype),      # (Hp, 4Hp)
        "b_gates": b_p.astype(jnp.float32),            # (4Hp,)
        "w_proj_t": w_proj_t.astype(compute_dtype),    # (Hp, V)
        "b_proj": raw["b_proj"].astype(jnp.float32),   # (V,)
    }


# ----------------------------------------------------------------------------
# Forward pass (matches LSTM_LM.forward with eval-mode dropout)
# ----------------------------------------------------------------------------
def lstm_lm_forward(prep, x_tok, lens, hidden, *, t_out=None):
    """prep: prepare_params(...) output.  x_tok: (B, T) int32.  lens: (B,) int32.
    hidden: (h, c), each (1, B, H) f32.  t_out: static int (max(lens)) or None
    to return full-T logits (caller slices)."""
    B, T = x_tok.shape
    H = hidden[0].shape[-1]
    Hp = prep["w_hh_t"].shape[0]
    V = prep["w_proj_t"].shape[1]
    cdt = prep["w_ih_t"].dtype

    Bp = _round_up(B, _SUBLANE)
    TC = _TIME_CHUNK
    Tp = _round_up(T, TC)

    tok_p = jnp.pad(x_tok.astype(jnp.int32), ((0, Bp - B), (0, Tp - T)))
    lens_p = jnp.pad(lens.astype(jnp.int32), (0, Bp - B))
    h0 = jnp.pad(hidden[0][0].astype(jnp.float32), ((0, Bp - B), (0, Hp - H)))
    c0 = jnp.pad(hidden[1][0].astype(jnp.float32), ((0, Bp - B), (0, Hp - H)))

    # (1) Embedding gather, time-major.  (Dropout = identity in eval mode.)
    emb_tm = jnp.take(prep["embed"], tok_p.T, axis=0)             # (Tp, Bp, E)
    E = emb_tm.shape[-1]

    # (2) Hoisted input GEMM: pre-gates = x @ W_ih^T + b, one big tiled matmul.
    z_flat = _matmul_bias(emb_tm.reshape(Tp * Bp, E), prep["w_ih_t"],
                          prep["b_gates"], out_dtype=cdt)
    z_tm = z_flat.reshape(Tp, Bp, 4 * Hp)

    # (3) Recurrence, streamed over time chunks; h/c live in VMEM scratch.
    nsteps = jnp.max(lens_p).astype(jnp.int32).reshape(1)
    lens2d = lens_p.reshape(Bp, 1)

    out_tm, hN, cN = pl.pallas_call(
        _lstm_chunk_kernel,
        grid=(Tp // TC,),
        in_specs=[
            pl.BlockSpec(memory_space=pltpu.MemorySpace.SMEM),        # nsteps
            pl.BlockSpec((Bp, 1), lambda t: (0, 0)),                  # lens
            pl.BlockSpec((TC, Bp, 4 * Hp), lambda t: (t, 0, 0)),      # pre-gates chunk
            pl.BlockSpec((Hp, 4 * Hp), lambda t: (0, 0)),             # W_hh^T
            pl.BlockSpec((Bp, Hp), lambda t: (0, 0)),                 # h0
            pl.BlockSpec((Bp, Hp), lambda t: (0, 0)),                 # c0
        ],
        out_specs=(
            pl.BlockSpec((TC, Bp, Hp), lambda t: (t, 0, 0)),          # hidden chunk
            pl.BlockSpec((Bp, Hp), lambda t: (0, 0)),                 # final h
            pl.BlockSpec((Bp, Hp), lambda t: (0, 0)),                 # final c
        ),
        out_shape=(jax.ShapeDtypeStruct((Tp, Bp, Hp), cdt),
                   jax.ShapeDtypeStruct((Bp, Hp), jnp.float32),
                   jax.ShapeDtypeStruct((Bp, Hp), jnp.float32)),
        scratch_shapes=[pltpu.VMEM((Bp, Hp), jnp.float32),
                        pltpu.VMEM((Bp, Hp), jnp.float32)],
        compiler_params=pltpu.CompilerParams(
            dimension_semantics=("arbitrary",),
            vmem_limit_bytes=_VMEM_LIMIT),
    )(nsteps, lens2d, z_tm, prep["w_hh_t"], h0, c0)

    # (4) Projection: transpose the (small) hidden to batch-major, project only
    #     the valid timesteps, no post-projection transpose of the logits.
    T_eff = T if t_out is None else int(t_out)
    hid_bm = jnp.transpose(out_tm[:T_eff], (1, 0, 2)).reshape(Bp * T_eff, Hp)
    logits = _matmul_bias(hid_bm, prep["w_proj_t"], prep["b_proj"],
                          out_dtype=jnp.float32)
    logits = logits.reshape(Bp, T_eff, V)[:B]

    h_out = hN[:B, :H][None]                                      # (1, B, H)
    c_out = cN[:B, :H][None]
    return logits, (h_out, c_out)


# ----------------------------------------------------------------------------
# Deterministic parameter init (mirrors the PyTorch module's __init__ shapes)
# ----------------------------------------------------------------------------
def _xavier_normal(key, shape):
    fan_out, fan_in = shape[0], shape[1]
    std = math.sqrt(2.0 / (fan_in + fan_out))
    return std * jax.random.normal(key, shape, dtype=jnp.float32)


def init_params(key, vocab_size, embed_size, hidden_size):
    k_emb, k_ih, k_hh, k_pw, k_pb = jax.random.split(key, 5)
    embed = _xavier_normal(k_emb, (vocab_size, embed_size))
    w_ih = _xavier_normal(k_ih, (4 * hidden_size, embed_size))     # gates i,f,g,o
    w_hh = _xavier_normal(k_hh, (4 * hidden_size, hidden_size))
    b_gates = jnp.zeros((4 * hidden_size,), jnp.float32)           # zeroed by init_weights
    w_proj = _xavier_normal(k_pw, (vocab_size, hidden_size))
    bound = 1.0 / math.sqrt(hidden_size)                           # nn.Linear bias default
    b_proj = jax.random.uniform(k_pb, (vocab_size,), jnp.float32, -bound, bound)
    return {"embed": embed, "w_ih": w_ih, "w_hh": w_hh, "b_gates": b_gates,
            "w_proj": w_proj, "b_proj": b_proj}


# ----------------------------------------------------------------------------
# Pure-JAX f32 reference (for correctness check)
# ----------------------------------------------------------------------------
def reference_forward(raw, x_tok, lens, hidden, t_out):
    B, T = x_tok.shape
    H = raw["w_hh"].shape[1]
    emb = raw["embed"][x_tok]
    h = hidden[0][0]
    c = hidden[1][0]
    outs = []
    for t in range(T):
        gates = (emb[:, t, :] @ raw["w_ih"].T + h @ raw["w_hh"].T
                 + raw["b_gates"][None, :])
        i = jax.nn.sigmoid(gates[:, :H])
        f = jax.nn.sigmoid(gates[:, H:2 * H])
        g = jnp.tanh(gates[:, 2 * H:3 * H])
        o = jax.nn.sigmoid(gates[:, 3 * H:])
        c_new = f * c + i * g
        h_new = o * jnp.tanh(c_new)
        mask = (t < lens)[:, None]
        c = jnp.where(mask, c_new, c)
        h = jnp.where(mask, h_new, h)
        outs.append(jnp.where(mask, h_new, 0.0))
    hid = jnp.stack(outs, axis=1)
    logits = hid @ raw["w_proj"].T + raw["b_proj"]
    return logits[:, :t_out, :], (h[None], c[None])


# ----------------------------------------------------------------------------
if __name__ == "__main__":
    vocab_size, embed_size, hidden_size = 50, 16, 32
    B, T = 4, 8

    key = jax.random.PRNGKey(0)
    k_params, k_tok = jax.random.split(key)
    raw = init_params(k_params, vocab_size, embed_size, hidden_size)

    x_tok = jax.random.randint(k_tok, (B, T), 0, vocab_size, dtype=jnp.int32)
    lens = jnp.array([8, 6, 5, 3], dtype=jnp.int32)                # descending, as in spec
    h0 = jnp.zeros((1, B, hidden_size), jnp.float32)
    c0 = jnp.zeros((1, B, hidden_size), jnp.float32)
    t_out = int(lens.max())          # static, computed OUTSIDE the forward (no mid-fwd sync)

    ref_out, (ref_h, ref_c) = reference_forward(raw, x_tok, lens, (h0, c0), t_out)

    fwd = jax.jit(lstm_lm_forward, static_argnames=("t_out",))

    # --- f32 matmul operands: tight check against the f32 reference -----------
    prep32 = prepare_params(raw, compute_dtype=jnp.float32)
    out, (h, c) = fwd(prep32, x_tok, lens, (h0, c0), t_out=t_out)
    jax.block_until_ready((out, h, c))
    assert out.shape == (B, t_out, vocab_size)
    assert h.shape == (1, B, hidden_size) and c.shape == (1, B, hidden_size)
    assert jnp.allclose(out, ref_out, atol=5e-4, rtol=5e-4)
    assert jnp.allclose(h, ref_h, atol=5e-4, rtol=5e-4)
    assert jnp.allclose(c, ref_c, atol=5e-4, rtol=5e-4)

    # --- bf16 matmul operands (perf config): loose check ----------------------
    prep16 = prepare_params(raw, compute_dtype=jnp.bfloat16)
    out16, (h16, c16) = fwd(prep16, x_tok, lens, (h0, c0), t_out=t_out)
    jax.block_until_ready((out16, h16, c16))
    assert jnp.allclose(out16, ref_out, atol=5e-2, rtol=5e-2)
    assert jnp.allclose(h16, ref_h, atol=5e-2, rtol=5e-2)
    assert jnp.allclose(c16, ref_c, atol=5e-2, rtol=5e-2)

    print("KERNEL_OK")
</pallas_src>

<mosaic_0001>
module attributes {stable_mosaic.version = 11 : i64} {
  func.func @_matmul_bias_kernel(%arg0: i32, %arg1: i32, %arg2: i32, %arg3: memref<64x128xf32, #tpu.memory_space<vmem>>, %arg4: memref<128x512xf32, #tpu.memory_space<vmem>>, %arg5: memref<1x512xf32, #tpu.memory_space<vmem>>, %arg6: memref<64x512xf32, #tpu.memory_space<vmem>>, %arg7: memref<64x512xf32, #tpu.memory_space<vmem>>) attributes {dimension_semantics = [#tpu.dimension_semantics<parallel>, #tpu.dimension_semantics<parallel>, #tpu.dimension_semantics<arbitrary>], iteration_bounds = array<i64: 1, 1, 1>, scalar_prefetch = 0 : i64, scratch_operands = 1 : i64, tpu.core_type = #tpu.core_type<tc>, window_params = [{transform_indices = @transform_0, window_bounds = array<i64: 64, 128>}, {transform_indices = @transform_1, window_bounds = array<i64: 128, 512>}, {transform_indices = @transform_2, window_bounds = array<i64: 1, 512>}, {transform_indices = @transform_3, window_bounds = array<i64: 64, 512>}]} {
    %c0_i32 = arith.constant 0 : i32
    %0 = arith.cmpi eq, %arg2, %c0_i32 : i32
    %1 = arith.extui %0 : i1 to i32
    %c0_i32_0 = arith.constant 0 : i32
    %2 = arith.cmpi ne, %1, %c0_i32_0 : i32
    scf.if %2 {
      %cst_10 = arith.constant 0.000000e+00 : f32
      %12 = vector.broadcast %cst_10 : f32 to vector<64x512xf32>
      %c0_11 = arith.constant 0 : index
      %c0_12 = arith.constant 0 : index
      %13 = vector.load %arg7[%c0_11, %c0_12] : memref<64x512xf32, #tpu.memory_space<vmem>>, vector<64x512xf32>
      tpu.vector_store %arg7[%c0_11, %c0_12], %12 {strides = array<i32>} : memref<64x512xf32, #tpu.memory_space<vmem>>, vector<64x512xf32>,
    } else {
    }
    %c0 = arith.constant 0 : index
    %c0_1 = arith.constant 0 : index
    %3 = vector.load %arg7[%c0, %c0_1] : memref<64x512xf32, #tpu.memory_space<vmem>>, vector<64x512xf32>
    %c0_2 = arith.constant 0 : index
    %c0_3 = arith.constant 0 : index
    %4 = vector.load %arg3[%c0_2, %c0_3] : memref<64x128xf32, #tpu.memory_space<vmem>>, vector<64x128xf32>
    %c0_4 = arith.constant 0 : index
    %c0_5 = arith.constant 0 : index
    %5 = vector.load %arg4[%c0_4, %c0_5] : memref<128x512xf32, #tpu.memory_space<vmem>>, vector<128x512xf32>
    %cst = arith.constant dense<0.000000e+00> : vector<64x512xf32>
    %6 = tpu.matmul %4, %5, %cst {dimension_numbers = #tpu.dot_dimension_numbers<[1], [0], [0], [1], [0, 0, 1, 1], [], []>} : vector<64x128xf32>, vector<128x512xf32>, vector<64x512xf32> -> vector<64x512xf32>
    %7 = arith.addf %3, %6 : vector<64x512xf32>
    %c0_6 = arith.constant 0 : index
    %c0_7 = arith.constant 0 : index
    %8 = vector.load %arg7[%c0_6, %c0_7] : memref<64x512xf32, #tpu.memory_space<vmem>>, vector<64x512xf32>
    tpu.vector_store %arg7[%c0_6, %c0_7], %7 {strides = array<i32>} : memref<64x512xf32, #tpu.memory_space<vmem>>, vector<64x512xf32>,
    %c0_i32_8 = arith.constant 0 : i32
    %9 = arith.cmpi eq, %arg2, %c0_i32_8 : i32
    %10 = arith.extui %9 : i1 to i32
    %c0_i32_9 = arith.constant 0 : i32
    %11 = arith.cmpi ne, %10, %c0_i32_9 : i32
    scf.if %11 {
      %c0_10 = arith.constant 0 : index
      %c0_11 = arith.constant 0 : index
      %12 = vector.load %arg7[%c0_10, %c0_11] : memref<64x512xf32, #tpu.memory_space<vmem>>, vector<64x512xf32>
      %c0_12 = arith.constant 0 : index
      %c0_13 = arith.constant 0 : index
      %13 = vector.load %arg5[%c0_12, %c0_13] : memref<1x512xf32, #tpu.memory_space<vmem>>, vector<1x512xf32>
      %14 = vector.broadcast %13 : vector<1x512xf32> to vector<64x512xf32>
      %15 = arith.addf %12, %14 : vector<64x512xf32>
      %c0_14 = arith.constant 0 : index
      %c0_15 = arith.constant 0 : index
      %16 = vector.load %arg6[%c0_14, %c0_15] : memref<64x512xf32, #tpu.memory_space<vmem>>, vector<64x512xf32>
      tpu.vector_store %arg6[%c0_14, %c0_15], %15 {strides = array<i32>} : memref<64x512xf32, #tpu.memory_space<vmem>>, vector<64x512xf32>,
    } else {
    }
    return
  }
  func.func @transform_0(%arg0: i32, %arg1: i32, %arg2: i32) -> (i32, i32) {
    %c0_i32 = arith.constant 0 : i32
    return %arg0, %arg2 : i32, i32
  }
  func.func @transform_1(%arg0: i32, %arg1: i32, %arg2: i32) -> (i32, i32) {
    %c0_i32 = arith.constant 0 : i32
    return %arg2, %arg1 : i32, i32
  }
  func.func @transform_2(%arg0: i32, %arg1: i32, %arg2: i32) -> (i32, i32) {
    %c0_i32 = arith.constant 0 : i32
    %c0_i32_0 = arith.constant 0 : i32
    return %c0_i32, %arg1 : i32, i32
  }
  func.func @transform_3(%arg0: i32, %arg1: i32, %arg2: i32) -> (i32, i32) {
    %c0_i32 = arith.constant 0 : i32
    return %arg0, %arg1 : i32, i32
  }
}

module attributes {stable_mosaic.version = 11 : i64} {
  func.func @_lstm_chunk_kernel(%arg0: i32, %arg1: memref<1xi32, #tpu.memory_space<smem>>, %arg2: memref<8x1xi32, #tpu.memory_space<vmem>>, %arg3: memref<8x8x512xf32, #tpu.memory_space<vmem>>, %arg4: memref<128x512xf32, #tpu.memory_space<vmem>>, %arg5: memref<8x128xf32, #tpu.memory_space<vmem>>, %arg6: memref<8x128xf32, #tpu.memory_space<vmem>>, %arg7: memref<8x8x128xf32, #tpu.memory_space<vmem>>, %arg8: memref<8x128xf32, #tpu.memory_space<vmem>>, %arg9: memref<8x128xf32, #tpu.memory_space<vmem>>, %arg10: memref<8x128xf32, #tpu.memory_space<vmem>>, %arg11: memref<8x128xf32, #tpu.memory_space<vmem>>) attributes {dimension_semantics = [#tpu.dimension_semantics<arbitrary>], iteration_bounds = array<i64: 1>, scalar_prefetch = 0 : i64, scratch_operands = 2 : i64, tpu.core_type = #tpu.core_type<tc>, window_params = [{transform_indices = @transform_0, window_bounds = array<i64: 1>}, {pipeline_mode = #tpu.pipeline_mode<synchronous>, transform_indices = @transform_1, window_bounds = array<i64: 8, 1>}, {transform_indices = @transform_2, window_bounds = array<i64: 8, 8, 512>}, {pipeline_mode = #tpu.pipeline_mode<synchronous>, transform_indices = @transform_3, window_bounds = array<i64: 128, 512>}, {pipeline_mode = #tpu.pipeline_mode<synchronous>, transform_indices = @transform_4, window_bounds = array<i64: 8, 128>}, {pipeline_mode = #tpu.pipeline_mode<synchronous>, transform_indices = @transform_5, window_bounds = array<i64: 8, 128>}, {transform_indices = @transform_6, window_bounds = array<i64: 8, 8, 128>}, {pipeline_mode = #tpu.pipeline_mode<synchronous>, transform_indices = @transform_7, window_bounds = array<i64: 8, 128>}, {pipeline_mode = #tpu.pipeline_mode<synchronous>, transform_indices = @transform_8, window_bounds = array<i64: 8, 128>}]} {
    %c8_i32 = arith.constant 8 : i32
    %0 = arith.muli %arg0, %c8_i32 : i32
    %c0_i32 = arith.constant 0 : i32
    %1 = arith.cmpi eq, %arg0, %c0_i32 : i32
    %2 = arith.extui %1 : i1 to i32
    %c0_i32_0 = arith.constant 0 : i32
    %3 = arith.cmpi ne, %2, %c0_i32_0 : i32
    scf.if %3 {
      %c0_5 = arith.constant 0 : index
      %c0_6 = arith.constant 0 : index
      %14 = vector.load %arg5[%c0_5, %c0_6] : memref<8x128xf32, #tpu.memory_space<vmem>>, vector<8x128xf32>
      %c0_7 = arith.constant 0 : index
      %c0_8 = arith.constant 0 : index
      %15 = vector.load %arg10[%c0_7, %c0_8] : memref<8x128xf32, #tpu.memory_space<vmem>>, vector<8x128xf32>
      tpu.vector_store %arg10[%c0_7, %c0_8], %14 {strides = array<i32>} : memref<8x128xf32, #tpu.memory_space<vmem>>, vector<8x128xf32>,
      %c0_9 = arith.constant 0 : index
      %c0_10 = arith.constant 0 : index
      %16 = vector.load %arg6[%c0_9, %c0_10] : memref<8x128xf32, #tpu.memory_space<vmem>>, vector<8x128xf32>
      %c0_11 = arith.constant 0 : index
      %c0_12 = arith.constant 0 : index
      %17 = vector.load %arg11[%c0_11, %c0_12] : memref<8x128xf32, #tpu.memory_space<vmem>>, vector<8x128xf32>
      tpu.vector_store %arg11[%c0_11, %c0_12], %16 {strides = array<i32>} : memref<8x128xf32, #tpu.memory_space<vmem>>, vector<8x128xf32>,
    } else {
    }
    %c0 = arith.constant 0 : index
    %4 = memref.load %arg1[%c0] : memref<1xi32, #tpu.memory_space<smem>>
    %5 = arith.cmpi sge, %0, %4 : i32
    %6 = arith.extui %5 : i1 to i32
    %c0_i32_1 = arith.constant 0 : i32
    %7 = arith.cmpi ne, %6, %c0_i32_1 : i32
    scf.if %7 {
      %cst = arith.constant 0.000000e+00 : f32
      %14 = vector.broadcast %cst : f32 to vector<8x8x128xf32>
      %c0_5 = arith.constant 0 : index
      %c0_6 = arith.constant 0 : index
      %c0_7 = arith.constant 0 : index
      %15 = vector.load %arg7[%c0_5, %c0_6, %c0_7] : memref<8x8x128xf32, #tpu.memory_space<vmem>>, vector<8x8x128xf32>
      tpu.vector_store %arg7[%c0_5, %c0_6, %c0_7], %14 {strides = array<i32>} : memref<8x8x128xf32, #tpu.memory_space<vmem>>, vector<8x8x128xf32>,
    } else {
    }
    %8 = arith.cmpi slt, %0, %4 : i32
    %9 = arith.extui %8 : i1 to i32
    %c0_i32_2 = arith.constant 0 : i32
    %10 = arith.cmpi ne, %9, %c0_i32_2 : i32
    scf.if %10 {
      %c0_5 = arith.constant 0 : index
      %c0_6 = arith.constant 0 : index
      %14 = vector.load %arg2[%c0_5, %c0_6] : memref<8x1xi32, #tpu.memory_space<vmem>>, vector<8x1xi32>
      %c0_7 = arith.constant 0 : index
      %c0_8 = arith.constant 0 : index
      %c0_9 = arith.constant 0 : index
      %15 = vector.load %arg3[%c0_7, %c0_8, %c0_9] : memref<8x8x512xf32, #tpu.memory_space<vmem>>, vector<1x8x512xf32>
      %16 = vector.shape_cast %15 : vector<1x8x512xf32> to vector<8x512xf32>
      %c0_10 = arith.constant 0 : index
      %c0_11 = arith.constant 0 : index
      %17 = vector.load %arg10[%c0_10, %c0_11] : memref<8x128xf32, #tpu.memory_space<vmem>>, vector<8x128xf32>
      %c0_12 = arith.constant 0 : index
      %c0_13 = arith.constant 0 : index
      %18 = vector.load %arg4[%c0_12, %c0_13] : memref<128x512xf32, #tpu.memory_space<vmem>>, vector<128x512xf32>
      %cst = arith.constant dense<0.000000e+00> : vector<8x512xf32>
      %19 = tpu.matmul %17, %18, %cst {dimension_numbers = #tpu.dot_dimension_numbers<[1], [0], [0], [1], [0, 0, 1, 1], [], []>} : vector<8x128xf32>, vector<128x512xf32>, vector<8x512xf32> -> vector<8x512xf32>
      %20 = arith.addf %16, %19 : vector<8x512xf32>
      %21 = arith.negf %20 : vector<8x512xf32>
      %22 = math.exp %21 : vector<8x512xf32>
      %cst_14 = arith.constant 1.000000e+00 : f32
      %23 = vector.broadcast %cst_14 : f32 to vector<8x512xf32>
      %24 = arith.addf %23, %22 : vector<8x512xf32>
      %25 = arith.divf %23, %24 : vector<8x512xf32>
      %26 = vector.extract_strided_slice %25 {offsets = [0, 0], sizes = [8, 128], strides = [1, 1]} : vector<8x512xf32> to vector<8x128xf32>
      %27 = vector.extract_strided_slice %25 {offsets = [0, 128], sizes = [8, 128], strides = [1, 1]} : vector<8x512xf32> to vector<8x128xf32>
      %28 = vector.extract_strided_slice %25 {offsets = [0, 256], sizes = [8, 128], strides = [1, 1]} : vector<8x512xf32> to vector<8x128xf32>
      %cst_15 = arith.constant 2.000000e+00 : f32
      %29 = vector.broadcast %cst_15 : f32 to vector<8x128xf32>
      %30 = arith.mulf %29, %28 : vector<8x128xf32>
      %cst_16 = arith.constant 1.000000e+00 : f32
      %31 = vector.broadcast %cst_16 : f32 to vector<8x128xf32>
      %32 = arith.subf %30, %31 : vector<8x128xf32>
      %33 = vector.extract_strided_slice %25 {offsets = [0, 384], sizes = [8, 128], strides = [1, 1]} : vector<8x512xf32> to vector<8x128xf32>
      %c0_17 = arith.constant 0 : index
      %c0_18 = arith.constant 0 : index
      %34 = vector.load %arg11[%c0_17, %c0_18] : memref<8x128xf32, #tpu.memory_space<vmem>>, vector<8x128xf32>
      %35 = arith.mulf %27, %34 : vector<8x128xf32>
      %36 = arith.mulf %26, %32 : vector<8x128xf32>
      %37 = arith.addf %35, %36 : vector<8x128xf32>
      %38 = math.tanh %37 : vector<8x128xf32>
      %39 = arith.mulf %33, %38 : vector<8x128xf32>
      %c0_i32_19 = arith.constant 0 : i32
      %40 = arith.addi %0, %c0_i32_19 : i32
      %41 = vector.broadcast %40 : i32 to vector<8x1xi32>
      %42 = arith.cmpi slt, %41, %14 : vector<8x1xi32>
      %c0_20 = arith.constant 0 : index
      %c0_21 = arith.constant 0 : index
      %43 = vector.load %arg11[%c0_20, %c0_21] : memref<8x128xf32, #tpu.memory_space<vmem>>, vector<8x128xf32>
      %44 = vector.shape_cast %42 : vector<8x1xi1> to vector<8x1xi1>
      %45 = vector.broadcast %44 : vector<8x1xi1> to vector<8x128xi1>
      %46 = arith.select %45, %37, %43 : vector<8x128xi1>, vector<8x128xf32>
      %c0_22 = arith.constant 0 : index
      %c0_23 = arith.constant 0 : index
      %47 = vector.load %arg11[%c0_22, %c0_23] : memref<8x128xf32, #tpu.memory_space<vmem>>, vector<8x128xf32>
      tpu.vector_store %arg11[%c0_22, %c0_23], %46 {strides = array<i32>} : memref<8x128xf32, #tpu.memory_space<vmem>>, vector<8x128xf32>,
      %c0_24 = arith.constant 0 : index
      %c0_25 = arith.constant 0 : index
      %48 = vector.load %arg10[%c0_24, %c0_25] : memref<8x128xf32, #tpu.memory_space<vmem>>, vector<8x128xf32>
      %49 = vector.shape_cast %42 : vector<8x1xi1> to vector<8x1xi1>
      %50 = vector.broadcast %49 : vector<8x1xi1> to vector<8x128xi1>
      %51 = arith.select %50, %39, %48 : vector<8x128xi1>, vector<8x128xf32>
      %c0_26 = arith.constant 0 : index
      %c0_27 = arith.constant 0 : index
      %52 = vector.load %arg10[%c0_26, %c0_27] : memref<8x128xf32, #tpu.memory_space<vmem>>, vector<8x128xf32>
      tpu.vector_store %arg10[%c0_26, %c0_27], %51 {strides = array<i32>} : memref<8x128xf32, #tpu.memory_space<vmem>>, vector<8x128xf32>,
      %cst_28 = arith.constant 0.000000e+00 : f32
      %53 = vector.broadcast %cst_28 : f32 to vector<8x128xf32>
      %54 = vector.shape_cast %42 : vector<8x1xi1> to vector<8x1xi1>
      %55 = vector.broadcast %54 : vector<8x1xi1> to vector<8x128xi1>
      %56 = arith.select %55, %39, %53 : vector<8x128xi1>, vector<8x128xf32>
      %c0_29 = arith.constant 0 : index
      %c0_30 = arith.constant 0 : index
      %c0_31 = arith.constant 0 : index
      %57 = vector.load %arg7[%c0_29, %c0_30, %c0_31] : memref<8x8x128xf32, #tpu.memory_space<vmem>>, vector<1x8x128xf32>
      %58 = vector.shape_cast %57 : vector<1x8x128xf32> to vector<8x128xf32>
      %59 = vector.shape_cast %56 : vector<8x128xf32> to vector<1x8x128xf32>
      tpu.vector_store %arg7[%c0_29, %c0_30, %c0_31], %59 {strides = array<i32>} : memref<8x8x128xf32, #tpu.memory_space<vmem>>, vector<1x8x128xf32>,
      %c1 = arith.constant 1 : index
      %c0_32 = arith.constant 0 : index
      %c0_33 = arith.constant 0 : index
      %60 = vector.load %arg3[%c1, %c0_32, %c0_33] : memref<8x8x512xf32, #tpu.memory_space<vmem>>, vector<1x8x512xf32>
      %61 = vector.shape_cast %60 : vector<1x8x512xf32> to vector<8x512xf32>
      %c0_34 = arith.constant 0 : index
      %c0_35 = arith.constant 0 : index
      %62 = vector.load %arg10[%c0_34, %c0_35] : memref<8x128xf32, #tpu.memory_space<vmem>>, vector<8x128xf32>
      %c0_36 = arith.constant 0 : index
      %c0_37 = arith.constant 0 : index
      %63 = vector.load %arg4[%c0_36, %c0_37] : memref<128x512xf32, #tpu.memory_space<vmem>>, vector<128x512xf32>
      %cst_38 = arith.constant dense<0.000000e+00> : vector<8x512xf32>
      %64 = tpu.matmul %62, %63, %cst_38 {dimension_numbers = #tpu.dot_dimension_numbers<[1], [0], [0], [1], [0, 0, 1, 1], [], []>} : vector<8x128xf32>, vector<128x512xf32>, vector<8x512xf32> -> vector<8x512xf32>
      %65 = arith.addf %61, %64 : vector<8x512xf32>
      %66 = arith.negf %65 : vector<8x512xf32>
      %67 = math.exp %66 : vector<8x512xf32>
      %cst_39 = arith.constant 1.000000e+00 : f32
      %68 = vector.broadcast %cst_39 : f32 to vector<8x512xf32>
      %69 = arith.addf %68, %67 : vector<8x512xf32>
      %70 = arith.divf %68, %69 : vector<8x512xf32>
      %71 = vector.extract_strided_slice %70 {offsets = [0, 0], sizes = [8, 128], strides = [1, 1]} : vector<8x512xf32> to vector<8x128xf32>
      %72 = vector.extract_strided_slice %70 {offsets = [0, 128], sizes = [8, 128], strides = [1, 1]} : vector<8x512xf32> to vector<8x128xf32>
      %73 = vector.extract_strided_slice %70 {offsets = [0, 256], sizes = [8, 128], strides = [1, 1]} : vector<8x512xf32> to vector<8x128xf32>
      %cst_40 = arith.constant 2.000000e+00 : f32
      %74 = vector.broadcast %cst_40 : f32 to vector<8x128xf32>
      %75 = arith.mulf %74, %73 : vector<8x128xf32>
      %cst_41 = arith.constant 1.000000e+00 : f32
      %76 = vector.broadcast %cst_41 : f32 to vector<8x128xf32>
      %77 = arith.subf %75, %76 : vector<8x128xf32>
      %78 = vector.extract_strided_slice %70 {offsets = [0, 384], sizes = [8, 128], strides = [1, 1]} : vector<8x512xf32> to vector<8x128xf32>
      %c0_42 = arith.constant 0 : index
      %c0_43 = arith.constant 0 : index
      %79 = vector.load %arg11[%c0_42, %c0_43] : memref<8x128xf32, #tpu.memory_space<vmem>>, vector<8x128xf32>
      %80 = arith.mulf %72, %79 : vector<8x128xf32>
      %81 = arith.mulf %71, %77 : vector<8x128xf32>
      %82 = arith.addf %80, %81 : vector<8x128xf32>
      %83 = math.tanh %82 : vector<8x128xf32>
      %84 = arith.mulf %78, %83 : vector<8x128xf32>
      %c1_i32 = arith.constant 1 : i32
      %85 = arith.addi %0, %c1_i32 : i32
      %86 = vector.broadcast %85 : i32 to vector<8x1xi32>
      %87 = arith.cmpi slt, %86, %14 : vector<8x1xi32>
      %c0_44 = arith.constant 0 : index
      %c0_45 = arith.constant 0 : index
      %88 = vector.load %arg11[%c0_44, %c0_45] : memref<8x128xf32, #tpu.memory_space<vmem>>, vector<8x128xf32>
      %89 = vector.shape_cast %87 : vector<8x1xi1> to vector<8x1xi1>
      %90 = vector.broadcast %89 : vector<8x1xi1> to vector<8x128xi1>
      %91 = arith.select %90, %82, %88 : vector<8x128xi1>, vector<8x128xf32>
      %c0_46 = arith.constant 0 : index
      %c0_47 = arith.constant 0 : index
      %92 = vector.load %arg11[%c0_46, %c0_47] : memref<8x128xf32, #tpu.memory_space<vmem>>, vector<8x128xf32>
      tpu.vector_store %arg11[%c0_46, %c0_47], %91 {strides = array<i32>} : memref<8x128xf32, #tpu.memory_space<vmem>>, vector<8x128xf32>,
      %c0_48 = arith.constant 0 : index
      %c0_49 = arith.constant 0 : index
      %93 = vector.load %arg10[%c0_48, %c0_49] : memref<8x128xf32, #tpu.memory_space<vmem>>, vector<8x128xf32>
      %94 = vector.shape_cast %87 : vector<8x1xi1> to vector<8x1xi1>
      %95 = vector.broadcast %94 : vector<8x1xi1> to vector<8x128xi1>
      %96 = arith.select %95, %84, %93 : vector<8x128xi1>, vector<8x128xf32>
      %c0_50 = arith.constant 0 : index
      %c0_51 = arith.constant 0 : index
      %97 = vector.load %arg10[%c0_50, %c0_51] : memref<8x128xf32, #tpu.memory_space<vmem>>, vector<8x128xf32>
      tpu.vector_store %arg10[%c0_50, %c0_51], %96 {strides = array<i32>} : memref<8x128xf32, #tpu.memory_space<vmem>>, vector<8x128xf32>,
      %cst_52 = arith.constant 0.000000e+00 : f32
      %98 = vector.broadcast %cst_52 : f32 to vector<8x128xf32>
      %99 = vector.shape_cast %87 : vector<8x1xi1> to vector<8x1xi1>
      %100 = vector.broadcast %99 : vector<8x1xi1> to vector<8x128xi1>
      %101 = arith.select %100, %84, %98 : vector<8x128xi1>, vector<8x128xf32>
      %c1_53 = arith.constant 1 : index
      %c0_54 = arith.constant 0 : index
      %c0_55 = arith.constant 0 : index
      %102 = vector.load %arg7[%c1_53, %c0_54, %c0_55] : memref<8x8x128xf32, #tpu.memory_space<vmem>>, vector<1x8x128xf32>
      %103 = vector.shape_cast %102 : vector<1x8x128xf32> to vector<8x128xf32>
      %104 = vector.shape_cast %101 : vector<8x128xf32> to vector<1x8x128xf32>
      tpu.vector_store %arg7[%c1_53, %c0_54, %c0_55], %104 {strides = array<i32>} : memref<8x8x128xf32, #tpu.memory_space<vmem>>, vector<1x8x128xf32>,
      %c2 = arith.constant 2 : index
      %c0_56 = arith.constant 0 : index
      %c0_57 = arith.constant 0 : index
      %105 = vector.load %arg3[%c2, %c0_56, %c0_57] : memref<8x8x512xf32, #tpu.memory_space<vmem>>, vector<1x8x512xf32>
      %106 = vector.shape_cast %105 : vector<1x8x512xf32> to vector<8x512xf32>
      %c0_58 = arith.constant 0 : index
      %c0_59 = arith.constant 0 : index
      %107 = vector.load %arg10[%c0_58, %c0_59] : memref<8x128xf32, #tpu.memory_space<vmem>>, vector<8x128xf32>
      %c0_60 = arith.constant 0 : index
      %c0_61 = arith.constant 0 : index
      %108 = vector.load %arg4[%c0_60, %c0_61] : memref<128x512xf32, #tpu.memory_space<vmem>>, vector<128x512xf32>
      %cst_62 = arith.constant dense<0.000000e+00> : vector<8x512xf32>
      %109 = tpu.matmul %107, %108, %cst_62 {dimension_numbers = #tpu.dot_dimension_numbers<[1], [0], [0], [1], [0, 0, 1, 1], [], []>} : vector<8x128xf32>, vector<128x512xf32>, vector<8x512xf32> -> vector<8x512xf32>
      %110 = arith.addf %106, %109 : vector<8x512xf32>
      %111 = arith.negf %110 : vector<8x512xf32>
      %112 = math.exp %111 : vector<8x512xf32>
      %cst_63 = arith.constant 1.000000e+00 : f32
      %113 = vector.broadcast %cst_63 : f32 to vector<8x512xf32>
      %114 = arith.addf %113, %112 : vector<8x512xf32>
      %115 = arith.divf %113, %114 : vector<8x512xf32>
      %116 = vector.extract_strided_slice %115 {offsets = [0, 0], sizes = [8, 128], strides = [1, 1]} : vector<8x512xf32> to vector<8x128xf32>
      %117 = vector.extract_strided_slice %115 {offsets = [0, 128], sizes = [8, 128], strides = [1, 1]} : vector<8x512xf32> to vector<8x128xf32>
      %118 = vector.extract_strided_slice %115 {offsets = [0, 256], sizes = [8, 128], strides = [1, 1]} : vector<8x512xf32> to vector<8x128xf32>
      %cst_64 = arith.constant 2.000000e+00 : f32
      %119 = vector.broadcast %cst_64 : f32 to vector<8x128xf32>
      %120 = arith.mulf %119, %118 : vector<8x128xf32>
      %cst_65 = arith.constant 1.000000e+00 : f32
      %121 = vector.broadcast %cst_65 : f32 to vector<8x128xf32>
      %122 = arith.subf %120, %121 : vector<8x128xf32>
      %123 = vector.extract_strided_slice %115 {offsets = [0, 384], sizes = [8, 128], strides = [1, 1]} : vector<8x512xf32> to vector<8x128xf32>
      %c0_66 = arith.constant 0 : index
      %c0_67 = arith.constant 0 : index
      %124 = vector.load %arg11[%c0_66, %c0_67] : memref<8x128xf32, #tpu.memory_space<vmem>>, vector<8x128xf32>
      %125 = arith.mulf %117, %124 : vector<8x128xf32>
      %126 = arith.mulf %116, %122 : vector<8x128xf32>
      %127 = arith.addf %125, %126 : vector<8x128xf32>
      %128 = math.tanh %127 : vector<8x128xf32>
      %129 = arith.mulf %123, %128 : vector<8x128xf32>
      %c2_i32 = arith.constant 2 : i32
      %130 = arith.addi %0, %c2_i32 : i32
      %131 = vector.broadcast %130 : i32 to vector<8x1xi32>
      %132 = arith.cmpi slt, %131, %14 : vector<8x1xi32>
      %c0_68 = arith.constant 0 : index
      %c0_69 = arith.constant 0 : index
      %133 = vector.load %arg11[%c0_68, %c0_69] : memref<8x128xf32, #tpu.memory_space<vmem>>, vector<8x128xf32>
      %134 = vector.shape_cast %132 : vector<8x1xi1> to vector<8x1xi1>
      %135 = vector.broadcast %134 : vector<8x1xi1> to vector<8x128xi1>
      %136 = arith.select %135, %127, %133 : vector<8x128xi1>, vector<8x128xf32>
      %c0_70 = arith.constant 0 : index
      %c0_71 = arith.constant 0 : index
      %137 = vector.load %arg11[%c0_70, %c0_71] : memref<8x128xf32, #tpu.memory_space<vmem>>, vector<8x128xf32>
      tpu.vector_store %arg11[%c0_70, %c0_71], %136 {strides = array<i32>} : memref<8x128xf32, #tpu.memory_space<vmem>>, vector<8x128xf32>,
      %c0_72 = arith.constant 0 : index
      %c0_73 = arith.constant 0 : index
      %138 = vector.load %arg10[%c0_72, %c0_73] : memref<8x128xf32, #tpu.memory_space<vmem>>, vector<8x128xf32>
      %139 = vector.shape_cast %132 : vector<8x1xi1> to vector<8x1xi1>
      %140 = vector.broadcast %139 : vector<8x1xi1> to vector<8x128xi1>
      %141 = arith.select %140, %129, %138 : vector<8x128xi1>, vector<8x128xf32>
      %c0_74 = arith.constant 0 : index
      %c0_75 = arith.constant 0 : index
      %142 = vector.load %arg10[%c0_74, %c0_75] : memref<8x128xf32, #tpu.memory_space<vmem>>, vector<8x128xf32>
      tpu.vector_store %arg10[%c0_74, %c0_75], %141 {strides = array<i32>} : memref<8x128xf32, #tpu.memory_space<vmem>>, vector<8x128xf32>,
      %cst_76 = arith.constant 0.000000e+00 : f32
      %143 = vector.broadcast %cst_76 : f32 to vector<8x128xf32>
      %144 = vector.shape_cast %132 : vector<8x1xi1> to vector<8x1xi1>
      %145 = vector.broadcast %144 : vector<8x1xi1> to vector<8x128xi1>
      %146 = arith.select %145, %129, %143 : vector<8x128xi1>, vector<8x128xf32>
      %c2_77 = arith.constant 2 : index
      %c0_78 = arith.constant 0 : index
      %c0_79 = arith.constant 0 : index
      %147 = vector.load %arg7[%c2_77, %c0_78, %c0_79] : memref<8x8x128xf32, #tpu.memory_space<vmem>>, vector<1x8x128xf32>
      %148 = vector.shape_cast %147 : vector<1x8x128xf32> to vector<8x128xf32>
      %149 = vector.shape_cast %146 : vector<8x128xf32> to vector<1x8x128xf32>
      tpu.vector_store %arg7[%c2_77, %c0_78, %c0_79], %149 {strides = array<i32>} : memref<8x8x128xf32, #tpu.memory_space<vmem>>, vector<1x8x128xf32>,
      %c3 = arith.constant 3 : index
      %c0_80 = arith.constant 0 : index
      %c0_81 = arith.constant 0 : index
      %150 = vector.load %arg3[%c3, %c0_80, %c0_81] : memref<8x8x512xf32, #tpu.memory_space<vmem>>, vector<1x8x512xf32>
      %151 = vector.shape_cast %150 : vector<1x8x512xf32> to vector<8x512xf32>
      %c0_82 = arith.constant 0 : index
      %c0_83 = arith.constant 0 : index
      %152 = vector.load %arg10[%c0_82, %c0_83] : memref<8x128xf32, #tpu.memory_space<vmem>>, vector<8x128xf32>
      %c0_84 = arith.constant 0 : index
      %c0_85 = arith.constant 0 : index
      %153 = vector.load %arg4[%c0_84, %c0_85] : memref<128x512xf32, #tpu.memory_space<vmem>>, vector<128x512xf32>
      %cst_86 = arith.constant dense<0.000000e+00> : vector<8x512xf32>
      %154 = tpu.matmul %152, %153, %cst_86 {dimension_numbers = #tpu.dot_dimension_numbers<[1], [0], [0], [1], [0, 0, 1, 1], [], []>} : vector<8x128xf32>, vector<128x512xf32>, vector<8x512xf32> -> vector<8x512xf32>
      %155 = arith.addf %151, %154 : vector<8x512xf32>
      %156 = arith.negf %155 : vector<8x512xf32>
      %157 = math.exp %156 : vector<8x512xf32>
      %cst_87 = arith.constant 1.000000e+00 : f32
      %158 = vector.broadcast %cst_87 : f32 to vector<8x512xf32>
      %159 = arith.addf %158, %157 : vector<8x512xf32>
      %160 = arith.divf %158, %159 : vector<8x512xf32>
      %161 = vector.extract_strided_slice %160 {offsets = [0, 0], sizes = [8, 128], strides = [1, 1]} : vector<8x512xf32> to vector<8x128xf32>
      %162 = vector.extract_strided_slice %160 {offsets = [0, 128], sizes = [8, 128], strides = [1, 1]} : vector<8x512xf32> to vector<8x128xf32>
      %163 = vector.extract_strided_slice %160 {offsets = [0, 256], sizes = [8, 128], strides = [1, 1]} : vector<8x512xf32> to vector<8x128xf32>
      %cst_88 = arith.constant 2.000000e+00 : f32
      %164 = vector.broadcast %cst_88 : f32 to vector<8x128xf32>
      %165 = arith.mulf %164, %163 : vector<8x128xf32>
      %cst_89 = arith.constant 1.000000e+00 : f32
      %166 = vector.broadcast %cst_89 : f32 to vector<8x128xf32>
      %167 = arith.subf %165, %166 : vector<8x128xf32>
      %168 = vector.extract_strided_slice %160 {offsets = [0, 384], sizes = [8, 128], strides = [1, 1]} : vector<8x512xf32> to vector<8x128xf32>
      %c0_90 = arith.constant 0 : index
      %c0_91 = arith.constant 0 : index
      %169 = vector.load %arg11[%c0_90, %c0_91] : memref<8x128xf32, #tpu.memory_space<vmem>>, vector<8x128xf32>
      %170 = arith.mulf %162, %169 : vector<8x128xf32>
      %171 = arith.mulf %161, %167 : vector<8x128xf32>
      %172 = arith.addf %170, %171 : vector<8x128xf32>
      %173 = math.tanh %172 : vector<8x128xf32>
      %174 = arith.mulf %168, %173 : vector<8x128xf32>
      %c3_i32 = arith.constant 3 : i32
      %175 = arith.addi %0, %c3_i32 : i32
      %176 = vector.broadcast %175 : i32 to vector<8x1xi32>
      %177 = arith.cmpi slt, %176, %14 : vector<8x1xi32>
      %c0_92 = arith.constant 0 : index
      %c0_93 = arith.constant 0 : index
      %178 = vector.load %arg11[%c0_92, %c0_93] : memref<8x128xf32, #tpu.memory_space<vmem>>, vector<8x128xf32>
      %179 = vector.shape_cast %177 : vector<8x1xi1> to vector<8x1xi1>
      %180 = vector.broadcast %179 : vector<8x1xi1> to vector<8x128xi1>
      %181 = arith.select %180, %172, %178 : vector<8x128xi1>, vector<8x128xf32>
      %c0_94 = arith.constant 0 : index
      %c0_95 = arith.constant 0 : index
      %182 = vector.load %arg11[%c0_94, %c0_95] : memref<8x128xf32, #tpu.memory_space<vmem>>, vector<8x128xf32>
      tpu.vector_store %arg11[%c0_94, %c0_95], %181 {strides = array<i32>} : memref<8x128xf32, #tpu.memory_space<vmem>>, vector<8x128xf32>,
      %c0_96 = arith.constant 0 : index
      %c0_97 = arith.constant 0 : index
      %183 = vector.load %arg10[%c0_96, %c0_97] : memref<8x128xf32, #tpu.memory_space<vmem>>, vector<8x128xf32>
      %184 = vector.shape_cast %177 : vector<8x1xi1> to vector<8x1xi1>
      %185 = vector.broadcast %184 : vector<8x1xi1> to vector<8x128xi1>
      %186 = arith.select %185, %174, %183 : vector<8x128xi1>, vector<8x128xf32>
      %c0_98 = arith.constant 0 : index
      %c0_99 = arith.constant 0 : index
      %187 = vector.load %arg10[%c0_98, %c0_99] : memref<8x128xf32, #tpu.memory_space<vmem>>, vector<8x128xf32>
      tpu.vector_store %arg10[%c0_98, %c0_99], %186 {strides = array<i32>} : memref<8x128xf32, #tpu.memory_space<vmem>>, vector<8x128xf32>,
      %cst_100 = arith.constant 0.000000e+00 : f32
      %188 = vector.broadcast %cst_100 : f32 to vector<8x128xf32>
      %189 = vector.shape_cast %177 : vector<8x1xi1> to vector<8x1xi1>
      %190 = vector.broadcast %189 : vector<8x1xi1> to vector<8x128xi1>
      %191 = arith.select %190, %174, %188 : vector<8x128xi1>, vector<8x128xf32>
      %c3_101 = arith.constant 3 : index
      %c0_102 = arith.constant 0 : index
      %c0_103 = arith.constant 0 : index
      %192 = vector.load %arg7[%c3_101, %c0_102, %c0_103] : memref<8x8x128xf32, #tpu.memory_space<vmem>>, vector<1x8x128xf32>
      %193 = vector.shape_cast %192 : vector<1x8x128xf32> to vector<8x128xf32>
      %194 = vector.shape_cast %191 : vector<8x128xf32> to vector<1x8x128xf32>
      tpu.vector_store %arg7[%c3_101, %c0_102, %c0_103], %194 {strides = array<i32>} : memref<8x8x128xf32, #tpu.memory_space<vmem>>, vector<1x8x128xf32>,
      %c4 = arith.constant 4 : index
      %c0_104 = arith.constant 0 : index
      %c0_105 = arith.constant 0 : index
      %195 = vector.load %arg3[%c4, %c0_104, %c0_105] : memref<8x8x512xf32, #tpu.memory_space<vmem>>, vector<1x8x512xf32>
      %196 = vector.shape_cast %195 : vector<1x8x512xf32> to vector<8x512xf32>
      %c0_106 = arith.constant 0 : index
      %c0_107 = arith.constant 0 : index
      %197 = vector.load %arg10[%c0_106, %c0_107] : memref<8x128xf32, #tpu.memory_space<vmem>>, vector<8x128xf32>
      %c0_108 = arith.constant 0 : index
      %c0_109 = arith.constant 0 : index
      %198 = vector.load %arg4[%c0_108, %c0_109] : memref<128x512xf32, #tpu.memory_space<vmem>>, vector<128x512xf32>
      %cst_110 = arith.constant dense<0.000000e+00> : vector<8x512xf32>
      %199 = tpu.matmul %197, %198, %cst_110 {dimension_numbers = #tpu.dot_dimension_numbers<[1], [0], [0], [1], [0, 0, 1, 1], [], []>} : vector<8x128xf32>, vector<128x512xf32>, vector<8x512xf32> -> vector<8x512xf32>
      %200 = arith.addf %196, %199 : vector<8x512xf32>
      %201 = arith.negf %200 : vector<8x512xf32>
      %202 = math.exp %201 : vector<8x512xf32>
      %cst_111 = arith.constant 1.000000e+00 : f32
      %203 = vector.broadcast %cst_111 : f32 to vector<8x512xf32>
      %204 = arith.addf %203, %202 : vector<8x512xf32>
      %205 = arith.divf %203, %204 : vector<8x512xf32>
      %206 = vector.extract_strided_slice %205 {offsets = [0, 0], sizes = [8, 128], strides = [1, 1]} : vector<8x512xf32> to vector<8x128xf32>
      %207 = vector.extract_strided_slice %205 {offsets = [0, 128], sizes = [8, 128], strides = [1, 1]} : vector<8x512xf32> to vector<8x128xf32>
      %208 = vector.extract_strided_slice %205 {offsets = [0, 256], sizes = [8, 128], strides = [1, 1]} : vector<8x512xf32> to vector<8x128xf32>
      %cst_112 = arith.constant 2.000000e+00 : f32
      %209 = vector.broadcast %cst_112 : f32 to vector<8x128xf32>
      %210 = arith.mulf %209, %208 : vector<8x128xf32>
      %cst_113 = arith.constant 1.000000e+00 : f32
      %211 = vector.broadcast %cst_113 : f32 to vector<8x128xf32>
      %212 = arith.subf %210, %211 : vector<8x128xf32>
      %213 = vector.extract_strided_slice %205 {offsets = [0, 384], sizes = [8, 128], strides = [1, 1]} : vector<8x512xf32> to vector<8x128xf32>
      %c0_114 = arith.constant 0 : index
      %c0_115 = arith.constant 0 : index
      %214 = vector.load %arg11[%c0_114, %c0_115] : memref<8x128xf32, #tpu.memory_space<vmem>>, vector<8x128xf32>
      %215 = arith.mulf %207, %214 : vector<8x128xf32>
      %216 = arith.mulf %206, %212 : vector<8x128xf32>
      %217 = arith.addf %215, %216 : vector<8x128xf32>
      %218 = math.tanh %217 : vector<8x128xf32>
      %219 = arith.mulf %213, %218 : vector<8x128xf32>
      %c4_i32 = arith.constant 4 : i32
      %220 = arith.addi %0, %c4_i32 : i32
      %221 = vector.broadcast %220 : i32 to vector<8x1xi32>
      %222 = arith.cmpi slt, %221, %14 : vector<8x1xi32>
      %c0_116 = arith.constant 0 : index
      %c0_117 = arith.constant 0 : index
      %223 = vector.load %arg11[%c0_116, %c0_117] : memref<8x128xf32, #tpu.memory_space<vmem>>, vector<8x128xf32>
      %224 = vector.shape_cast %222 : vector<8x1xi1> to vector<8x1xi1>
      %225 = vector.broadcast %224 : vector<8x1xi1> to vector<8x128xi1>
      %226 = arith.select %225, %217, %223 : vector<8x128xi1>, vector<8x128xf32>
      %c0_118 = arith.constant 0 : index
      %c0_119 = arith.constant 0 : index
      %227 = vector.load %arg11[%c0_118, %c0_119] : memref<8x128xf32, #tpu.memory_space<vmem>>, vector<8x128xf32>
      tpu.vector_store %arg11[%c0_118, %c0_119], %226 {strides = array<i32>} : memref<8x128xf32, #tpu.memory_space<vmem>>, vector<8x128xf32>,
      %c0_120 = arith.constant 0 : index
      %c0_121 = arith.constant 0 : index
      %228 = vector.load %arg10[%c0_120, %c0_121] : memref<8x128xf32, #tpu.memory_space<vmem>>, vector<8x128xf32>
      %229 = vector.shape_cast %222 : vector<8x1xi1> to vector<8x1xi1>
      %230 = vector.broadcast %229 : vector<8x1xi1> to vector<8x128xi1>
      %231 = arith.select %230, %219, %228 : vector<8x128xi1>, vector<8x128xf32>
      %c0_122 = arith.constant 0 : index
      %c0_123 = arith.constant 0 : index
      %232 = vector.load %arg10[%c0_122, %c0_123] : memref<8x128xf32, #tpu.memory_space<vmem>>, vector<8x128xf32>
      tpu.vector_store %arg10[%c0_122, %c0_123], %231 {strides = array<i32>} : memref<8x128xf32, #tpu.memory_space<vmem>>, vector<8x128xf32>,
      %cst_124 = arith.constant 0.000000e+00 : f32
      %233 = vector.broadcast %cst_124 : f32 to vector<8x128xf32>
      %234 = vector.shape_cast %222 : vector<8x1xi1> to vector<8x1xi1>
      %235 = vector.broadcast %234 : vector<8x1xi1> to vector<8x128xi1>
      %236 = arith.select %235, %219, %233 : vector<8x128xi1>, vector<8x128xf32>
      %c4_125 = arith.constant 4 : index
      %c0_126 = arith.constant 0 : index
      %c0_127 = arith.constant 0 : index
      %237 = vector.load %arg7[%c4_125, %c0_126, %c0_127] : memref<8x8x128xf32, #tpu.memory_space<vmem>>, vector<1x8x128xf32>
      %238 = vector.shape_cast %237 : vector<1x8x128xf32> to vector<8x128xf32>
      %239 = vector.shape_cast %236 : vector<8x128xf32> to vector<1x8x128xf32>
      tpu.vector_store %arg7[%c4_125, %c0_126, %c0_127], %239 {strides = array<i32>} : memref<8x8x128xf32, #tpu.memory_space<vmem>>, vector<1x8x128xf32>,
      %c5 = arith.constant 5 : index
      %c0_128 = arith.constant 0 : index
      %c0_129 = arith.constant 0 : index
      %240 = vector.load %arg3[%c5, %c0_128, %c0_129] : memref<8x8x512xf32, #tpu.memory_space<vmem>>, vector<1x8x512xf32>
      %241 = vector.shape_cast %240 : vector<1x8x512xf32> to vector<8x512xf32>
      %c0_130 = arith.constant 0 : index
      %c0_131 = arith.constant 0 : index
      %242 = vector.load %arg10[%c0_130, %c0_131] : memref<8x128xf32, #tpu.memory_space<vmem>>, vector<8x128xf32>
      %c0_132 = arith.constant 0 : index
      %c0_133 = arith.constant 0 : index
      %243 = vector.load %arg4[%c0_132, %c0_133] : memref<128x512xf32, #tpu.memory_space<vmem>>, vector<128x512xf32>
      %cst_134 = arith.constant dense<0.000000e+00> : vector<8x512xf32>
      %244 = tpu.matmul %242, %243, %cst_134 {dimension_numbers = #tpu.dot_dimension_numbers<[1], [0], [0], [1], [0, 0, 1, 1], [], []>} : vector<8x128xf32>, vector<128x512xf32>, vector<8x512xf32> -> vector<8x512xf32>
      %245 = arith.addf %241, %244 : vector<8x512xf32>
      %246 = arith.negf %245 : vector<8x512xf32>
      %247 = math.exp %246 : vector<8x512xf32>
      %cst_135 = arith.constant 1.000000e+00 : f32
      %248 = vector.broadcast %cst_135 : f32 to vector<8x512xf32>
      %249 = arith.addf %248, %247 : vector<8x512xf32>
      %250 = arith.divf %248, %249 : vector<8x512xf32>
      %251 = vector.extract_strided_slice %250 {offsets = [0, 0], sizes = [8, 128], strides = [1, 1]} : vector<8x512xf32> to vector<8x128xf32>
      %252 = vector.extract_strided_slice %250 {offsets = [0, 128], sizes = [8, 128], strides = [1, 1]} : vector<8x512xf32> to vector<8x128xf32>
      %253 = vector.extract_strided_slice %250 {offsets = [0, 256], sizes = [8, 128], strides = [1, 1]} : vector<8x512xf32> to vector<8x128xf32>
      %cst_136 = arith.constant 2.000000e+00 : f32
      %254 = vector.broadcast %cst_136 : f32 to vector<8x128xf32>
      %255 = arith.mulf %254, %253 : vector<8x128xf32>
      %cst_137 = arith.constant 1.000000e+00 : f32
      %256 = vector.broadcast %cst_137 : f32 to vector<8x128xf32>
      %257 = arith.subf %255, %256 : vector<8x128xf32>
      %258 = vector.extract_strided_slice %250 {offsets = [0, 384], sizes = [8, 128], strides = [1, 1]} : vector<8x512xf32> to vector<8x128xf32>
      %c0_138 = arith.constant 0 : index
      %c0_139 = arith.constant 0 : index
      %259 = vector.load %arg11[%c0_138, %c0_139] : memref<8x128xf32, #tpu.memory_space<vmem>>, vector<8x128xf32>
      %260 = arith.mulf %252, %259 : vector<8x128xf32>
      %261 = arith.mulf %251, %257 : vector<8x128xf32>
      %262 = arith.addf %260, %261 : vector<8x128xf32>
      %263 = math.tanh %262 : vector<8x128xf32>
      %264 = arith.mulf %258, %263 : vector<8x128xf32>
      %c5_i32 = arith.constant 5 : i32
      %265 = arith.addi %0, %c5_i32 : i32
      %266 = vector.broadcast %265 : i32 to vector<8x1xi32>
      %267 = arith.cmpi slt, %266, %14 : vector<8x1xi32>
      %c0_140 = arith.constant 0 : index
      %c0_141 = arith.constant 0 : index
      %268 = vector.load %arg11[%c0_140, %c0_141] : memref<8x128xf32, #tpu.memory_space<vmem>>, vector<8x128xf32>
      %269 = vector.shape_cast %267 : vector<8x1xi1> to vector<8x1xi1>
      %270 = vector.broadcast %269 : vector<8x1xi1> to vector<8x128xi1>
      %271 = arith.select %270, %262, %268 : vector<8x128xi1>, vector<8x128xf32>
      %c0_142 = arith.constant 0 : index
      %c0_143 = arith.constant 0 : index
      %272 = vector.load %arg11[%c0_142, %c0_143] : memref<8x128xf32, #tpu.memory_space<vmem>>, vector<8x128xf32>
      tpu.vector_store %arg11[%c0_142, %c0_143], %271 {strides = array<i32>} : memref<8x128xf32, #tpu.memory_space<vmem>>, vector<8x128xf32>,
      %c0_144 = arith.constant 0 : index
      %c0_145 = arith.constant 0 : index
      %273 = vector.load %arg10[%c0_144, %c0_145] : memref<8x128xf32, #tpu.memory_space<vmem>>, vector<8x128xf32>
      %274 = vector.shape_cast %267 : vector<8x1xi1> to vector<8x1xi1>
      %275 = vector.broadcast %274 : vector<8x1xi1> to vector<8x128xi1>
      %276 = arith.select %275, %264, %273 : vector<8x128xi1>, vector<8x128xf32>
      %c0_146 = arith.constant 0 : index
      %c0_147 = arith.constant 0 : index
      %277 = vector.load %arg10[%c0_146, %c0_147] : memref<8x128xf32, #tpu.memory_space<vmem>>, vector<8x128xf32>
      tpu.vector_store %arg10[%c0_146, %c0_147], %276 {strides = array<i32>} : memref<8x128xf32, #tpu.memory_space<vmem>>, vector<8x128xf32>,
      %cst_148 = arith.constant 0.000000e+00 : f32
      %278 = vector.broadcast %cst_148 : f32 to vector<8x128xf32>
      %279 = vector.shape_cast %267 : vector<8x1xi1> to vector<8x1xi1>
      %280 = vector.broadcast %279 : vector<8x1xi1> to vector<8x128xi1>
      %281 = arith.select %280, %264, %278 : vector<8x128xi1>, vector<8x128xf32>
      %c5_149 = arith.constant 5 : index
      %c0_150 = arith.constant 0 : index
      %c0_151 = arith.constant 0 : index
      %282 = vector.load %arg7[%c5_149, %c0_150, %c0_151] : memref<8x8x128xf32, #tpu.memory_space<vmem>>, vector<1x8x128xf32>
      %283 = vector.shape_cast %282 : vector<1x8x128xf32> to vector<8x128xf32>
      %284 = vector.shape_cast %281 : vector<8x128xf32> to vector<1x8x128xf32>
      tpu.vector_store %arg7[%c5_149, %c0_150, %c0_151], %284 {strides = array<i32>} : memref<8x8x128xf32, #tpu.memory_space<vmem>>, vector<1x8x128xf32>,
      %c6 = arith.constant 6 : index
      %c0_152 = arith.constant 0 : index
      %c0_153 = arith.constant 0 : index
      %285 = vector.load %arg3[%c6, %c0_152, %c0_153] : memref<8x8x512xf32, #tpu.memory_space<vmem>>, vector<1x8x512xf32>
      %286 = vector.shape_cast %285 : vector<1x8x512xf32> to vector<8x512xf32>
      %c0_154 = arith.constant 0 : index
      %c0_155 = arith.constant 0 : index
      %287 = vector.load %arg10[%c0_154, %c0_155] : memref<8x128xf32, #tpu.memory_space<vmem>>, vector<8x128xf32>
      %c0_156 = arith.constant 0 : index
      %c0_157 = arith.constant 0 : index
      %288 = vector.load %arg4[%c0_156, %c0_157] : memref<128x512xf32, #tpu.memory_space<vmem>>, vector<128x512xf32>
      %cst_158 = arith.constant dense<0.000000e+00> : vector<8x512xf32>
      %289 = tpu.matmul %287, %288, %cst_158 {dimension_numbers = #tpu.dot_dimension_numbers<[1], [0], [0], [1], [0, 0, 1, 1], [], []>} : vector<8x128xf32>, vector<128x512xf32>, vector<8x512xf32> -> vector<8x512xf32>
      %290 = arith.addf %286, %289 : vector<8x512xf32>
      %291 = arith.negf %290 : vector<8x512xf32>
      %292 = math.exp %291 : vector<8x512xf32>
      %cst_159 = arith.constant 1.000000e+00 : f32
      %293 = vector.broadcast %cst_159 : f32 to vector<8x512xf32>
      %294 = arith.addf %293, %292 : vector<8x512xf32>
      %295 = arith.divf %293, %294 : vector<8x512xf32>
      %296 = vector.extract_strided_slice %295 {offsets = [0, 0], sizes = [8, 128], strides = [1, 1]} : vector<8x512xf32> to vector<8x128xf32>
      %297 = vector.extract_strided_slice %295 {offsets = [0, 128], sizes = [8, 128], strides = [1, 1]} : vector<8x512xf32> to vector<8x128xf32>
      %298 = vector.extract_strided_slice %295 {offsets = [0, 256], sizes = [8, 128], strides = [1, 1]} : vector<8x512xf32> to vector<8x128xf32>
      %cst_160 = arith.constant 2.000000e+00 : f32
      %299 = vector.broadcast %cst_160 : f32 to vector<8x128xf32>
      %300 = arith.mulf %299, %298 : vector<8x128xf32>
      %cst_161 = arith.constant 1.000000e+00 : f32
      %301 = vector.broadcast %cst_161 : f32 to vector<8x128xf32>
      %302 = arith.subf %300, %301 : vector<8x128xf32>
      %303 = vector.extract_strided_slice %295 {offsets = [0, 384], sizes = [8, 128], strides = [1, 1]} : vector<8x512xf32> to vector<8x128xf32>
      %c0_162 = arith.constant 0 : index
      %c0_163 = arith.constant 0 : index
      %304 = vector.load %arg11[%c0_162, %c0_163] : memref<8x128xf32, #tpu.memory_space<vmem>>, vector<8x128xf32>
      %305 = arith.mulf %297, %304 : vector<8x128xf32>
      %306 = arith.mulf %296, %302 : vector<8x128xf32>
      %307 = arith.addf %305, %306 : vector<8x128xf32>
      %308 = math.tanh %307 : vector<8x128xf32>
      %309 = arith.mulf %303, %308 : vector<8x128xf32>
      %c6_i32 = arith.constant 6 : i32
      %310 = arith.addi %0, %c6_i32 : i32
      %311 = vector.broadcast %310 : i32 to vector<8x1xi32>
      %312 = arith.cmpi slt, %311, %14 : vector<8x1xi32>
      %c0_164 = arith.constant 0 : index
      %c0_165 = arith.constant 0 : index
      %313 = vector.load %arg11[%c0_164, %c0_165] : memref<8x128xf32, #tpu.memory_space<vmem>>, vector<8x128xf32>
      %314 = vector.shape_cast %312 : vector<8x1xi1> to vector<8x1xi1>
      %315 = vector.broadcast %314 : vector<8x1xi1> to vector<8x128xi1>
      %316 = arith.select %315, %307, %313 : vector<8x128xi1>, vector<8x128xf32>
      %c0_166 = arith.constant 0 : index
      %c0_167 = arith.constant 0 : index
      %317 = vector.load %arg11[%c0_166, %c0_167] : memref<8x128xf32, #tpu.memory_space<vmem>>, vector<8x128xf32>
      tpu.vector_store %arg11[%c0_166, %c0_167], %316 {strides = array<i32>} : memref<8x128xf32, #tpu.memory_space<vmem>>, vector<8x128xf32>,
      %c0_168 = arith.constant 0 : index
      %c0_169 = arith.constant 0 : index
      %318 = vector.load %arg10[%c0_168, %c0_169] : memref<8x128xf32, #tpu.memory_space<vmem>>, vector<8x128xf32>
      %319 = vector.shape_cast %312 : vector<8x1xi1> to vector<8x1xi1>
      %320 = vector.broadcast %319 : vector<8x1xi1> to vector<8x128xi1>
      %321 = arith.select %320, %309, %318 : vector<8x128xi1>, vector<8x128xf32>
      %c0_170 = arith.constant 0 : index
      %c0_171 = arith.constant 0 : index
      %322 = vector.load %arg10[%c0_170, %c0_171] : memref<8x128xf32, #tpu.memory_space<vmem>>, vector<8x128xf32>
      tpu.vector_store %arg10[%c0_170, %c0_171], %321 {strides = array<i32>} : memref<8x128xf32, #tpu.memory_space<vmem>>, vector<8x128xf32>,
      %cst_172 = arith.constant 0.000000e+00 : f32
      %323 = vector.broadcast %cst_172 : f32 to vector<8x128xf32>
      %324 = vector.shape_cast %312 : vector<8x1xi1> to vector<8x1xi1>
      %325 = vector.broadcast %324 : vector<8x1xi1> to vector<8x128xi1>
      %326 = arith.select %325, %309, %323 : vector<8x128xi1>, vector<8x128xf32>
      %c6_173 = arith.constant 6 : index
      %c0_174 = arith.constant 0 : index
      %c0_175 = arith.constant 0 : index
      %327 = vector.load %arg7[%c6_173, %c0_174, %c0_175] : memref<8x8x128xf32, #tpu.memory_space<vmem>>, vector<1x8x128xf32>
      %328 = vector.shape_cast %327 : vector<1x8x128xf32> to vector<8x128xf32>
      %329 = vector.shape_cast %326 : vector<8x128xf32> to vector<1x8x128xf32>
      tpu.vector_store %arg7[%c6_173, %c0_174, %c0_175], %329 {strides = array<i32>} : memref<8x8x128xf32, #tpu.memory_space<vmem>>, vector<1x8x128xf32>,
      %c7 = arith.constant 7 : index
      %c0_176 = arith.constant 0 : index
      %c0_177 = arith.constant 0 : index
      %330 = vector.load %arg3[%c7, %c0_176, %c0_177] : memref<8x8x512xf32, #tpu.memory_space<vmem>>, vector<1x8x512xf32>
      %331 = vector.shape_cast %330 : vector<1x8x512xf32> to vector<8x512xf32>
      %c0_178 = arith.constant 0 : index
      %c0_179 = arith.constant 0 : index
      %332 = vector.load %arg10[%c0_178, %c0_179] : memref<8x128xf32, #tpu.memory_space<vmem>>, vector<8x128xf32>
      %c0_180 = arith.constant 0 : index
      %c0_181 = arith.constant 0 : index
      %333 = vector.load %arg4[%c0_180, %c0_181] : memref<128x512xf32, #tpu.memory_space<vmem>>, vector<128x512xf32>
      %cst_182 = arith.constant dense<0.000000e+00> : vector<8x512xf32>
      %334 = tpu.matmul %332, %333, %cst_182 {dimension_numbers = #tpu.dot_dimension_numbers<[1], [0], [0], [1], [0, 0, 1, 1], [], []>} : vector<8x128xf32>, vector<128x512xf32>, vector<8x512xf32> -> vector<8x512xf32>
      %335 = arith.addf %331, %334 : vector<8x512xf32>
      %336 = arith.negf %335 : vector<8x512xf32>
      %337 = math.exp %336 : vector<8x512xf32>
      %cst_183 = arith.constant 1.000000e+00 : f32
      %338 = vector.broadcast %cst_183 : f32 to vector<8x512xf32>
      %339 = arith.addf %338, %337 : vector<8x512xf32>
      %340 = arith.divf %338, %339 : vector<8x512xf32>
      %341 = vector.extract_strided_slice %340 {offsets = [0, 0], sizes = [8, 128], strides = [1, 1]} : vector<8x512xf32> to vector<8x128xf32>
      %342 = vector.extract_strided_slice %340 {offsets = [0, 128], sizes = [8, 128], strides = [1, 1]} : vector<8x512xf32> to vector<8x128xf32>
      %343 = vector.extract_strided_slice %340 {offsets = [0, 256], sizes = [8, 128], strides = [1, 1]} : vector<8x512xf32> to vector<8x128xf32>
      %cst_184 = arith.constant 2.000000e+00 : f32
      %344 = vector.broadcast %cst_184 : f32 to vector<8x128xf32>
      %345 = arith.mulf %344, %343 : vector<8x128xf32>
      %cst_185 = arith.constant 1.000000e+00 : f32
      %346 = vector.broadcast %cst_185 : f32 to vector<8x128xf32>
      %347 = arith.subf %345, %346 : vector<8x128xf32>
      %348 = vector.extract_strided_slice %340 {offsets = [0, 384], sizes = [8, 128], strides = [1, 1]} : vector<8x512xf32> to vector<8x128xf32>
      %c0_186 = arith.constant 0 : index
      %c0_187 = arith.constant 0 : index
      %349 = vector.load %arg11[%c0_186, %c0_187] : memref<8x128xf32, #tpu.memory_space<vmem>>, vector<8x128xf32>
      %350 = arith.mulf %342, %349 : vector<8x128xf32>
      %351 = arith.mulf %341, %347 : vector<8x128xf32>
      %352 = arith.addf %350, %351 : vector<8x128xf32>
      %353 = math.tanh %352 : vector<8x128xf32>
      %354 = arith.mulf %348, %353 : vector<8x128xf32>
      %c7_i32 = arith.constant 7 : i32
      %355 = arith.addi %0, %c7_i32 : i32
      %356 = vector.broadcast %355 : i32 to vector<8x1xi32>
      %357 = arith.cmpi slt, %356, %14 : vector<8x1xi32>
      %c0_188 = arith.constant 0 : index
      %c0_189 = arith.constant 0 : index
      %358 = vector.load %arg11[%c0_188, %c0_189] : memref<8x128xf32, #tpu.memory_space<vmem>>, vector<8x128xf32>
      %359 = vector.shape_cast %357 : vector<8x1xi1> to vector<8x1xi1>
      %360 = vector.broadcast %359 : vector<8x1xi1> to vector<8x128xi1>
      %361 = arith.select %360, %352, %358 : vector<8x128xi1>, vector<8x128xf32>
      %c0_190 = arith.constant 0 : index
      %c0_191 = arith.constant 0 : index
      %362 = vector.load %arg11[%c0_190, %c0_191] : memref<8x128xf32, #tpu.memory_space<vmem>>, vector<8x128xf32>
      tpu.vector_store %arg11[%c0_190, %c0_191], %361 {strides = array<i32>} : memref<8x128xf32, #tpu.memory_space<vmem>>, vector<8x128xf32>,
      %c0_192 = arith.constant 0 : index
      %c0_193 = arith.constant 0 : index
      %363 = vector.load %arg10[%c0_192, %c0_193] : memref<8x128xf32, #tpu.memory_space<vmem>>, vector<8x128xf32>
      %364 = vector.shape_cast %357 : vector<8x1xi1> to vector<8x1xi1>
      %365 = vector.broadcast %364 : vector<8x1xi1> to vector<8x128xi1>
      %366 = arith.select %365, %354, %363 : vector<8x128xi1>, vector<8x128xf32>
      %c0_194 = arith.constant 0 : index
      %c0_195 = arith.constant 0 : index
      %367 = vector.load %arg10[%c0_194, %c0_195] : memref<8x128xf32, #tpu.memory_space<vmem>>, vector<8x128xf32>
      tpu.vector_store %arg10[%c0_194, %c0_195], %366 {strides = array<i32>} : memref<8x128xf32, #tpu.memory_space<vmem>>, vector<8x128xf32>,
      %cst_196 = arith.constant 0.000000e+00 : f32
      %368 = vector.broadcast %cst_196 : f32 to vector<8x128xf32>
      %369 = vector.shape_cast %357 : vector<8x1xi1> to vector<8x1xi1>
      %370 = vector.broadcast %369 : vector<8x1xi1> to vector<8x128xi1>
      %371 = arith.select %370, %354, %368 : vector<8x128xi1>, vector<8x128xf32>
      %c7_197 = arith.constant 7 : index
      %c0_198 = arith.constant 0 : index
      %c0_199 = arith.constant 0 : index
      %372 = vector.load %arg7[%c7_197, %c0_198, %c0_199] : memref<8x8x128xf32, #tpu.memory_space<vmem>>, vector<1x8x128xf32>
      %373 = vector.shape_cast %372 : vector<1x8x128xf32> to vector<8x128xf32>
      %374 = vector.shape_cast %371 : vector<8x128xf32> to vector<1x8x128xf32>
      tpu.vector_store %arg7[%c7_197, %c0_198, %c0_199], %374 {strides = array<i32>} : memref<8x8x128xf32, #tpu.memory_space<vmem>>, vector<1x8x128xf32>,
    } else {
    }
    %c0_i32_3 = arith.constant 0 : i32
    %11 = arith.cmpi eq, %arg0, %c0_i32_3 : i32
    %12 = arith.extui %11 : i1 to i32
    %c0_i32_4 = arith.constant 0 : i32
    %13 = arith.cmpi ne, %12, %c0_i32_4 : i32
    scf.if %13 {
      %c0_5 = arith.constant 0 : index
      %c0_6 = arith.constant 0 : index
      %14 = vector.load %arg10[%c0_5, %c0_6] : memref<8x128xf32, #tpu.memory_space<vmem>>, vector<8x128xf32>
      %c0_7 = arith.constant 0 : index
      %c0_8 = arith.constant 0 : index
      %15 = vector.load %arg8[%c0_7, %c0_8] : memref<8x128xf32, #tpu.memory_space<vmem>>, vector<8x128xf32>
      tpu.vector_store %arg8[%c0_7, %c0_8], %14 {strides = array<i32>} : memref<8x128xf32, #tpu.memory_space<vmem>>, vector<8x128xf32>,
      %c0_9 = arith.constant 0 : index
      %c0_10 = arith.constant 0 : index
      %16 = vector.load %arg11[%c0_9, %c0_10] : memref<8x128xf32, #tpu.memory_space<vmem>>, vector<8x128xf32>
      %c0_11 = arith.constant 0 : index
      %c0_12 = arith.constant 0 : index
      %17 = vector.load %arg9[%c0_11, %c0_12] : memref<8x128xf32, #tpu.memory_space<vmem>>, vector<8x128xf32>
      tpu.vector_store %arg9[%c0_11, %c0_12], %16 {strides = array<i32>} : memref<8x128xf32, #tpu.memory_space<vmem>>, vector<8x128xf32>,
    } else {
    }
    return
  }
  func.func @transform_0(%arg0: i32) -> i32 {
    %c0_i32 = arith.constant 0 : i32
    %c0_i32_0 = arith.constant 0 : i32
    return %c0_i32 : i32
  }
  func.func @transform_1(%arg0: i32) -> (i32, i32) {
    %c0_i32 = arith.constant 0 : i32
    %c0_i32_0 = arith.constant 0 : i32
    %c0_i32_1 = arith.constant 0 : i32
    return %c0_i32, %c0_i32_0 : i32, i32
  }
  func.func @transform_2(%arg0: i32) -> (i32, i32, i32) {
    %c0_i32 = arith.constant 0 : i32
    %c0_i32_0 = arith.constant 0 : i32
    %c0_i32_1 = arith.constant 0 : i32
    return %arg0, %c0_i32, %c0_i32_0 : i32, i32, i32
  }
  func.func @transform_3(%arg0: i32) -> (i32, i32) {
    %c0_i32 = arith.constant 0 : i32
    %c0_i32_0 = arith.constant 0 : i32
    %c0_i32_1 = arith.constant 0 : i32
    return %c0_i32, %c0_i32_0 : i32, i32
  }
  func.func @transform_4(%arg0: i32) -> (i32, i32) {
    %c0_i32 = arith.constant 0 : i32
    %c0_i32_0 = arith.constant 0 : i32
    %c0_i32_1 = arith.constant 0 : i32
    return %c0_i32, %c0_i32_0 : i32, i32
  }
  func.func @transform_5(%arg0: i32) -> (i32, i32) {
    %c0_i32 = arith.constant 0 : i32
    %c0_i32_0 = arith.constant 0 : i32
    %c0_i32_1 = arith.constant 0 : i32
    return %c0_i32, %c0_i32_0 : i32, i32
  }
  func.func @transform_6(%arg0: i32) -> (i32, i32, i32) {
    %c0_i32 = arith.constant 0 : i32
    %c0_i32_0 = arith.constant 0 : i32
    %c0_i32_1 = arith.constant 0 : i32
    return %arg0, %c0_i32, %c0_i32_0 : i32, i32, i32
  }
  func.func @transform_7(%arg0: i32) -> (i32, i32) {
    %c0_i32 = arith.constant 0 : i32
    %c0_i32_0 = arith.constant 0 : i32
    %c0_i32_1 = arith.constant 0 : i32
    return %c0_i32, %c0_i32_0 : i32, i32
  }
  func.func @transform_8(%arg0: i32) -> (i32, i32) {
    %c0_i32 = arith.constant 0 : i32
    %c0_i32_0 = arith.constant 0 : i32
    %c0_i32_1 = arith.constant 0 : i32
    return %c0_i32, %c0_i32_0 : i32, i32
  }
}

module attributes {stable_mosaic.version = 11 : i64} {
  func.func @_matmul_bias_kernel(%arg0: i32, %arg1: i32, %arg2: i32, %arg3: memref<64x128xf32, #tpu.memory_space<vmem>>, %arg4: memref<128x128xf32, #tpu.memory_space<vmem>>, %arg5: memref<1x128xf32, #tpu.memory_space<vmem>>, %arg6: memref<64x128xf32, #tpu.memory_space<vmem>>, %arg7: memref<64x128xf32, #tpu.memory_space<vmem>>) attributes {dimension_semantics = [#tpu.dimension_semantics<parallel>, #tpu.dimension_semantics<parallel>, #tpu.dimension_semantics<arbitrary>], iteration_bounds = array<i64: 1, 1, 1>, scalar_prefetch = 0 : i64, scratch_operands = 1 : i64, tpu.core_type = #tpu.core_type<tc>, window_params = [{transform_indices = @transform_0, window_bounds = array<i64: 64, 128>}, {transform_indices = @transform_1, window_bounds = array<i64: 128, 128>}, {transform_indices = @transform_2, window_bounds = array<i64: 1, 128>}, {transform_indices = @transform_3, window_bounds = array<i64: 64, 128>}]} {
    %c0_i32 = arith.constant 0 : i32
    %0 = arith.cmpi eq, %arg2, %c0_i32 : i32
    %1 = arith.extui %0 : i1 to i32
    %c0_i32_0 = arith.constant 0 : i32
    %2 = arith.cmpi ne, %1, %c0_i32_0 : i32
    scf.if %2 {
      %cst_10 = arith.constant 0.000000e+00 : f32
      %12 = vector.broadcast %cst_10 : f32 to vector<64x128xf32>
      %c0_11 = arith.constant 0 : index
      %c0_12 = arith.constant 0 : index
      %13 = vector.load %arg7[%c0_11, %c0_12] : memref<64x128xf32, #tpu.memory_space<vmem>>, vector<64x128xf32>
      tpu.vector_store %arg7[%c0_11, %c0_12], %12 {strides = array<i32>} : memref<64x128xf32, #tpu.memory_space<vmem>>, vector<64x128xf32>,
    } else {
    }
    %c0 = arith.constant 0 : index
    %c0_1 = arith.constant 0 : index
    %3 = vector.load %arg7[%c0, %c0_1] : memref<64x128xf32, #tpu.memory_space<vmem>>, vector<64x128xf32>
    %c0_2 = arith.constant 0 : index
    %c0_3 = arith.constant 0 : index
    %4 = vector.load %arg3[%c0_2, %c0_3] : memref<64x128xf32, #tpu.memory_space<vmem>>, vector<64x128xf32>
    %c0_4 = arith.constant 0 : index
    %c0_5 = arith.constant 0 : index
    %5 = vector.load %arg4[%c0_4, %c0_5] : memref<128x128xf32, #tpu.memory_space<vmem>>, vector<128x128xf32>
    %cst = arith.constant dense<0.000000e+00> : vector<64x128xf32>
    %6 = tpu.matmul %4, %5, %cst {dimension_numbers = #tpu.dot_dimension_numbers<[1], [0], [0], [1], [0, 0, 1, 1], [], []>} : vector<64x128xf32>, vector<128x128xf32>, vector<64x128xf32> -> vector<64x128xf32>
    %7 = arith.addf %3, %6 : vector<64x128xf32>
    %c0_6 = arith.constant 0 : index
    %c0_7 = arith.constant 0 : index
    %8 = vector.load %arg7[%c0_6, %c0_7] : memref<64x128xf32, #tpu.memory_space<vmem>>, vector<64x128xf32>
    tpu.vector_store %arg7[%c0_6, %c0_7], %7 {strides = array<i32>} : memref<64x128xf32, #tpu.memory_space<vmem>>, vector<64x128xf32>,
    %c0_i32_8 = arith.constant 0 : i32
    %9 = arith.cmpi eq, %arg2, %c0_i32_8 : i32
    %10 = arith.extui %9 : i1 to i32
    %c0_i32_9 = arith.constant 0 : i32
    %11 = arith.cmpi ne, %10, %c0_i32_9 : i32
    scf.if %11 {
      %c0_10 = arith.constant 0 : index
      %c0_11 = arith.constant 0 : index
      %12 = vector.load %arg7[%c0_10, %c0_11] : memref<64x128xf32, #tpu.memory_space<vmem>>, vector<64x128xf32>
      %c0_12 = arith.constant 0 : index
      %c0_13 = arith.constant 0 : index
      %13 = vector.load %arg5[%c0_12, %c0_13] : memref<1x128xf32, #tpu.memory_space<vmem>>, vector<1x128xf32>
      %14 = vector.broadcast %13 : vector<1x128xf32> to vector<64x128xf32>
      %15 = arith.addf %12, %14 : vector<64x128xf32>
      %c0_14 = arith.constant 0 : index
      %c0_15 = arith.constant 0 : index
      %16 = vector.load %arg6[%c0_14, %c0_15] : memref<64x128xf32, #tpu.memory_space<vmem>>, vector<64x128xf32>
      tpu.vector_store %arg6[%c0_14, %c0_15], %15 {strides = array<i32>} : memref<64x128xf32, #tpu.memory_space<vmem>>, vector<64x128xf32>,
    } else {
    }
    return
  }
  func.func @transform_0(%arg0: i32, %arg1: i32, %arg2: i32) -> (i32, i32) {
    %c0_i32 = arith.constant 0 : i32
    return %arg0, %arg2 : i32, i32
  }
  func.func @transform_1(%arg0: i32, %arg1: i32, %arg2: i32) -> (i32, i32) {
    %c0_i32 = arith.constant 0 : i32
    return %arg2, %arg1 : i32, i32
  }
  func.func @transform_2(%arg0: i32, %arg1: i32, %arg2: i32) -> (i32, i32) {
    %c0_i32 = arith.constant 0 : i32
    %c0_i32_0 = arith.constant 0 : i32
    return %c0_i32, %arg1 : i32, i32
  }
  func.func @transform_3(%arg0: i32, %arg1: i32, %arg2: i32) -> (i32, i32) {
    %c0_i32 = arith.constant 0 : i32
    return %arg0, %arg1 : i32, i32
  }
}

</mosaic_0001>

<llo_original>
// kernel: lstm_lm_forward.5
$region0: #{lstm_lm_forward.5}
  #allocation0 [shape = 'u32[]', space=smem, size = 0x4, offset = 0x4, fixed_abs, tag = 'smem constant byte address 0x4 - core index']
  #allocation1 [shape = 'u32[144,128]{1,0:T(1,128)}', space=vmem, size = 0x12000, scoped, tag = 'internal scratch']
  #allocation2 [shape = 'f32[64,128]{1,0:T(8,128)}', space=vmem, size = 0x8000, scoped, tag = 'scratch operand']
  %s0 = inlined_call_operand.vmem [shape: f32[64,128], index: 0, kind: input, shape index: {}]
  %s1 = inlined_call_operand.vmem [shape: f32[128,128], index: 1, kind: input, shape index: {}]
  %s2 = inlined_call_operand.vmem [shape: f32[1,128], index: 2, kind: input, shape index: {}]
  %s3 = inlined_call_operand.vmem [shape: f32[64,128], index: 3, kind: output, shape index: {}]
  %s4 = sld [smem:[#allocation0]]
  $region30: #{lstm_lm_forward.5} parent=0
    _
  %s6 = ssub.s32 1, %s4
  %s7 = scalar_select 0, %s6, %s4
  // Predicated region
  $region2: #{lstm_lm_forward.5} parent=0 // pred_check
    _
  $region3: #{lstm_lm_forward.5} parent=0 // pred_check_branch
    %9 = sbr.rel (0) target = $region5
  $region4: #{lstm_lm_forward.5} parent=0 // pred_region
    _
  $region5: #{lstm_lm_forward.5} parent=0 // pred_fallthru
    _
  // Predicated region
  $region6: #{lstm_lm_forward.5} parent=0 // pred_check
    _
  $region7: #{lstm_lm_forward.5} parent=0 // pred_check_branch
    %11 = sbr.rel (0) target = $region9
  $region8: #{lstm_lm_forward.5} parent=0 // pred_region
    _
  $region9: #{lstm_lm_forward.5} parent=0 // pred_fallthru
    _
  // Predicated region
  $region10: #{lstm_lm_forward.5} parent=0 // pred_check
    _
  $region11: #{lstm_lm_forward.5} parent=0 // pred_check_branch
    %13 = sbr.rel (0) target = $region13
  $region12: #{lstm_lm_forward.5} parent=0 // pred_region
    _
  $region13: #{lstm_lm_forward.5} parent=0 // pred_fallthru
    _
  %p14 = scmp.eq.s32.totalorder 0, 0
  // Predicated region
  $region14: #{lstm_lm_forward.5} parent=0 // pred_check
    %p15 = pneg %p14
  $region15: #{lstm_lm_forward.5} parent=0 // pred_check_branch
    %17 = sbr.rel (%p15) target = $region17
  $region16: #{lstm_lm_forward.5} parent=0 // pred_region
    %18 = vst [vmem:[#allocation2] sm:$0xff] 0.0
    %19 = vst [vmem:[#allocation2 + $0x8] sm:$0xff] 0.0
    %20 = vst [vmem:[#allocation2 + $0x10] sm:$0xff] 0.0
    %21 = vst [vmem:[#allocation2 + $0x18] sm:$0xff] 0.0
    %22 = vst [vmem:[#allocation2 + $0x20] sm:$0xff] 0.0
    %23 = vst [vmem:[#allocation2 + $0x28] sm:$0xff] 0.0
    %24 = vst [vmem:[#allocation2 + $0x30] sm:$0xff] 0.0
    %25 = vst [vmem:[#allocation2 + $0x38] sm:$0xff] 0.0
  $region17: #{lstm_lm_forward.5} parent=0 // pred_fallthru
    _
  %v26 = vld [vmem:[#allocation2] sm:$0xff]
  %v27 = vld [vmem:[#allocation2 + $0x8] sm:$0xff]
  %v28 = vld [vmem:[#allocation2 + $0x10] sm:$0xff]
  %v29 = vld [vmem:[#allocation2 + $0x18] sm:$0xff]
  %v30 = vld [vmem:[#allocation2 + $0x20] sm:$0xff]
  %v31 = vld [vmem:[#allocation2 + $0x28] sm:$0xff]
  %v32 = vld [vmem:[#allocation2 + $0x30] sm:$0xff]
  %v33 = vld [vmem:[#allocation2 + $0x38] sm:$0xff]
  %v34 = vld [vmem:[%s0] sm:$0xff]
  %v35 = vld [vmem:[%s0 + $0x8] sm:$0xff]
  %v36 = vld [vmem:[%s0 + $0x10] sm:$0xff]
  %v37 = vld [vmem:[%s0 + $0x18] sm:$0xff]
  %v38 = vld [vmem:[%s0 + $0x20] sm:$0xff]
  %v39 = vld [vmem:[%s0 + $0x28] sm:$0xff]
  %v40 = vld [vmem:[%s0 + $0x30] sm:$0xff]
  %v41 = vld [vmem:[%s0 + $0x38] sm:$0xff]
  %v42 = vld [vmem:[%s1] sm:$0xff]
  %v43 = vld [vmem:[%s1 + $0x8] sm:$0xff]
  %v44 = vld [vmem:[%s1 + $0x10] sm:$0xff]
  %v45 = vld [vmem:[%s1 + $0x18] sm:$0xff]
  %v46 = vld [vmem:[%s1 + $0x20] sm:$0xff]
  %v47 = vld [vmem:[%s1 + $0x28] sm:$0xff]
  %v48 = vld [vmem:[%s1 + $0x30] sm:$0xff]
  %v49 = vld [vmem:[%s1 + $0x38] sm:$0xff]
  %v50 = vld [vmem:[%s1 + $0x40] sm:$0xff]
  %v51 = vld [vmem:[%s1 + $0x48] sm:$0xff]
  %v52 = vld [vmem:[%s1 + $0x50] sm:$0xff]
  %v53 = vld [vmem:[%s1 + $0x58] sm:$0xff]
  %v54 = vld [vmem:[%s1 + $0x60] sm:$0xff]
  %v55 = vld [vmem:[%s1 + $0x68] sm:$0xff]
  %v56 = vld [vmem:[%s1 + $0x70] sm:$0xff]
  %v57 = vld [vmem:[%s1 + $0x78] sm:$0xff]
  %58 = vmatprep.subr.mxu0 0.0
  %59 = vmatpush1.msra.mxu0 %v42
  %60 = vmatprep.subr.mxu0 0.0
  %61 = vmatpush1.msra.mxu0 %v43
  %62 = vmatprep.subr.mxu0 0.0
  %63 = vmatpush1.msra.mxu0 %v44
  %64 = vmatprep.subr.mxu0 0.0
  %65 = vmatpush1.msra.mxu0 %v45
  %66 = vmatprep.subr.mxu0 0.0
  %67 = vmatpush1.msra.mxu0 %v46
  %68 = vmatprep.subr.mxu0 0.0
  %69 = vmatpush1.msra.mxu0 %v47
  %70 = vmatprep.subr.mxu0 0.0
  %71 = vmatpush1.msra.mxu0 %v48
  %72 = vmatprep.subr.mxu0 0.0
  %73 = vmatpush1.msra.mxu0 %v49
  %74 = vmatprep.subr.mxu0 0.0
  %75 = vmatpush1.msra.mxu0 %v50
  %76 = vmatprep.subr.mxu0 0.0
  %77 = vmatpush1.msra.mxu0 %v51
  %78 = vmatprep.subr.mxu0 0.0
  %79 = vmatpush1.msra.mxu0 %v52
  %80 = vmatprep.subr.mxu0 0.0
  %81 = vmatpush1.msra.mxu0 %v53
  %82 = vmatprep.subr.mxu0 0.0
  %83 = vmatpush1.msra.mxu0 %v54
  %84 = vmatprep.subr.mxu0 0.0
  %85 = vmatpush1.msra.mxu0 %v55
  %86 = vmatprep.subr.mxu0 0.0
  %87 = vmatpush1.msra.mxu0 %v56
  %88 = vmatprep.subr.mxu0 0.0
  %89 = vmatpush1.msra.mxu0 %v57
  %90 = vmatprep.subr.mxu0 0.0
  %91 = vmatpush1.msra.mxu0 0.0
  %92 = vmatprep.subr.mxu0 0.0
  %93 = vmatpush1.msra.mxu0 0.0
  %94 = vmatprep.subr.mxu0 0.0
  %95 = vmatpush1.msra.mxu0 0.0
  %96 = vmatprep.subr.mxu0 0.0
  %97 = vmatpush1.msra.mxu0 0.0
  %98 = vmatprep.subr.mxu0 0.0
  %99 = vmatpush1.msra.mxu0 0.0
  %100 = vmatprep.subr.mxu0 0.0
  %101 = vmatpush1.msra.mxu0 0.0
  %102 = vmatprep.subr.mxu0 0.0
  %103 = vmatpush1.msra.mxu0 0.0
  %104 = vmatprep.subr.mxu0 0.0
  %105 = vmatpush1.msra.mxu0 0.0
  %106 = vmatprep.subr.mxu0 0.0
  %107 = vmatpush1.msra.mxu0 0.0
  %108 = vmatprep.subr.mxu0 0.0
  %109 = vmatpush1.msra.mxu0 0.0
  %110 = vmatprep.subr.mxu0 0.0
  %111 = vmatpush1.msra.mxu0 0.0
  %112 = vmatprep.subr.mxu0 0.0
  %113 = vmatpush1.msra.mxu0 0.0
  %114 = vmatprep.subr.mxu0 0.0
  %115 = vmatpush1.msra.mxu0 0.0
  %116 = vmatprep.subr.mxu0 0.0
  %117 = vmatpush1.msra.mxu0 0.0
  %118 = vmatprep.subr.mxu0 0.0
  %119 = vmatpush1.msra.mxu0 0.0
  %120 = vmatprep.subr.mxu0 0.0
  %121 = vmatpush1.msra.mxu0 0.0
  %122 = vmatprep.mubr.f32.mxu0 0.0
  %123 = vmatmul.mubr.f32.gmra.mrb[0].mxu0 %v34
  %v124 = vpop.f32.mrb[0].mxu0
  %v125 = vadd.f32 0.0, %v124
  %v126 = vpop.f32.mrb[0].mxu0
  %127 = vmatprep.mubr.f32.mxu0 0.0
  %128 = vmatmul.mubr.f32.gmra.mrb[0].mxu0 %v35
  %v129 = vpop.f32.mrb[0].mxu0
  %v130 = vadd.f32 0.0, %v129
  %v131 = vpop.f32.mrb[0].mxu0
  %132 = vmatprep.mubr.f32.mxu0 0.0
  %133 = vmatmul.mubr.f32.gmra.mrb[0].mxu0 %v36
  %v134 = vpop.f32.mrb[0].mxu0
  %v135 = vadd.f32 0.0, %v134
  %v136 = vpop.f32.mrb[0].mxu0
  %137 = vmatprep.mubr.f32.mxu0 0.0
  %138 = vmatmul.mubr.f32.gmra.mrb[0].mxu0 %v37
  %v139 = vpop.f32.mrb[0].mxu0
  %v140 = vadd.f32 0.0, %v139
  %v141 = vpop.f32.mrb[0].mxu0
  %142 = vmatprep.mubr.f32.mxu0 0.0
  %143 = vmatmul.mubr.f32.gmra.mrb[0].mxu0 %v38
  %v144 = vpop.f32.mrb[0].mxu0
  %v145 = vadd.f32 0.0, %v144
  %v146 = vpop.f32.mrb[0].mxu0
  %147 = vmatprep.mubr.f32.mxu0 0.0
  %148 = vmatmul.mubr.f32.gmra.mrb[0].mxu0 %v39
  %v149 = vpop.f32.mrb[0].mxu0
  %v150 = vadd.f32 0.0, %v149
  %v151 = vpop.f32.mrb[0].mxu0
  %152 = vmatprep.mubr.f32.mxu0 0.0
  %153 = vmatmul.mubr.f32.gmra.mrb[0].mxu0 %v40
  %v154 = vpop.f32.mrb[0].mxu0
  %v155 = vadd.f32 0.0, %v154
  %v156 = vpop.f32.mrb[0].mxu0
  %157 = vmatprep.mubr.f32.mxu0 0.0
  %158 = vmatmul.mubr.f32.gmra.mrb[0].mxu0 %v41
  %v159 = vpop.f32.mrb[0].mxu0
  %v160 = vadd.f32 0.0, %v159
  %v161 = vpop.f32.mrb[0].mxu0
  %162 = vdwg.mxu0
  %v163 = vadd.f32 %v26, %v125
  %v164 = vadd.f32 %v27, %v130
  %v165 = vadd.f32 %v28, %v135
  %v166 = vadd.f32 %v29, %v140
  %v167 = vadd.f32 %v30, %v145
  %v168 = vadd.f32 %v31, %v150
  %v169 = vadd.f32 %v32, %v155
  %v170 = vadd.f32 %v33, %v160
  %171 = vst [vmem:[#allocation2] sm:$0xff] %v163
  %172 = vst [vmem:[#allocation2 + $0x8] sm:$0xff] %v164
  %173 = vst [vmem:[#allocation2 + $0x10] sm:$0xff] %v165
  %174 = vst [vmem:[#allocation2 + $0x18] sm:$0xff] %v166
  %175 = vst [vmem:[#allocation2 + $0x20] sm:$0xff] %v167
  %176 = vst [vmem:[#allocation2 + $0x28] sm:$0xff] %v168
  %177 = vst [vmem:[#allocation2 + $0x30] sm:$0xff] %v169
  %178 = vst [vmem:[#allocation2 + $0x38] sm:$0xff] %v170
  // Predicated region
  $region18: #{lstm_lm_forward.5} parent=0 // pred_check
    %p179 = pneg %p14
  $region19: #{lstm_lm_forward.5} parent=0 // pred_check_branch
    %181 = sbr.rel (%p179) target = $region21
  $region20: #{lstm_lm_forward.5} parent=0 // pred_region
    %v182 = vld [vmem:[#allocation2] sm:$0xff]
    %v183 = vld [vmem:[#allocation2 + $0x8] sm:$0xff]
    %v184 = vld [vmem:[#allocation2 + $0x10] sm:$0xff]
    %v185 = vld [vmem:[#allocation2 + $0x18] sm:$0xff]
    %v186 = vld [vmem:[#allocation2 + $0x20] sm:$0xff]
    %v187 = vld [vmem:[#allocation2 + $0x28] sm:$0xff]
    %v188 = vld [vmem:[#allocation2 + $0x30] sm:$0xff]
    %v189 = vld [vmem:[#allocation2 + $0x38] sm:$0xff]
    %v190 = vld [vmem:[%s2] sm:$0x1]
    %v192 = vlaneseq
    %v193 = vshrl.u32 %v192, 7
    %v194 = vsub.s32 0, %v193
    %v195 = vrot.slane %v190, %v194
    %v197 = vadd.f32 %v182, %v195
    %v198 = vadd.f32 %v183, %v195
    %v199 = vadd.f32 %v184, %v195
    %v200 = vadd.f32 %v185, %v195
    %v201 = vadd.f32 %v186, %v195
    %v202 = vadd.f32 %v187, %v195
    %v203 = vadd.f32 %v188, %v195
    %v204 = vadd.f32 %v189, %v195
    %205 = vst [vmem:[%s3] sm:$0xff] %v197
    %206 = vst [vmem:[%s3 + $0x8] sm:$0xff] %v198
    %207 = vst [vmem:[%s3 + $0x10] sm:$0xff] %v199
    %208 = vst [vmem:[%s3 + $0x18] sm:$0xff] %v200
    %209 = vst [vmem:[%s3 + $0x20] sm:$0xff] %v201
    %210 = vst [vmem:[%s3 + $0x28] sm:$0xff] %v202
    %211 = vst [vmem:[%s3 + $0x30] sm:$0xff] %v203
    %212 = vst [vmem:[%s3 + $0x38] sm:$0xff] %v204
  $region21: #{lstm_lm_forward.5} parent=0 // pred_fallthru
    _
  // Predicated region
  $region22: #{lstm_lm_forward.5} parent=0 // pred_check
    _
  $region23: #{lstm_lm_forward.5} parent=0 // pred_check_branch
    %214 = sbr.rel (0) target = $region25
  $region24: #{lstm_lm_forward.5} parent=0 // pred_region
    _
  $region25: #{lstm_lm_forward.5} parent=0 // pred_fallthru
    _
  // Predicated region
  $region26: #{lstm_lm_forward.5} parent=0 // pred_check
    _
  $region27: #{lstm_lm_forward.5} parent=0 // pred_check_branch
    %216 = sbr.rel (0) target = $region29
  $region28: #{lstm_lm_forward.5} parent=0 // pred_region
    _
  $region29: #{lstm_lm_forward.5} parent=0 // pred_fallthru
    _

// kernel: lstm_lm_forward.3
$region0: #{lstm_lm_forward.3}
  #allocation0 [shape = 'u32[]', space=smem, size = 0x4, offset = 0x4, fixed_abs, tag = 'smem constant byte address 0x4 - core index']
  #allocation1 [shape = 'u32[144,128]{1,0:T(1,128)}', space=vmem, size = 0x12000, scoped, tag = 'internal scratch']
  #allocation2 [shape = 'f32[64,512]{1,0:T(8,128)}', space=vmem, size = 0x20000, scoped, tag = 'scratch operand']
  %s0 = inlined_call_operand.vmem [shape: f32[64,128], index: 0, kind: input, shape index: {}]
  %s1 = inlined_call_operand.vmem [shape: f32[128,512], index: 1, kind: input, shape index: {}]
  %s2 = inlined_call_operand.vmem [shape: f32[1,512], index: 2, kind: input, shape index: {}]
  %s3 = inlined_call_operand.vmem [shape: f32[64,512], index: 3, kind: output, shape index: {}]
  %s4 = sld [smem:[#allocation0]]
  $region30: #{lstm_lm_forward.3} parent=0
    _
  %s6 = ssub.s32 1, %s4
  %s7 = scalar_select 0, %s6, %s4
  // Predicated region
  $region2: #{lstm_lm_forward.3} parent=0 // pred_check
    _
  $region3: #{lstm_lm_forward.3} parent=0 // pred_check_branch
    %9 = sbr.rel (0) target = $region5
  $region4: #{lstm_lm_forward.3} parent=0 // pred_region
    _
  $region5: #{lstm_lm_forward.3} parent=0 // pred_fallthru
    _
  // Predicated region
  $region6: #{lstm_lm_forward.3} parent=0 // pred_check
    _
  $region7: #{lstm_lm_forward.3} parent=0 // pred_check_branch
    %11 = sbr.rel (0) target = $region9
  $region8: #{lstm_lm_forward.3} parent=0 // pred_region
    _
  $region9: #{lstm_lm_forward.3} parent=0 // pred_fallthru
    _
  // Predicated region
  $region10: #{lstm_lm_forward.3} parent=0 // pred_check
    _
  $region11: #{lstm_lm_forward.3} parent=0 // pred_check_branch
    %13 = sbr.rel (0) target = $region13
  $region12: #{lstm_lm_forward.3} parent=0 // pred_region
    _
  $region13: #{lstm_lm_forward.3} parent=0 // pred_fallthru
    _
  %p14 = scmp.eq.s32.totalorder 0, 0
  // Predicated region
  $region14: #{lstm_lm_forward.3} parent=0 // pred_check
    %p15 = pneg %p14
  $region15: #{lstm_lm_forward.3} parent=0 // pred_check_branch
    %17 = sbr.rel (%p15) target = $region17
  $region16: #{lstm_lm_forward.3} parent=0 // pred_region
    %18 = vst [vmem:[#allocation2] sm:$0xff] 0.0
    %19 = vst [vmem:[#allocation2 + $0x8] sm:$0xff] 0.0
    %20 = vst [vmem:[#allocation2 + $0x10] sm:$0xff] 0.0
    %21 = vst [vmem:[#allocation2 + $0x18] sm:$0xff] 0.0
    %22 = vst [vmem:[#allocation2 + $0x20] sm:$0xff] 0.0
    %23 = vst [vmem:[#allocation2 + $0x28] sm:$0xff] 0.0
    %24 = vst [vmem:[#allocation2 + $0x30] sm:$0xff] 0.0
    %25 = vst [vmem:[#allocation2 + $0x38] sm:$0xff] 0.0
    %26 = vst [vmem:[#allocation2 + $0x40] sm:$0xff] 0.0
    %27 = vst [vmem:[#allocation2 + $0x48] sm:$0xff] 0.0
    %28 = vst [vmem:[#allocation2 + $0x50] sm:$0xff] 0.0
    %29 = vst [vmem:[#allocation2 + $0x58] sm:$0xff] 0.0
    %30 = vst [vmem:[#allocation2 + $0x60] sm:$0xff] 0.0
    %31 = vst [vmem:[#allocation2 + $0x68] sm:$0xff] 0.0
    %32 = vst [vmem:[#allocation2 + $0x70] sm:$0xff] 0.0
    %33 = vst [vmem:[#allocation2 + $0x78] sm:$0xff] 0.0
    %34 = vst [vmem:[#allocation2 + $0x80] sm:$0xff] 0.0
    %35 = vst [vmem:[#allocation2 + $0x88] sm:$0xff] 0.0
    %36 = vst [vmem:[#allocation2 + $0x90] sm:$0xff] 0.0
    %37 = vst [vmem:[#allocation2 + $0x98] sm:$0xff] 0.0
    %38 = vst [vmem:[#allocation2 + $0xa0] sm:$0xff] 0.0
    %39 = vst [vmem:[#allocation2 + $0xa8] sm:$0xff] 0.0
    %40 = vst [vmem:[#allocation2 + $0xb0] sm:$0xff] 0.0
    %41 = vst [vmem:[#allocation2 + $0xb8] sm:$0xff] 0.0
    %42 = vst [vmem:[#allocation2 + $0xc0] sm:$0xff] 0.0
    %43 = vst [vmem:[#allocation2 + $0xc8] sm:$0xff] 0.0
    %44 = vst [vmem:[#allocation2 + $0xd0] sm:$0xff] 0.0
    %45 = vst [vmem:[#allocation2 + $0xd8] sm:$0xff] 0.0
    %46 = vst [vmem:[#allocation2 + $0xe0] sm:$0xff] 0.0
    %47 = vst [vmem:[#allocation2 + $0xe8] sm:$0xff] 0.0
    %48 = vst [vmem:[#allocation2 + $0xf0] sm:$0xff] 0.0
    %49 = vst [vmem:[#allocation2 + $0xf8] sm:$0xff] 0.0
  $region17: #{lstm_lm_forward.3} parent=0 // pred_fallthru
    _
  %v50 = vld [vmem:[#allocation2] sm:$0xff]
  %v51 = vld [vmem:[#allocation2 + $0x8] sm:$0xff]
  %v52 = vld [vmem:[#allocation2 + $0x10] sm:$0xff]
  %v53 = vld [vmem:[#allocation2 + $0x18] sm:$0xff]
  %v54 = vld [vmem:[#allocation2 + $0x20] sm:$0xff]
  %v55 = vld [vmem:[#allocation2 + $0x28] sm:$0xff]
  %v56 = vld [vmem:[#allocation2 + $0x30] sm:$0xff]
  %v57 = vld [vmem:[#allocation2 + $0x38] sm:$0xff]
  %v58 = vld [vmem:[#allocation2 + $0x40] sm:$0xff]
  %v59 = vld [vmem:[#allocation2 + $0x48] sm:$0xff]
  %v60 = vld [vmem:[#allocation2 + $0x50] sm:$0xff]
  %v61 = vld [vmem:[#allocation2 + $0x58] sm:$0xff]
  %v62 = vld [vmem:[#allocation2 + $0x60] sm:$0xff]
  %v63 = vld [vmem:[#allocation2 + $0x68] sm:$0xff]
  %v64 = vld [vmem:[#allocation2 + $0x70] sm:$0xff]
  %v65 = vld [vmem:[#allocation2 + $0x78] sm:$0xff]
  %v66 = vld [vmem:[#allocation2 + $0x80] sm:$0xff]
  %v67 = vld [vmem:[#allocation2 + $0x88] sm:$0xff]
  %v68 = vld [vmem:[#allocation2 + $0x90] sm:$0xff]
  %v69 = vld [vmem:[#allocation2 + $0x98] sm:$0xff]
  %v70 = vld [vmem:[#allocation2 + $0xa0] sm:$0xff]
  %v71 = vld [vmem:[#allocation2 + $0xa8] sm:$0xff]
  %v72 = vld [vmem:[#allocation2 + $0xb0] sm:$0xff]
  %v73 = vld [vmem:[#allocation2 + $0xb8] sm:$0xff]
  %v74 = vld [vmem:[#allocation2 + $0xc0] sm:$0xff]
  %v75 = vld [vmem:[#allocation2 + $0xc8] sm:$0xff]
  %v76 = vld [vmem:[#allocation2 + $0xd0] sm:$0xff]
  %v77 = vld [vmem:[#allocation2 + $0xd8] sm:$0xff]
  %v78 = vld [vmem:[#allocation2 + $0xe0] sm:$0xff]
  %v79 = vld [vmem:[#allocation2 + $0xe8] sm:$0xff]
  %v80 = vld [vmem:[#allocation2 + $0xf0] sm:$0xff]
  %v81 = vld [vmem:[#allocation2 + $0xf8] sm:$0xff]
  %v82 = vld [vmem:[%s0] sm:$0xff]
  %v83 = vld [vmem:[%s0 + $0x8] sm:$0xff]
  %v84 = vld [vmem:[%s0 + $0x10] sm:$0xff]
  %v85 = vld [vmem:[%s0 + $0x18] sm:$0xff]
  %v86 = vld [vmem:[%s0 + $0x20] sm:$0xff]
  %v87 = vld [vmem:[%s0 + $0x28] sm:$0xff]
  %v88 = vld [vmem:[%s0 + $0x30] sm:$0xff]
  %v89 = vld [vmem:[%s0 + $0x38] sm:$0xff]
  %v90 = vld [vmem:[%s1] sm:$0xff]
  %v91 = vld [vmem:[%s1 + $0x8] sm:$0xff]
  %v92 = vld [vmem:[%s1 + $0x10] sm:$0xff]
  %v93 = vld [vmem:[%s1 + $0x18] sm:$0xff]
  %v94 = vld [vmem:[%s1 + $0x20] sm:$0xff]
  %v95 = vld [vmem:[%s1 + $0x28] sm:$0xff]
  %v96 = vld [vmem:[%s1 + $0x30] sm:$0xff]
  %v97 = vld [vmem:[%s1 + $0x38] sm:$0xff]
  %v98 = vld [vmem:[%s1 + $0x40] sm:$0xff]
  %v99 = vld [vmem:[%s1 + $0x48] sm:$0xff]
  %v100 = vld [vmem:[%s1 + $0x50] sm:$0xff]
  %v101 = vld [vmem:[%s1 + $0x58] sm:$0xff]
  %v102 = vld [vmem:[%s1 + $0x60] sm:$0xff]
  %v103 = vld [vmem:[%s1 + $0x68] sm:$0xff]
  %v104 = vld [vmem:[%s1 + $0x70] sm:$0xff]
  %v105 = vld [vmem:[%s1 + $0x78] sm:$0xff]
  %v106 = vld [vmem:[%s1 + $0x80] sm:$0xff]
  %v107 = vld [vmem:[%s1 + $0x88] sm:$0xff]
  %v108 = vld [vmem:[%s1 + $0x90] sm:$0xff]
  %v109 = vld [vmem:[%s1 + $0x98] sm:$0xff]
  %v110 = vld [vmem:[%s1 + $0xa0] sm:$0xff]
  %v111 = vld [vmem:[%s1 + $0xa8] sm:$0xff]
  %v112 = vld [vmem:[%s1 + $0xb0] sm:$0xff]
  %v113 = vld [vmem:[%s1 + $0xb8] sm:$0xff]
  %v114 = vld [vmem:[%s1 + $0xc0] sm:$0xff]
  %v115 = vld [vmem:[%s1 + $0xc8] sm:$0xff]
  %v116 = vld [vmem:[%s1 + $0xd0] sm:$0xff]
  %v117 = vld [vmem:[%s1 + $0xd8] sm:$0xff]
  %v118 = vld [vmem:[%s1 + $0xe0] sm:$0xff]
  %v119 = vld [vmem:[%s1 + $0xe8] sm:$0xff]
  %v120 = vld [vmem:[%s1 + $0xf0] sm:$0xff]
  %v121 = vld [vmem:[%s1 + $0xf8] sm:$0xff]
  %v122 = vld [vmem:[%s1 + $0x100] sm:$0xff]
  %v123 = vld [vmem:[%s1 + $0x108] sm:$0xff]
  %v124 = vld [vmem:[%s1 + $0x110] sm:$0xff]
  %v125 = vld [vmem:[%s1 + $0x118] sm:$0xff]
  %v126 = vld [vmem:[%s1 + $0x120] sm:$0xff]
  %v127 = vld [vmem:[%s1 + $0x128] sm:$0xff]
  %v128 = vld [vmem:[%s1 + $0x130] sm:$0xff]
  %v129 = vld [vmem:[%s1 + $0x138] sm:$0xff]
  %v130 = vld [vmem:[%s1 + $0x140] sm:$0xff]
  %v131 = vld [vmem:[%s1 + $0x148] sm:$0xff]
  %v132 = vld [vmem:[%s1 + $0x150] sm:$0xff]
  %v133 = vld [vmem:[%s1 + $0x158] sm:$0xff]
  %v134 = vld [vmem:[%s1 + $0x160] sm:$0xff]
  %v135 = vld [vmem:[%s1 + $0x168] sm:$0xff]
  %v136 = vld [vmem:[%s1 + $0x170] sm:$0xff]
  %v137 = vld [vmem:[%s1 + $0x178] sm:$0xff]
  %v138 = vld [vmem:[%s1 + $0x180] sm:$0xff]
  %v139 = vld [vmem:[%s1 + $0x188] sm:$0xff]
  %v140 = vld [vmem:[%s1 + $0x190] sm:$0xff]
  %v141 = vld [vmem:[%s1 + $0x198] sm:$0xff]
  %v142 = vld [vmem:[%s1 + $0x1a0] sm:$0xff]
  %v143 = vld [vmem:[%s1 + $0x1a8] sm:$0xff]
  %v144 = vld [vmem:[%s1 + $0x1b0] sm:$0xff]
  %v145 = vld [vmem:[%s1 + $0x1b8] sm:$0xff]
  %v146 = vld [vmem:[%s1 + $0x1c0] sm:$0xff]
  %v147 = vld [vmem:[%s1 + $0x1c8] sm:$0xff]
  %v148 = vld [vmem:[%s1 + $0x1d0] sm:$0xff]
  %v149 = vld [vmem:[%s1 + $0x1d8] sm:$0xff]
  %v150 = vld [vmem:[%s1 + $0x1e0] sm:$0xff]
  %v151 = vld [vmem:[%s1 + $0x1e8] sm:$0xff]
  %v152 = vld [vmem:[%s1 + $0x1f0] sm:$0xff]
  %v153 = vld [vmem:[%s1 + $0x1f8] sm:$0xff]
  %154 = vmatprep.subr.mxu0 %v91
  %155 = vmatpush1.msra.mxu0 %v90
  %156 = vmatprep.subr.mxu0 %v95
  %157 = vmatpush1.msra.mxu0 %v94
  %158 = vmatprep.subr.mxu0 %v99
  %159 = vmatpush1.msra.mxu0 %v98
  %160 = vmatprep.subr.mxu0 %v103
  %161 = vmatpush1.msra.mxu0 %v102
  %162 = vmatprep.subr.mxu0 %v107
  %163 = vmatpush1.msra.mxu0 %v106
  %164 = vmatprep.subr.mxu0 %v111
  %165 = vmatpush1.msra.mxu0 %v110
  %166 = vmatprep.subr.mxu0 %v115
  %167 = vmatpush1.msra.mxu0 %v114
  %168 = vmatprep.subr.mxu0 %v119
  %169 = vmatpush1.msra.mxu0 %v118
  %170 = vmatprep.subr.mxu0 %v123
  %171 = vmatpush1.msra.mxu0 %v122
  %172 = vmatprep.subr.mxu0 %v127
  %173 = vmatpush1.msra.mxu0 %v126
  %174 = vmatprep.subr.mxu0 %v131
  %175 = vmatpush1.msra.mxu0 %v130
  %176 = vmatprep.subr.mxu0 %v135
  %177 = vmatpush1.msra.mxu0 %v134
  %178 = vmatprep.subr.mxu0 %v139
  %179 = vmatpush1.msra.mxu0 %v138
  %180 = vmatprep.subr.mxu0 %v143
  %181 = vmatpush1.msra.mxu0 %v142
  %182 = vmatprep.subr.mxu0 %v147
  %183 = vmatpush1.msra.mxu0 %v146
  %184 = vmatprep.subr.mxu0 %v151
  %185 = vmatpush1.msra.mxu0 %v150
  %186 = vmatprep.subr.mxu0 0.0
  %187 = vmatpush1.msra.mxu0 0.0
  %188 = vmatprep.subr.mxu0 0.0
  %189 = vmatpush1.msra.mxu0 0.0
  %190 = vmatprep.subr.mxu0 0.0
  %191 = vmatpush1.msra.mxu0 0.0
  %192 = vmatprep.subr.mxu0 0.0
  %193 = vmatpush1.msra.mxu0 0.0
  %194 = vmatprep.subr.mxu0 0.0
  %195 = vmatpush1.msra.mxu0 0.0
  %196 = vmatprep.subr.mxu0 0.0
  %197 = vmatpush1.msra.mxu0 0.0
  %198 = vmatprep.subr.mxu0 0.0
  %199 = vmatpush1.msra.mxu0 0.0
  %200 = vmatprep.subr.mxu0 0.0
  %201 = vmatpush1.msra.mxu0 0.0
  %202 = vmatprep.subr.mxu0 0.0
  %203 = vmatpush1.msra.mxu0 0.0
  %204 = vmatprep.subr.mxu0 0.0
  %205 = vmatpush1.msra.mxu0 0.0
  %206 = vmatprep.subr.mxu0 0.0
  %207 = vmatpush1.msra.mxu0 0.0
  %208 = vmatprep.subr.mxu0 0.0
  %209 = vmatpush1.msra.mxu0 0.0
  %210 = vmatprep.subr.mxu0 0.0
  %211 = vmatpush1.msra.mxu0 0.0
  %212 = vmatprep.subr.mxu0 0.0
  %213 = vmatpush1.msra.mxu0 0.0
  %214 = vmatprep.subr.mxu0 0.0
  %215 = vmatpush1.msra.mxu0 0.0
  %216 = vmatprep.subr.mxu0 0.0
  %217 = vmatpush1.msra.mxu0 0.0
  %218 = vmatprep.mubr.f32.mxu0 0.0
  %219 = vmatmul.mubr.f32.gmra.mrb[0].mxu0 %v82
  %v220 = vpop.f32.mrb[0].mxu0
  %v221 = vadd.f32 0.0, %v220
  %v222 = vpop.f32.mrb[0].mxu0
  %v223 = vadd.f32 0.0, %v222
  %224 = vmatprep.mubr.f32.mxu0 0.0
  %225 = vmatmul.mubr.f32.gmra.mrb[0].mxu0 %v83
  %v226 = vpop.f32.mrb[0].mxu0
  %v227 = vadd.f32 0.0, %v226
  %v228 = vpop.f32.mrb[0].mxu0
  %v229 = vadd.f32 0.0, %v228
  %230 = vmatprep.mubr.f32.mxu0 0.0
  %231 = vmatmul.mubr.f32.gmra.mrb[0].mxu0 %v84
  %v232 = vpop.f32.mrb[0].mxu0
  %v233 = vadd.f32 0.0, %v232
  %v234 = vpop.f32.mrb[0].mxu0
  %v235 = vadd.f32 0.0, %v234
  %236 = vmatprep.mubr.f32.mxu0 0.0
  %237 = vmatmul.mubr.f32.gmra.mrb[0].mxu0 %v85
  %v238 = vpop.f32.mrb[0].mxu0
  %v239 = vadd.f32 0.0, %v238
  %v240 = vpop.f32.mrb[0].mxu0
  %v241 = vadd.f32 0.0, %v240
  %242 = vmatprep.mubr.f32.mxu0 0.0
  %243 = vmatmul.mubr.f32.gmra.mrb[0].mxu0 %v86
  %v244 = vpop.f32.mrb[0].mxu0
  %v245 = vadd.f32 0.0, %v244
  %v246 = vpop.f32.mrb[0].mxu0
  %v247 = vadd.f32 0.0, %v246
  %248 = vmatprep.mubr.f32.mxu0 0.0
  %249 = vmatmul.mubr.f32.gmra.mrb[0].mxu0 %v87
  %v250 = vpop.f32.mrb[0].mxu0
  %v251 = vadd.f32 0.0, %v250
  %v252 = vpop.f32.mrb[0].mxu0
  %v253 = vadd.f32 0.0, %v252
  %254 = vmatprep.mubr.f32.mxu0 0.0
  %255 = vmatmul.mubr.f32.gmra.mrb[0].mxu0 %v88
  %v256 = vpop.f32.mrb[0].mxu0
  %v257 = vadd.f32 0.0, %v256
  %v258 = vpop.f32.mrb[0].mxu0
  %v259 = vadd.f32 0.0, %v258
  %260 = vmatprep.mubr.f32.mxu0 0.0
  %261 = vmatmul.mubr.f32.gmra.mrb[0].mxu0 %v89
  %v262 = vpop.f32.mrb[0].mxu0
  %v263 = vadd.f32 0.0, %v262
  %v264 = vpop.f32.mrb[0].mxu0
  %v265 = vadd.f32 0.0, %v264
  %266 = vdwg.mxu0
  %267 = vmatprep.subr.mxu0 %v93
  %268 = vmatpush1.msra.mxu0 %v92
  %269 = vmatprep.subr.mxu0 %v97
  %270 = vmatpush1.msra.mxu0 %v96
  %271 = vmatprep.subr.mxu0 %v101
  %272 = vmatpush1.msra.mxu0 %v100
  %273 = vmatprep.subr.mxu0 %v105
  %274 = vmatpush1.msra.mxu0 %v104
  %275 = vmatprep.subr.mxu0 %v109
  %276 = vmatpush1.msra.mxu0 %v108
  %277 = vmatprep.subr.mxu0 %v113
  %278 = vmatpush1.msra.mxu0 %v112
  %279 = vmatprep.subr.mxu0 %v117
  %280 = vmatpush1.msra.mxu0 %v116
  %281 = vmatprep.subr.mxu0 %v121
  %282 = vmatpush1.msra.mxu0 %v120
  %283 = vmatprep.subr.mxu0 %v125
  %284 = vmatpush1.msra.mxu0 %v124
  %285 = vmatprep.subr.mxu0 %v129
  %286 = vmatpush1.msra.mxu0 %v128
  %287 = vmatprep.subr.mxu0 %v133
  %288 = vmatpush1.msra.mxu0 %v132
  %289 = vmatprep.subr.mxu0 %v137
  %290 = vmatpush1.msra.mxu0 %v136
  %291 = vmatprep.subr.mxu0 %v141
  %292 = vmatpush1.msra.mxu0 %v140
  %293 = vmatprep.subr.mxu0 %v145
  %294 = vmatpush1.msra.mxu0 %v144
  %295 = vmatprep.subr.mxu0 %v149
  %296 = vmatpush1.msra.mxu0 %v148
  %297 = vmatprep.subr.mxu0 %v153
  %298 = vmatpush1.msra.mxu0 %v152
  %299 = vmatprep.subr.mxu0 0.0
  %300 = vmatpush1.msra.mxu0 0.0
  %301 = vmatprep.subr.mxu0 0.0
  %302 = vmatpush1.msra.mxu0 0.0
  %303 = vmatprep.subr.mxu0 0.0
  %304 = vmatpush1.msra.mxu0 0.0
  %305 = vmatprep.subr.mxu0 0.0
  %306 = vmatpush1.msra.mxu0 0.0
  %307 = vmatprep.subr.mxu0 0.0
  %308 = vmatpush1.msra.mxu0 0.0
  %309 = vmatprep.subr.mxu0 0.0
  %310 = vmatpush1.msra.mxu0 0.0
  %311 = vmatprep.subr.mxu0 0.0
  %312 = vmatpush1.msra.mxu0 0.0
  %313 = vmatprep.subr.mxu0 0.0
  %314 = vmatpush1.msra.mxu0 0.0
  %315 = vmatprep.subr.mxu0 0.0
  %316 = vmatpush1.msra.mxu0 0.0
  %317 = vmatprep.subr.mxu0 0.0
  %318 = vmatpush1.msra.mxu0 0.0
  %319 = vmatprep.subr.mxu0 0.0
  %320 = vmatpush1.msra.mxu0 0.0
  %321 = vmatprep.subr.mxu0 0.0
  %322 = vmatpush1.msra.mxu0 0.0
  %323 = vmatprep.subr.mxu0 0.0
  %324 = vmatpush1.msra.mxu0 0.0
  %325 = vmatprep.subr.mxu0 0.0
  %326 = vmatpush1.msra.mxu0 0.0
  %327 = vmatprep.subr.mxu0 0.0
  %328 = vmatpush1.msra.mxu0 0.0
  %329 = vmatprep.subr.mxu0 0.0
  %330 = vmatpush1.msra.mxu0 0.0
  %331 = vmatprep.mubr.f32.mxu0 0.0
  %332 = vmatmul.mubr.f32.gmra.mrb[0].mxu0 %v82
  %v333 = vpop.f32.mrb[0].mxu0
  %v334 = vadd.f32 0.0, %v333
  %v335 = vpop.f32.mrb[0].mxu0
  %v336 = vadd.f32 0.0, %v335
  %337 = vmatprep.mubr.f32.mxu0 0.0
  %338 = vmatmul.mubr.f32.gmra.mrb[0].mxu0 %v83
  %v339 = vpop.f32.mrb[0].mxu0
  %v340 = vadd.f32 0.0, %v339
  %v341 = vpop.f32.mrb[0].mxu0
  %v342 = vadd.f32 0.0, %v341
  %343 = vmatprep.mubr.f32.mxu0 0.0
  %344 = vmatmul.mubr.f32.gmra.mrb[0].mxu0 %v84
  %v345 = vpop.f32.mrb[0].mxu0
  %v346 = vadd.f32 0.0, %v345
  %v347 = vpop.f32.mrb[0].mxu0
  %v348 = vadd.f32 0.0, %v347
  %349 = vmatprep.mubr.f32.mxu0 0.0
  %350 = vmatmul.mubr.f32.gmra.mrb[0].mxu0 %v85
  %v351 = vpop.f32.mrb[0].mxu0
  %v352 = vadd.f32 0.0, %v351
  %v353 = vpop.f32.mrb[0].mxu0
  %v354 = vadd.f32 0.0, %v353
  %355 = vmatprep.mubr.f32.mxu0 0.0
  %356 = vmatmul.mubr.f32.gmra.mrb[0].mxu0 %v86
  %v357 = vpop.f32.mrb[0].mxu0
  %v358 = vadd.f32 0.0, %v357
  %v359 = vpop.f32.mrb[0].mxu0
  %v360 = vadd.f32 0.0, %v359
  %361 = vmatprep.mubr.f32.mxu0 0.0
  %362 = vmatmul.mubr.f32.gmra.mrb[0].mxu0 %v87
  %v363 = vpop.f32.mrb[0].mxu0
  %v364 = vadd.f32 0.0, %v363
  %v365 = vpop.f32.mrb[0].mxu0
  %v366 = vadd.f32 0.0, %v365
  %367 = vmatprep.mubr.f32.mxu0 0.0
  %368 = vmatmul.mubr.f32.gmra.mrb[0].mxu0 %v88
  %v369 = vpop.f32.mrb[0].mxu0
  %v370 = vadd.f32 0.0, %v369
  %v371 = vpop.f32.mrb[0].mxu0
  %v372 = vadd.f32 0.0, %v371
  %373 = vmatprep.mubr.f32.mxu0 0.0
  %374 = vmatmul.mubr.f32.gmra.mrb[0].mxu0 %v89
  %v375 = vpop.f32.mrb[0].mxu0
  %v376 = vadd.f32 0.0, %v375
  %v377 = vpop.f32.mrb[0].mxu0
  %v378 = vadd.f32 0.0, %v377
  %379 = vdwg.mxu0
  %v380 = vadd.f32 %v50, %v221
  %v381 = vadd.f32 %v51, %v223
  %v382 = vadd.f32 %v52, %v334
  %v383 = vadd.f32 %v53, %v336
  %v384 = vadd.f32 %v54, %v227
  %v385 = vadd.f32 %v55, %v229
  %v386 = vadd.f32 %v56, %v340
  %v387 = vadd.f32 %v57, %v342
  %v388 = vadd.f32 %v58, %v233
  %v389 = vadd.f32 %v59, %v235
  %v390 = vadd.f32 %v60, %v346
  %v391 = vadd.f32 %v61, %v348
  %v392 = vadd.f32 %v62, %v239
  %v393 = vadd.f32 %v63, %v241
  %v394 = vadd.f32 %v64, %v352
  %v395 = vadd.f32 %v65, %v354
  %v396 = vadd.f32 %v66, %v245
  %v397 = vadd.f32 %v67, %v247
  %v398 = vadd.f32 %v68, %v358
  %v399 = vadd.f32 %v69, %v360
  %v400 = vadd.f32 %v70, %v251
  %v401 = vadd.f32 %v71, %v253
  %v402 = vadd.f32 %v72, %v364
  %v403 = vadd.f32 %v73, %v366
  %v404 = vadd.f32 %v74, %v257
  %v405 = vadd.f32 %v75, %v259
  %v406 = vadd.f32 %v76, %v370
  %v407 = vadd.f32 %v77, %v372
  %v408 = vadd.f32 %v78, %v263
  %v409 = vadd.f32 %v79, %v265
  %v410 = vadd.f32 %v80, %v376
  %v411 = vadd.f32 %v81, %v378
  %412 = vst [vmem:[#allocation2] sm:$0xff] %v380
  %413 = vst [vmem:[#allocation2 + $0x8] sm:$0xff] %v381
  %414 = vst [vmem:[#allocation2 + $0x10] sm:$0xff] %v382
  %415 = vst [vmem:[#allocation2 + $0x18] sm:$0xff] %v383
  %416 = vst [vmem:[#allocation2 + $0x20] sm:$0xff] %v384
  %417 = vst [vmem:[#allocation2 + $0x28] sm:$0xff] %v385
  %418 = vst [vmem:[#allocation2 + $0x30] sm:$0xff] %v386
  %419 = vst [vmem:[#allocation2 + $0x38] sm:$0xff] %v387
  %420 = vst [vmem:[#allocation2 + $0x40] sm:$0xff] %v388
  %421 = vst [vmem:[#allocation2 + $0x48] sm:$0xff] %v389
  %422 = vst [vmem:[#allocation2 + $0x50] sm:$0xff] %v390
  %423 = vst [vmem:[#allocation2 + $0x58] sm:$0xff] %v391
  %424 = vst [vmem:[#allocation2 + $0x60] sm:$0xff] %v392
  %425 = vst [vmem:[#allocation2 + $0x68] sm:$0xff] %v393
  %426 = vst [vmem:[#allocation2 + $0x70] sm:$0xff] %v394
  %427 = vst [vmem:[#allocation2 + $0x78] sm:$0xff] %v395
  %428 = vst [vmem:[#allocation2 + $0x80] sm:$0xff] %v396
  %429 = vst [vmem:[#allocation2 + $0x88] sm:$0xff] %v397
  %430 = vst [vmem:[#allocation2 + $0x90] sm:$0xff] %v398
  %431 = vst [vmem:[#allocation2 + $0x98] sm:$0xff] %v399
  %432 = vst [vmem:[#allocation2 + $0xa0] sm:$0xff] %v400
  %433 = vst [vmem:[#allocation2 + $0xa8] sm:$0xff] %v401
  %434 = vst [vmem:[#allocation2 + $0xb0] sm:$0xff] %v402
  %435 = vst [vmem:[#allocation2 + $0xb8] sm:$0xff] %v403
  %436 = vst [vmem:[#allocation2 + $0xc0] sm:$0xff] %v404
  %437 = vst [vmem:[#allocation2 + $0xc8] sm:$0xff] %v405
  %438 = vst [vmem:[#allocation2 + $0xd0] sm:$0xff] %v406
  %439 = vst [vmem:[#allocation2 + $0xd8] sm:$0xff] %v407
  %440 = vst [vmem:[#allocation2 + $0xe0] sm:$0xff] %v408
  %441 = vst [vmem:[#allocation2 + $0xe8] sm:$0xff] %v409
  %442 = vst [vmem:[#allocation2 + $0xf0] sm:$0xff] %v410
  %443 = vst [vmem:[#allocation2 + $0xf8] sm:$0xff] %v411
  // Predicated region
  $region18: #{lstm_lm_forward.3} parent=0 // pred_check
    %p444 = pneg %p14
  $region19: #{lstm_lm_forward.3} parent=0 // pred_check_branch
    %446 = sbr.rel (%p444) target = $region21
  $region20: #{lstm_lm_forward.3} parent=0 // pred_region
    %v447 = vld [vmem:[#allocation2] sm:$0xff]
    %v448 = vld [vmem:[#allocation2 + $0x8] sm:$0xff]
    %v449 = vld [vmem:[#allocation2 + $0x10] sm:$0xff]
    %v450 = vld [vmem:[#allocation2 + $0x18] sm:$0xff]
    %v451 = vld [vmem:[#allocation2 + $0x20] sm:$0xff]
    %v452 = vld [vmem:[#allocation2 + $0x28] sm:$0xff]
    %v453 = vld [vmem:[#allocation2 + $0x30] sm:$0xff]
    %v454 = vld [vmem:[#allocation2 + $0x38] sm:$0xff]
    %v455 = vld [vmem:[#allocation2 + $0x40] sm:$0xff]
    %v456 = vld [vmem:[#allocation2 + $0x48] sm:$0xff]
    %v457 = vld [vmem:[#allocation2 + $0x50] sm:$0xff]
    %v458 = vld [vmem:[#allocation2 + $0x58] sm:$0xff]
    %v459 = vld [vmem:[#allocation2 + $0x60] sm:$0xff]
    %v460 = vld [vmem:[#allocation2 + $0x68] sm:$0xff]
    %v461 = vld [vmem:[#allocation2 + $0x70] sm:$0xff]
    %v462 = vld [vmem:[#allocation2 + $0x78] sm:$0xff]
    %v463 = vld [vmem:[#allocation2 + $0x80] sm:$0xff]
    %v464 = vld [vmem:[#allocation2 + $0x88] sm:$0xff]
    %v465 = vld [vmem:[#allocation2 + $0x90] sm:$0xff]
    %v466 = vld [vmem:[#allocation2 + $0x98] sm:$0xff]
    %v467 = vld [vmem:[#allocation2 + $0xa0] sm:$0xff]
    %v468 = vld [vmem:[#allocation2 + $0xa8] sm:$0xff]
    %v469 = vld [vmem:[#allocation2 + $0xb0] sm:$0xff]
    %v470 = vld [vmem:[#allocation2 + $0xb8] sm:$0xff]
    %v471 = vld [vmem:[#allocation2 + $0xc0] sm:$0xff]
    %v472 = vld [vmem:[#allocation2 + $0xc8] sm:$0xff]
    %v473 = vld [vmem:[#allocation2 + $0xd0] sm:$0xff]
    %v474 = vld [vmem:[#allocation2 + $0xd8] sm:$0xff]
    %v475 = vld [vmem:[#allocation2 + $0xe0] sm:$0xff]
    %v476 = vld [vmem:[#allocation2 + $0xe8] sm:$0xff]
    %v477 = vld [vmem:[#allocation2 + $0xf0] sm:$0xff]
    %v478 = vld [vmem:[#allocation2 + $0xf8] sm:$0xff]
    %v479 = vld [vmem:[%s2] sm:$0xf]
    %v481 = vlaneseq
    %v482 = vshrl.u32 %v481, 7
    %v483 = vsub.s32 0, %v482
    %v484 = vrot.slane %v479, %v483
    %v485 = vlaneseq
    %v486 = vshrl.u32 %v485, 7
    %v487 = vsub.s32 1, %v486
    %v488 = vrot.slane %v479, %v487
    %v489 = vlaneseq
    %v490 = vshrl.u32 %v489, 7
    %v491 = vsub.s32 2, %v490
    %v492 = vrot.slane %v479, %v491
    %v493 = vlaneseq
    %v494 = vshrl.u32 %v493, 7
    %v495 = vsub.s32 3, %v494
    %v496 = vrot.slane %v479, %v495
    %v501 = vadd.f32 %v447, %v484
    %v502 = vadd.f32 %v448, %v488
    %v503 = vadd.f32 %v449, %v492
    %v504 = vadd.f32 %v450, %v496
    %v505 = vadd.f32 %v451, %v484
    %v506 = vadd.f32 %v452, %v488
    %v507 = vadd.f32 %v453, %v492
    %v508 = vadd.f32 %v454, %v496
    %v509 = vadd.f32 %v455, %v484
    %v510 = vadd.f32 %v456, %v488
    %v511 = vadd.f32 %v457, %v492
    %v512 = vadd.f32 %v458, %v496
    %v513 = vadd.f32 %v459, %v484
    %v514 = vadd.f32 %v460, %v488
    %v515 = vadd.f32 %v461, %v492
    %v516 = vadd.f32 %v462, %v496
    %v517 = vadd.f32 %v463, %v484
    %v518 = vadd.f32 %v464, %v488
    %v519 = vadd.f32 %v465, %v492
    %v520 = vadd.f32 %v466, %v496
    %v521 = vadd.f32 %v467, %v484
    %v522 = vadd.f32 %v468, %v488
    %v523 = vadd.f32 %v469, %v492
    %v524 = vadd.f32 %v470, %v496
    %v525 = vadd.f32 %v471, %v484
    %v526 = vadd.f32 %v472, %v488
    %v527 = vadd.f32 %v473, %v492
    %v528 = vadd.f32 %v474, %v496
    %v529 = vadd.f32 %v475, %v484
    %v530 = vadd.f32 %v476, %v488
    %v531 = vadd.f32 %v477, %v492
    %v532 = vadd.f32 %v478, %v496
    %533 = vst [vmem:[%s3] sm:$0xff] %v501
    %534 = vst [vmem:[%s3 + $0x8] sm:$0xff] %v502
    %535 = vst [vmem:[%s3 + $0x10] sm:$0xff] %v503
    %536 = vst [vmem:[%s3 + $0x18] sm:$0xff] %v504
    %537 = vst [vmem:[%s3 + $0x20] sm:$0xff] %v505
    %538 = vst [vmem:[%s3 + $0x28] sm:$0xff] %v506
    %539 = vst [vmem:[%s3 + $0x30] sm:$0xff] %v507
    %540 = vst [vmem:[%s3 + $0x38] sm:$0xff] %v508
    %541 = vst [vmem:[%s3 + $0x40] sm:$0xff] %v509
    %542 = vst [vmem:[%s3 + $0x48] sm:$0xff] %v510
    %543 = vst [vmem:[%s3 + $0x50] sm:$0xff] %v511
    %544 = vst [vmem:[%s3 + $0x58] sm:$0xff] %v512
    %545 = vst [vmem:[%s3 + $0x60] sm:$0xff] %v513
    %546 = vst [vmem:[%s3 + $0x68] sm:$0xff] %v514
    %547 = vst [vmem:[%s3 + $0x70] sm:$0xff] %v515
    %548 = vst [vmem:[%s3 + $0x78] sm:$0xff] %v516
    %549 = vst [vmem:[%s3 + $0x80] sm:$0xff] %v517
    %550 = vst [vmem:[%s3 + $0x88] sm:$0xff] %v518
    %551 = vst [vmem:[%s3 + $0x90] sm:$0xff] %v519
    %552 = vst [vmem:[%s3 + $0x98] sm:$0xff] %v520
    %553 = vst [vmem:[%s3 + $0xa0] sm:$0xff] %v521
    %554 = vst [vmem:[%s3 + $0xa8] sm:$0xff] %v522
    %555 = vst [vmem:[%s3 + $0xb0] sm:$0xff] %v523
    %556 = vst [vmem:[%s3 + $0xb8] sm:$0xff] %v524
    %557 = vst [vmem:[%s3 + $0xc0] sm:$0xff] %v525
    %558 = vst [vmem:[%s3 + $0xc8] sm:$0xff] %v526
    %559 = vst [vmem:[%s3 + $0xd0] sm:$0xff] %v527
    %560 = vst [vmem:[%s3 + $0xd8] sm:$0xff] %v528
    %561 = vst [vmem:[%s3 + $0xe0] sm:$0xff] %v529
    %562 = vst [vmem:[%s3 + $0xe8] sm:$0xff] %v530
    %563 = vst [vmem:[%s3 + $0xf0] sm:$0xff] %v531
    %564 = vst [vmem:[%s3 + $0xf8] sm:$0xff] %v532
  $region21: #{lstm_lm_forward.3} parent=0 // pred_fallthru
    _
  // Predicated region
  $region22: #{lstm_lm_forward.3} parent=0 // pred_check
    _
  $region23: #{lstm_lm_forward.3} parent=0 // pred_check_branch
    %566 = sbr.rel (0) target = $region25
  $region24: #{lstm_lm_forward.3} parent=0 // pred_region
    _
  $region25: #{lstm_lm_forward.3} parent=0 // pred_fallthru
    _
  // Predicated region
  $region26: #{lstm_lm_forward.3} parent=0 // pred_check
    _
  $region27: #{lstm_lm_forward.3} parent=0 // pred_check_branch
    %568 = sbr.rel (0) target = $region29
  $region28: #{lstm_lm_forward.3} parent=0 // pred_region
    _
  $region29: #{lstm_lm_forward.3} parent=0 // pred_fallthru
    _

// kernel: lstm_lm_forward.4
$region0: #{lstm_lm_forward.4}
  #allocation0 [shape = 'u32[]', space=smem, size = 0x4, offset = 0x4, fixed_abs, tag = 'smem constant byte address 0x4 - core index']
  #allocation1 [shape = 'u32[144,128]{1,0:T(1,128)}', space=vmem, size = 0x12000, scoped, tag = 'internal scratch']
  #allocation2 [shape = 'f32[8,128]{1,0:T(8,128)}', space=vmem, size = 0x1000, scoped, tag = 'scratch operand']
  #allocation3 [shape = 'f32[8,128]{1,0:T(8,128)}', space=vmem, size = 0x1000, scoped, tag = 'scratch operand']
  #allocation4 [shape = 's32[1]{0:T(128)S(6)}', space=smem, size = 0x200, scoped, tag = 'scoped memory for lstm_lm_forward.4']
  %s0 = inlined_call_operand.<no memory space> [shape: s32[1], index: 0, kind: input, shape index: {}]
  %s1 = inlined_call_operand.vmem [shape: s32[8,1], index: 1, kind: input, shape index: {}]
  %s2 = inlined_call_operand.vmem [shape: f32[8,8,512], index: 2, kind: input, shape index: {}]
  %s3 = inlined_call_operand.vmem [shape: f32[128,512], index: 3, kind: input, shape index: {}]
  %s4 = inlined_call_operand.vmem [shape: f32[8,128], index: 4, kind: input, shape index: {}]
  %s5 = inlined_call_operand.vmem [shape: f32[8,128], index: 5, kind: input, shape index: {}]
  %s6 = inlined_call_operand.vmem [shape: f32[8,8,128], index: 6, kind: output, shape index: {0}]
  %s7 = inlined_call_operand.vmem [shape: f32[8,128], index: 7, kind: output, shape index: {1}]
  %s8 = inlined_call_operand.vmem [shape: f32[8,128], index: 8, kind: output, shape index: {2}]
  %9 = xla_tuple %s6, %s7, %s8
  %s10 = sld [smem:[#allocation0]]
  $region66: #{lstm_lm_forward.4} parent=0
    _
  %s12 = ssub.s32 1, %s10
  %s13 = scalar_select 0, %s12, %s10
  %14 = sst [smem:[#allocation4]] %s0
  // Predicated region
  $region2: #{lstm_lm_forward.4} parent=0 // pred_check
    _
  $region3: #{lstm_lm_forward.4} parent=0 // pred_check_branch
    %16 = sbr.rel (0) target = $region5
  $region4: #{lstm_lm_forward.4} parent=0 // pred_region
    _
  $region5: #{lstm_lm_forward.4} parent=0 // pred_fallthru
    _
  // Predicated region
  $region6: #{lstm_lm_forward.4} parent=0 // pred_check
    _
  $region7: #{lstm_lm_forward.4} parent=0 // pred_check_branch
    %18 = sbr.rel (0) target = $region9
  $region8: #{lstm_lm_forward.4} parent=0 // pred_region
    _
  $region9: #{lstm_lm_forward.4} parent=0 // pred_fallthru
    _
  // Predicated region
  $region10: #{lstm_lm_forward.4} parent=0 // pred_check
    _
  $region11: #{lstm_lm_forward.4} parent=0 // pred_check_branch
    %20 = sbr.rel (0) target = $region13
  $region12: #{lstm_lm_forward.4} parent=0 // pred_region
    _
  $region13: #{lstm_lm_forward.4} parent=0 // pred_fallthru
    _
  // Predicated region
  $region14: #{lstm_lm_forward.4} parent=0 // pred_check
    _
  $region15: #{lstm_lm_forward.4} parent=0 // pred_check_branch
    %22 = sbr.rel (0) target = $region17
  $region16: #{lstm_lm_forward.4} parent=0 // pred_region
    _
  $region17: #{lstm_lm_forward.4} parent=0 // pred_fallthru
    _
  // Predicated region
  $region18: #{lstm_lm_forward.4} parent=0 // pred_check
    _
  $region19: #{lstm_lm_forward.4} parent=0 // pred_check_branch
    %24 = sbr.rel (0) target = $region21
  $region20: #{lstm_lm_forward.4} parent=0 // pred_region
    _
  $region21: #{lstm_lm_forward.4} parent=0 // pred_fallthru
    _
  // Predicated region
  $region22: #{lstm_lm_forward.4} parent=0 // pred_check
    _
  $region23: #{lstm_lm_forward.4} parent=0 // pred_check_branch
    %26 = sbr.rel (0) target = $region25
  $region24: #{lstm_lm_forward.4} parent=0 // pred_region
    _
  $region25: #{lstm_lm_forward.4} parent=0 // pred_fallthru
    _
  %s27 = smul.u32 0, 8
  %p28 = scmp.eq.s32.totalorder 0, 0
  // Predicated region
  $region26: #{lstm_lm_forward.4} parent=0 // pred_check
    %p29 = pneg %p28
  $region27: #{lstm_lm_forward.4} parent=0 // pred_check_branch
    %31 = sbr.rel (%p29) target = $region29
  $region28: #{lstm_lm_forward.4} parent=0 // pred_region
    %v32 = vld [vmem:[%s4] sm:$0xff]
    %33 = vst [vmem:[#allocation2] sm:$0xff] %v32
    %v34 = vld [vmem:[%s5] sm:$0xff]
    %35 = vst [vmem:[#allocation3] sm:$0xff] %v34
  $region29: #{lstm_lm_forward.4} parent=0 // pred_fallthru
    _
  %s36 = sld [smem:[#allocation4]]
  %p37 = scmp.ge.s32.totalorder %s27, %s36
  // Predicated region
  $region30: #{lstm_lm_forward.4} parent=0 // pred_check
    %p38 = pneg %p37
  $region31: #{lstm_lm_forward.4} parent=0 // pred_check_branch
    %40 = sbr.rel (%p38) target = $region33
  $region32: #{lstm_lm_forward.4} parent=0 // pred_region
    %41 = vst [vmem:[%s6] sm:$0xff] 0.0
    %42 = vst [vmem:[%s6 + $0x8] sm:$0xff] 0.0
    %43 = vst [vmem:[%s6 + $0x10] sm:$0xff] 0.0
    %44 = vst [vmem:[%s6 + $0x18] sm:$0xff] 0.0
    %45 = vst [vmem:[%s6 + $0x20] sm:$0xff] 0.0
    %46 = vst [vmem:[%s6 + $0x28] sm:$0xff] 0.0
    %47 = vst [vmem:[%s6 + $0x30] sm:$0xff] 0.0
    %48 = vst [vmem:[%s6 + $0x38] sm:$0xff] 0.0
  $region33: #{lstm_lm_forward.4} parent=0 // pred_fallthru
    _
  %p49 = scmp.lt.s32.totalorder %s27, %s36
  // Predicated region
  $region34: #{lstm_lm_forward.4} parent=0 // pred_check
    %p50 = pneg %p49
  $region35: #{lstm_lm_forward.4} parent=0 // pred_check_branch
    %52 = sbr.rel (%p50) target = $region37
  $region36: #{lstm_lm_forward.4} parent=0 // pred_region
    %v53 = vld [vmem:[%s1] sm:$0xff]
    %v54 = vld [vmem:[%s2] sm:$0xff]
    %v55 = vld [vmem:[%s2 + $0x8] sm:$0xff]
    %v56 = vld [vmem:[%s2 + $0x10] sm:$0xff]
    %v57 = vld [vmem:[%s2 + $0x18] sm:$0xff]
    %v58 = vld [vmem:[#allocation2] sm:$0xff]
    %v59 = vld [vmem:[%s3] sm:$0xff]
    %v60 = vld [vmem:[%s3 + $0x8] sm:$0xff]
    %v61 = vld [vmem:[%s3 + $0x10] sm:$0xff]
    %v62 = vld [vmem:[%s3 + $0x18] sm:$0xff]
    %v63 = vld [vmem:[%s3 + $0x20] sm:$0xff]
    %v64 = vld [vmem:[%s3 + $0x28] sm:$0xff]
    %v65 = vld [vmem:[%s3 + $0x30] sm:$0xff]
    %v66 = vld [vmem:[%s3 + $0x38] sm:$0xff]
    %v67 = vld [vmem:[%s3 + $0x40] sm:$0xff]
    %v68 = vld [vmem:[%s3 + $0x48] sm:$0xff]
    %v69 = vld [vmem:[%s3 + $0x50] sm:$0xff]
    %v70 = vld [vmem:[%s3 + $0x58] sm:$0xff]
    %v71 = vld [vmem:[%s3 + $0x60] sm:$0xff]
    %v72 = vld [vmem:[%s3 + $0x68] sm:$0xff]
    %v73 = vld [vmem:[%s3 + $0x70] sm:$0xff]
    %v74 = vld [vmem:[%s3 + $0x78] sm:$0xff]
    %v75 = vld [vmem:[%s3 + $0x80] sm:$0xff]
    %v76 = vld [vmem:[%s3 + $0x88] sm:$0xff]
    %v77 = vld [vmem:[%s3 + $0x90] sm:$0xff]
    %v78 = vld [vmem:[%s3 + $0x98] sm:$0xff]
    %v79 = vld [vmem:[%s3 + $0xa0] sm:$0xff]
    %v80 = vld [vmem:[%s3 + $0xa8] sm:$0xff]
    %v81 = vld [vmem:[%s3 + $0xb0] sm:$0xff]
    %v82 = vld [vmem:[%s3 + $0xb8] sm:$0xff]
    %v83 = vld [vmem:[%s3 + $0xc0] sm:$0xff]
    %v84 = vld [vmem:[%s3 + $0xc8] sm:$0xff]
    %v85 = vld [vmem:[%s3 + $0xd0] sm:$0xff]
    %v86 = vld [vmem:[%s3 + $0xd8] sm:$0xff]
    %v87 = vld [vmem:[%s3 + $0xe0] sm:$0xff]
    %v88 = vld [vmem:[%s3 + $0xe8] sm:$0xff]
    %v89 = vld [vmem:[%s3 + $0xf0] sm:$0xff]
    %v90 = vld [vmem:[%s3 + $0xf8] sm:$0xff]
    %v91 = vld [vmem:[%s3 + $0x100] sm:$0xff]
    %v92 = vld [vmem:[%s3 + $0x108] sm:$0xff]
    %v93 = vld [vmem:[%s3 + $0x110] sm:$0xff]
    %v94 = vld [vmem:[%s3 + $0x118] sm:$0xff]
    %v95 = vld [vmem:[%s3 + $0x120] sm:$0xff]
    %v96 = vld [vmem:[%s3 + $0x128] sm:$0xff]
    %v97 = vld [vmem:[%s3 + $0x130] sm:$0xff]
    %v98 = vld [vmem:[%s3 + $0x138] sm:$0xff]
    %v99 = vld [vmem:[%s3 + $0x140] sm:$0xff]
    %v100 = vld [vmem:[%s3 + $0x148] sm:$0xff]
    %v101 = vld [vmem:[%s3 + $0x150] sm:$0xff]
    %v102 = vld [vmem:[%s3 + $0x158] sm:$0xff]
    %v103 = vld [vmem:[%s3 + $0x160] sm:$0xff]
    %v104 = vld [vmem:[%s3 + $0x168] sm:$0xff]
    %v105 = vld [vmem:[%s3 + $0x170] sm:$0xff]
    %v106 = vld [vmem:[%s3 + $0x178] sm:$0xff]
    %v107 = vld [vmem:[%s3 + $0x180] sm:$0xff]
    %v108 = vld [vmem:[%s3 + $0x188] sm:$0xff]
    %v109 = vld [vmem:[%s3 + $0x190] sm:$0xff]
    %v110 = vld [vmem:[%s3 + $0x198] sm:$0xff]
    %v111 = vld [vmem:[%s3 + $0x1a0] sm:$0xff]
    %v112 = vld [vmem:[%s3 + $0x1a8] sm:$0xff]
    %v113 = vld [vmem:[%s3 + $0x1b0] sm:$0xff]
    %v114 = vld [vmem:[%s3 + $0x1b8] sm:$0xff]
    %v115 = vld [vmem:[%s3 + $0x1c0] sm:$0xff]
    %v116 = vld [vmem:[%s3 + $0x1c8] sm:$0xff]
    %v117 = vld [vmem:[%s3 + $0x1d0] sm:$0xff]
    %v118 = vld [vmem:[%s3 + $0x1d8] sm:$0xff]
    %v119 = vld [vmem:[%s3 + $0x1e0] sm:$0xff]
    %v120 = vld [vmem:[%s3 + $0x1e8] sm:$0xff]
    %v121 = vld [vmem:[%s3 + $0x1f0] sm:$0xff]
    %v122 = vld [vmem:[%s3 + $0x1f8] sm:$0xff]
    %123 = vmatprep.subr.mxu0 %v60
    %124 = vmatpush1.msra.mxu0 %v59
    %125 = vmatprep.subr.mxu0 %v64
    %126 = vmatpush1.msra.mxu0 %v63
    %127 = vmatprep.subr.mxu0 %v68
    %128 = vmatpush1.msra.mxu0 %v67
    %129 = vmatprep.subr.mxu0 %v72
    %130 = vmatpush1.msra.mxu0 %v71
    %131 = vmatprep.subr.mxu0 %v76
    %132 = vmatpush1.msra.mxu0 %v75
    %133 = vmatprep.subr.mxu0 %v80
    %134 = vmatpush1.msra.mxu0 %v79
    %135 = vmatprep.subr.mxu0 %v84
    %136 = vmatpush1.msra.mxu0 %v83
    %137 = vmatprep.subr.mxu0 %v88
    %138 = vmatpush1.msra.mxu0 %v87
    %139 = vmatprep.subr.mxu0 %v92
    %140 = vmatpush1.msra.mxu0 %v91
    %141 = vmatprep.subr.mxu0 %v96
    %142 = vmatpush1.msra.mxu0 %v95
    %143 = vmatprep.subr.mxu0 %v100
    %144 = vmatpush1.msra.mxu0 %v99
    %145 = vmatprep.subr.mxu0 %v104
    %146 = vmatpush1.msra.mxu0 %v103
    %147 = vmatprep.subr.mxu0 %v108
    %148 = vmatpush1.msra.mxu0 %v107
    %149 = vmatprep.subr.mxu0 %v112
    %150 = vmatpush1.msra.mxu0 %v111
    %151 = vmatprep.subr.mxu0 %v116
    %152 = vmatpush1.msra.mxu0 %v115
    %153 = vmatprep.subr.mxu0 %v120
    %154 = vmatpush1.msra.mxu0 %v119
    %155 = vmatprep.subr.mxu0 0.0
    %156 = vmatpush1.msra.mxu0 0.0
    %157 = vmatprep.subr.mxu0 0.0
    %158 = vmatpush1.msra.mxu0 0.0
    %159 = vmatprep.subr.mxu0 0.0
    %160 = vmatpush1.msra.mxu0 0.0
    %161 = vmatprep.subr.mxu0 0.0
    %162 = vmatpush1.msra.mxu0 0.0
    %163 = vmatprep.subr.mxu0 0.0
    %164 = vmatpush1.msra.mxu0 0.0
    %165 = vmatprep.subr.mxu0 0.0
    %166 = vmatpush1.msra.mxu0 0.0
    %167 = vmatprep.subr.mxu0 0.0
    %168 = vmatpush1.msra.mxu0 0.0
    %169 = vmatprep.subr.mxu0 0.0
    %170 = vmatpush1.msra.mxu0 0.0
    %171 = vmatprep.subr.mxu0 0.0
    %172 = vmatpush1.msra.mxu0 0.0
    %173 = vmatprep.subr.mxu0 0.0
    %174 = vmatpush1.msra.mxu0 0.0
    %175 = vmatprep.subr.mxu0 0.0
    %176 = vmatpush1.msra.mxu0 0.0
    %177 = vmatprep.subr.mxu0 0.0
    %178 = vmatpush1.msra.mxu0 0.0
    %179 = vmatprep.subr.mxu0 0.0
    %180 = vmatpush1.msra.mxu0 0.0
    %181 = vmatprep.subr.mxu0 0.0
    %182 = vmatpush1.msra.mxu0 0.0
    %183 = vmatprep.subr.mxu0 0.0
    %184 = vmatpush1.msra.mxu0 0.0
    %185 = vmatprep.subr.mxu0 0.0
    %186 = vmatpush1.msra.mxu0 0.0
    %187 = vmatprep.mubr.f32.mxu0 0.0
    %188 = vmatmul.mubr.f32.gmra.mrb[0].mxu0 %v58
    %v189 = vpop.f32.mrb[0].mxu0
    %v190 = vadd.f32 0.0, %v189
    %v191 = vpop.f32.mrb[0].mxu0
    %v192 = vadd.f32 0.0, %v191
    %193 = vdwg.mxu0
    %194 = vmatprep.subr.mxu0 %v62
    %195 = vmatpush1.msra.mxu0 %v61
    %196 = vmatprep.subr.mxu0 %v66
    %197 = vmatpush1.msra.mxu0 %v65
    %198 = vmatprep.subr.mxu0 %v70
    %199 = vmatpush1.msra.mxu0 %v69
    %200 = vmatprep.subr.mxu0 %v74
    %201 = vmatpush1.msra.mxu0 %v73
    %202 = vmatprep.subr.mxu0 %v78
    %203 = vmatpush1.msra.mxu0 %v77
    %204 = vmatprep.subr.mxu0 %v82
    %205 = vmatpush1.msra.mxu0 %v81
    %206 = vmatprep.subr.mxu0 %v86
    %207 = vmatpush1.msra.mxu0 %v85
    %208 = vmatprep.subr.mxu0 %v90
    %209 = vmatpush1.msra.mxu0 %v89
    %210 = vmatprep.subr.mxu0 %v94
    %211 = vmatpush1.msra.mxu0 %v93
    %212 = vmatprep.subr.mxu0 %v98
    %213 = vmatpush1.msra.mxu0 %v97
    %214 = vmatprep.subr.mxu0 %v102
    %215 = vmatpush1.msra.mxu0 %v101
    %216 = vmatprep.subr.mxu0 %v106
    %217 = vmatpush1.msra.mxu0 %v105
    %218 = vmatprep.subr.mxu0 %v110
    %219 = vmatpush1.msra.mxu0 %v109
    %220 = vmatprep.subr.mxu0 %v114
    %221 = vmatpush1.msra.mxu0 %v113
    %222 = vmatprep.subr.mxu0 %v118
    %223 = vmatpush1.msra.mxu0 %v117
    %224 = vmatprep.subr.mxu0 %v122
    %225 = vmatpush1.msra.mxu0 %v121
    %226 = vmatprep.subr.mxu0 0.0
    %227 = vmatpush1.msra.mxu0 0.0
    %228 = vmatprep.subr.mxu0 0.0
    %229 = vmatpush1.msra.mxu0 0.0
    %230 = vmatprep.subr.mxu0 0.0
    %231 = vmatpush1.msra.mxu0 0.0
    %232 = vmatprep.subr.mxu0 0.0
    %233 = vmatpush1.msra.mxu0 0.0
    %234 = vmatprep.subr.mxu0 0.0
    %235 = vmatpush1.msra.mxu0 0.0
    %236 = vmatprep.subr.mxu0 0.0
    %237 = vmatpush1.msra.mxu0 0.0
    %238 = vmatprep.subr.mxu0 0.0
    %239 = vmatpush1.msra.mxu0 0.0
    %240 = vmatprep.subr.mxu0 0.0
    %241 = vmatpush1.msra.mxu0 0.0
    %242 = vmatprep.subr.mxu0 0.0
    %243 = vmatpush1.msra.mxu0 0.0
    %244 = vmatprep.subr.mxu0 0.0
    %245 = vmatpush1.msra.mxu0 0.0
    %246 = vmatprep.subr.mxu0 0.0
    %247 = vmatpush1.msra.mxu0 0.0
    %248 = vmatprep.subr.mxu0 0.0
    %249 = vmatpush1.msra.mxu0 0.0
    %250 = vmatprep.subr.mxu0 0.0
    %251 = vmatpush1.msra.mxu0 0.0
    %252 = vmatprep.subr.mxu0 0.0
    %253 = vmatpush1.msra.mxu0 0.0
    %254 = vmatprep.subr.mxu0 0.0
    %255 = vmatpush1.msra.mxu0 0.0
    %256 = vmatprep.subr.mxu0 0.0
    %257 = vmatpush1.msra.mxu0 0.0
    %258 = vmatprep.mubr.f32.mxu0 0.0
    %259 = vmatmul.mubr.f32.gmra.mrb[0].mxu0 %v58
    %v260 = vpop.f32.mrb[0].mxu0
    %v261 = vadd.f32 0.0, %v260
    %v262 = vpop.f32.mrb[0].mxu0
    %v263 = vadd.f32 0.0, %v262
    %264 = vdwg.mxu0
    %v265 = vadd.f32 %v54, %v190
    %v266 = vadd.f32 %v55, %v192
    %v267 = vadd.f32 %v56, %v261
    %v268 = vadd.f32 %v57, %v263
    %v269 = vxor.u32 %v265, 2147483648
    %v270 = vxor.u32 %v266, 2147483648
    %v271 = vxor.u32 %v267, 2147483648
    %v272 = vxor.u32 %v268, 2147483648
    %v273 = vmul.f32 %v269, 1.442695
    %v274 = vpow.pop %v273
    %v275 = vmul.f32 %v270, 1.442695
    %v276 = vpow.pop %v275
    %v277 = vmul.f32 %v271, 1.442695
    %v278 = vpow.pop %v277
    %v279 = vmul.f32 %v272, 1.442695
    %v280 = vpow.pop %v279
    %v281 = vadd.f32 %v274, 1.0
    %v282 = vadd.f32 %v276, 1.0
    %v283 = vadd.f32 %v278, 1.0
    %v284 = vadd.f32 %v280, 1.0
    %v285 = vrcp.pop %v281
    %v286 = vmul.f32 1.0, %v285
    %v287 = vrcp.pop %v282
    %v288 = vmul.f32 1.0, %v287
    %v289 = vrcp.pop %v283
    %v290 = vmul.f32 1.0, %v289
    %v291 = vrcp.pop %v284
    %v292 = vmul.f32 1.0, %v291
    %v293 = vmul.f32 %v290, 2.0
    %v294 = vsub.f32 %v293, 1.0
    %v295 = vld [vmem:[#allocation3] sm:$0xff]
    %v296 = vmul.f32 %v288, %v295
    %v297 = vmul.f32 %v286, %v294
    %v298 = vadd.f32 %v296, %v297
    %v299 = vtanh.pop %v298
    %v300 = vmul.f32 %v292, %v299
    %v301 = vstv %s27
    %vm302 = vcmp.lt.s32.totalorder %v301, %v53
    %v303 = vsel %vm302, 1, 0
    %304 = vset.pattern.permute.xlu0 0
    %305 = vperm.xlu0 %304, %v303
    %v306 = vpop.permute.xlu0 %305
    %vm307 = vcmp.eq.s32.totalorder %v306, 1
    %v308 = vsel %vm307, %v298, %v295
    %309 = vst [vmem:[#allocation3] sm:$0xff] %v308
    %v310 = vld [vmem:[#allocation2] sm:$0xff]
    %v311 = vsel %vm307, %v300, %v310
    %312 = vst [vmem:[#allocation2] sm:$0xff] %v311
    %v313 = vsel %vm307, %v300, 0.0
    %314 = vst [vmem:[%s6] sm:$0xff] %v313
    %s315 = scalar_lea.vmem %s2, 32
    %v316 = vld [vmem:[%s315] sm:$0xff]
    %v317 = vld [vmem:[%s315 + $0x8] sm:$0xff]
    %v318 = vld [vmem:[%s315 + $0x10] sm:$0xff]
    %v319 = vld [vmem:[%s315 + $0x18] sm:$0xff]
    %v320 = vld [vmem:[#allocation2] sm:$0xff]
    %v321 = vld [vmem:[%s3] sm:$0xff]
    %v322 = vld [vmem:[%s3 + $0x8] sm:$0xff]
    %v323 = vld [vmem:[%s3 + $0x10] sm:$0xff]
    %v324 = vld [vmem:[%s3 + $0x18] sm:$0xff]
    %v325 = vld [vmem:[%s3 + $0x20] sm:$0xff]
    %v326 = vld [vmem:[%s3 + $0x28] sm:$0xff]
    %v327 = vld [vmem:[%s3 + $0x30] sm:$0xff]
    %v328 = vld [vmem:[%s3 + $0x38] sm:$0xff]
    %v329 = vld [vmem:[%s3 + $0x40] sm:$0xff]
    %v330 = vld [vmem:[%s3 + $0x48] sm:$0xff]
    %v331 = vld [vmem:[%s3 + $0x50] sm:$0xff]
    %v332 = vld [vmem:[%s3 + $0x58] sm:$0xff]
    %v333 = vld [vmem:[%s3 + $0x60] sm:$0xff]
    %v334 = vld [vmem:[%s3 + $0x68] sm:$0xff]
    %v335 = vld [vmem:[%s3 + $0x70] sm:$0xff]
    %v336 = vld [vmem:[%s3 + $0x78] sm:$0xff]
    %v337 = vld [vmem:[%s3 + $0x80] sm:$0xff]
    %v338 = vld [vmem:[%s3 + $0x88] sm:$0xff]
    %v339 = vld [vmem:[%s3 + $0x90] sm:$0xff]
    %v340 = vld [vmem:[%s3 + $0x98] sm:$0xff]
    %v341 = vld [vmem:[%s3 + $0xa0] sm:$0xff]
    %v342 = vld [vmem:[%s3 + $0xa8] sm:$0xff]
    %v343 = vld [vmem:[%s3 + $0xb0] sm:$0xff]
    %v344 = vld [vmem:[%s3 + $0xb8] sm:$0xff]
    %v345 = vld [vmem:[%s3 + $0xc0] sm:$0xff]
    %v346 = vld [vmem:[%s3 + $0xc8] sm:$0xff]
    %v347 = vld [vmem:[%s3 + $0xd0] sm:$0xff]
    %v348 = vld [vmem:[%s3 + $0xd8] sm:$0xff]
    %v349 = vld [vmem:[%s3 + $0xe0] sm:$0xff]
    %v350 = vld [vmem:[%s3 + $0xe8] sm:$0xff]
    %v351 = vld [vmem:[%s3 + $0xf0] sm:$0xff]
    %v352 = vld [vmem:[%s3 + $0xf8] sm:$0xff]
    %v353 = vld [vmem:[%s3 + $0x100] sm:$0xff]
    %v354 = vld [vmem:[%s3 + $0x108] sm:$0xff]
    %v355 = vld [vmem:[%s3 + $0x110] sm:$0xff]
    %v356 = vld [vmem:[%s3 + $0x118] sm:$0xff]
    %v357 = vld [vmem:[%s3 + $0x120] sm:$0xff]
    %v358 = vld [vmem:[%s3 + $0x128] sm:$0xff]
    %v359 = vld [vmem:[%s3 + $0x130] sm:$0xff]
    %v360 = vld [vmem:[%s3 + $0x138] sm:$0xff]
    %v361 = vld [vmem:[%s3 + $0x140] sm:$0xff]
    %v362 = vld [vmem:[%s3 + $0x148] sm:$0xff]
    %v363 = vld [vmem:[%s3 + $0x150] sm:$0xff]
    %v364 = vld [vmem:[%s3 + $0x158] sm:$0xff]
    %v365 = vld [vmem:[%s3 + $0x160] sm:$0xff]
    %v366 = vld [vmem:[%s3 + $0x168] sm:$0xff]
    %v367 = vld [vmem:[%s3 + $0x170] sm:$0xff]
    %v368 = vld [vmem:[%s3 + $0x178] sm:$0xff]
    %v369 = vld [vmem:[%s3 + $0x180] sm:$0xff]
    %v370 = vld [vmem:[%s3 + $0x188] sm:$0xff]
    %v371 = vld [vmem:[%s3 + $0x190] sm:$0xff]
    %v372 = vld [vmem:[%s3 + $0x198] sm:$0xff]
    %v373 = vld [vmem:[%s3 + $0x1a0] sm:$0xff]
    %v374 = vld [vmem:[%s3 + $0x1a8] sm:$0xff]
    %v375 = vld [vmem:[%s3 + $0x1b0] sm:$0xff]
    %v376 = vld [vmem:[%s3 + $0x1b8] sm:$0xff]
    %v377 = vld [vmem:[%s3 + $0x1c0] sm:$0xff]
    %v378 = vld [vmem:[%s3 + $0x1c8] sm:$0xff]
    %v379 = vld [vmem:[%s3 + $0x1d0] sm:$0xff]
    %v380 = vld [vmem:[%s3 + $0x1d8] sm:$0xff]
    %v381 = vld [vmem:[%s3 + $0x1e0] sm:$0xff]
    %v382 = vld [vmem:[%s3 + $0x1e8] sm:$0xff]
    %v383 = vld [vmem:[%s3 + $0x1f0] sm:$0xff]
    %v384 = vld [vmem:[%s3 + $0x1f8] sm:$0xff]
    %385 = vmatprep.subr.mxu0 %v322
    %386 = vmatpush1.msra.mxu0 %v321
    %387 = vmatprep.subr.mxu0 %v326
    %388 = vmatpush1.msra.mxu0 %v325
    %389 = vmatprep.subr.mxu0 %v330
    %390 = vmatpush1.msra.mxu0 %v329
    %391 = vmatprep.subr.mxu0 %v334
    %392 = vmatpush1.msra.mxu0 %v333
    %393 = vmatprep.subr.mxu0 %v338
    %394 = vmatpush1.msra.mxu0 %v337
    %395 = vmatprep.subr.mxu0 %v342
    %396 = vmatpush1.msra.mxu0 %v341
    %397 = vmatprep.subr.mxu0 %v346
    %398 = vmatpush1.msra.mxu0 %v345
    %399 = vmatprep.subr.mxu0 %v350
    %400 = vmatpush1.msra.mxu0 %v349
    %401 = vmatprep.subr.mxu0 %v354
    %402 = vmatpush1.msra.mxu0 %v353
    %403 = vmatprep.subr.mxu0 %v358
    %404 = vmatpush1.msra.mxu0 %v357
    %405 = vmatprep.subr.mxu0 %v362
    %406 = vmatpush1.msra.mxu0 %v361
    %407 = vmatprep.subr.mxu0 %v366
    %408 = vmatpush1.msra.mxu0 %v365
    %409 = vmatprep.subr.mxu0 %v370
    %410 = vmatpush1.msra.mxu0 %v369
    %411 = vmatprep.subr.mxu0 %v374
    %412 = vmatpush1.msra.mxu0 %v373
    %413 = vmatprep.subr.mxu0 %v378
    %414 = vmatpush1.msra.mxu0 %v377
    %415 = vmatprep.subr.mxu0 %v382
    %416 = vmatpush1.msra.mxu0 %v381
    %417 = vmatprep.subr.mxu0 0.0
    %418 = vmatpush1.msra.mxu0 0.0
    %419 = vmatprep.subr.mxu0 0.0
    %420 = vmatpush1.msra.mxu0 0.0
    %421 = vmatprep.subr.mxu0 0.0
    %422 = vmatpush1.msra.mxu0 0.0
    %423 = vmatprep.subr.mxu0 0.0
    %424 = vmatpush1.msra.mxu0 0.0
    %425 = vmatprep.subr.mxu0 0.0
    %426 = vmatpush1.msra.mxu0 0.0
    %427 = vmatprep.subr.mxu0 0.0
    %428 = vmatpush1.msra.mxu0 0.0
    %429 = vmatprep.subr.mxu0 0.0
    %430 = vmatpush1.msra.mxu0 0.0
    %431 = vmatprep.subr.mxu0 0.0
    %432 = vmatpush1.msra.mxu0 0.0
    %433 = vmatprep.subr.mxu0 0.0
    %434 = vmatpush1.msra.mxu0 0.0
    %435 = vmatprep.subr.mxu0 0.0
    %436 = vmatpush1.msra.mxu0 0.0
    %437 = vmatprep.subr.mxu0 0.0
    %438 = vmatpush1.msra.mxu0 0.0
    %439 = vmatprep.subr.mxu0 0.0
    %440 = vmatpush1.msra.mxu0 0.0
    %441 = vmatprep.subr.mxu0 0.0
    %442 = vmatpush1.msra.mxu0 0.0
    %443 = vmatprep.subr.mxu0 0.0
    %444 = vmatpush1.msra.mxu0 0.0
    %445 = vmatprep.subr.mxu0 0.0
    %446 = vmatpush1.msra.mxu0 0.0
    %447 = vmatprep.subr.mxu0 0.0
    %448 = vmatpush1.msra.mxu0 0.0
    %449 = vmatprep.mubr.f32.mxu0 0.0
    %450 = vmatmul.mubr.f32.gmra.mrb[0].mxu0 %v320
    %v451 = vpop.f32.mrb[0].mxu0
    %v452 = vadd.f32 0.0, %v451
    %v453 = vpop.f32.mrb[0].mxu0
    %v454 = vadd.f32 0.0, %v453
    %455 = vdwg.mxu0
    %456 = vmatprep.subr.mxu0 %v324
    %457 = vmatpush1.msra.mxu0 %v323
    %458 = vmatprep.subr.mxu0 %v328
    %459 = vmatpush1.msra.mxu0 %v327
    %460 = vmatprep.subr.mxu0 %v332
    %461 = vmatpush1.msra.mxu0 %v331
    %462 = vmatprep.subr.mxu0 %v336
    %463 = vmatpush1.msra.mxu0 %v335
    %464 = vmatprep.subr.mxu0 %v340
    %465 = vmatpush1.msra.mxu0 %v339
    %466 = vmatprep.subr.mxu0 %v344
    %467 = vmatpush1.msra.mxu0 %v343
    %468 = vmatprep.subr.mxu0 %v348
    %469 = vmatpush1.msra.mxu0 %v347
    %470 = vmatprep.subr.mxu0 %v352
    %471 = vmatpush1.msra.mxu0 %v351
    %472 = vmatprep.subr.mxu0 %v356
    %473 = vmatpush1.msra.mxu0 %v355
    %474 = vmatprep.subr.mxu0 %v360
    %475 = vmatpush1.msra.mxu0 %v359
    %476 = vmatprep.subr.mxu0 %v364
    %477 = vmatpush1.msra.mxu0 %v363
    %478 = vmatprep.subr.mxu0 %v368
    %479 = vmatpush1.msra.mxu0 %v367
    %480 = vmatprep.subr.mxu0 %v372
    %481 = vmatpush1.msra.mxu0 %v371
    %482 = vmatprep.subr.mxu0 %v376
    %483 = vmatpush1.msra.mxu0 %v375
    %484 = vmatprep.subr.mxu0 %v380
    %485 = vmatpush1.msra.mxu0 %v379
    %486 = vmatprep.subr.mxu0 %v384
    %487 = vmatpush1.msra.mxu0 %v383
    %488 = vmatprep.subr.mxu0 0.0
    %489 = vmatpush1.msra.mxu0 0.0
    %490 = vmatprep.subr.mxu0 0.0
    %491 = vmatpush1.msra.mxu0 0.0
    %492 = vmatprep.subr.mxu0 0.0
    %493 = vmatpush1.msra.mxu0 0.0
    %494 = vmatprep.subr.mxu0 0.0
    %495 = vmatpush1.msra.mxu0 0.0
    %496 = vmatprep.subr.mxu0 0.0
    %497 = vmatpush1.msra.mxu0 0.0
    %498 = vmatprep.subr.mxu0 0.0
    %499 = vmatpush1.msra.mxu0 0.0
    %500 = vmatprep.subr.mxu0 0.0
    %501 = vmatpush1.msra.mxu0 0.0
    %502 = vmatprep.subr.mxu0 0.0
    %503 = vmatpush1.msra.mxu0 0.0
    %504 = vmatprep.subr.mxu0 0.0
    %505 = vmatpush1.msra.mxu0 0.0
    %506 = vmatprep.subr.mxu0 0.0
    %507 = vmatpush1.msra.mxu0 0.0
    %508 = vmatprep.subr.mxu0 0.0
    %509 = vmatpush1.msra.mxu0 0.0
    %510 = vmatprep.subr.mxu0 0.0
    %511 = vmatpush1.msra.mxu0 0.0
    %512 = vmatprep.subr.mxu0 0.0
    %513 = vmatpush1.msra.mxu0 0.0
    %514 = vmatprep.subr.mxu0 0.0
    %515 = vmatpush1.msra.mxu0 0.0
    %516 = vmatprep.subr.mxu0 0.0
    %517 = vmatpush1.msra.mxu0 0.0
    %518 = vmatprep.subr.mxu0 0.0
    %519 = vmatpush1.msra.mxu0 0.0
    %520 = vmatprep.mubr.f32.mxu0 0.0
    %521 = vmatmul.mubr.f32.gmra.mrb[0].mxu0 %v320
    %v522 = vpop.f32.mrb[0].mxu0
    %v523 = vadd.f32 0.0, %v522
    %v524 = vpop.f32.mrb[0].mxu0
    %v525 = vadd.f32 0.0, %v524
    %526 = vdwg.mxu0
    %v527 = vadd.f32 %v316, %v452
    %v528 = vadd.f32 %v317, %v454
    %v529 = vadd.f32 %v318, %v523
    %v530 = vadd.f32 %v319, %v525
    %v531 = vxor.u32 %v527, 2147483648
    %v532 = vxor.u32 %v528, 2147483648
    %v533 = vxor.u32 %v529, 2147483648
    %v534 = vxor.u32 %v530, 2147483648
    %v535 = vmul.f32 %v531, 1.442695
    %v536 = vpow.pop %v535
    %v537 = vmul.f32 %v532, 1.442695
    %v538 = vpow.pop %v537
    %v539 = vmul.f32 %v533, 1.442695
    %v540 = vpow.pop %v539
    %v541 = vmul.f32 %v534, 1.442695
    %v542 = vpow.pop %v541
    %v543 = vadd.f32 %v536, 1.0
    %v544 = vadd.f32 %v538, 1.0
    %v545 = vadd.f32 %v540, 1.0
    %v546 = vadd.f32 %v542, 1.0
    %v547 = vrcp.pop %v543
    %v548 = vmul.f32 1.0, %v547
    %v549 = vrcp.pop %v544
    %v550 = vmul.f32 1.0, %v549
    %v551 = vrcp.pop %v545
    %v552 = vmul.f32 1.0, %v551
    %v553 = vrcp.pop %v546
    %v554 = vmul.f32 1.0, %v553
    %v555 = vmul.f32 %v552, 2.0
    %v556 = vsub.f32 %v555, 1.0
    %v557 = vld [vmem:[#allocation3] sm:$0xff]
    %v558 = vmul.f32 %v550, %v557
    %v559 = vmul.f32 %v548, %v556
    %v560 = vadd.f32 %v558, %v559
    %v561 = vtanh.pop %v560
    %v562 = vmul.f32 %v554, %v561
    %s563 = sadd.s32 %s27, 1
    %v564 = vstv %s563
    %vm565 = vcmp.lt.s32.totalorder %v564, %v53
    %v566 = vsel %vm565, 1, 0
    %567 = vset.pattern.permute.xlu0 0
    %568 = vperm.xlu0 %567, %v566
    %v569 = vpop.permute.xlu0 %568
    %vm570 = vcmp.eq.s32.totalorder %v569, 1
    %v571 = vsel %vm570, %v560, %v557
    %572 = vst [vmem:[#allocation3] sm:$0xff] %v571
    %v573 = vld [vmem:[#allocation2] sm:$0xff]
    %v574 = vsel %vm570, %v562, %v573
    %575 = vst [vmem:[#allocation2] sm:$0xff] %v574
    %v576 = vsel %vm570, %v562, 0.0
    %s577 = scalar_lea.vmem %s6, 8
    %578 = vst [vmem:[%s577] sm:$0xff] %v576
    %s579 = scalar_lea.vmem %s2, 64
    %v580 = vld [vmem:[%s579] sm:$0xff]
    %v581 = vld [vmem:[%s579 + $0x8] sm:$0xff]
    %v582 = vld [vmem:[%s579 + $0x10] sm:$0xff]
    %v583 = vld [vmem:[%s579 + $0x18] sm:$0xff]
    %v584 = vld [vmem:[#allocation2] sm:$0xff]
    %v585 = vld [vmem:[%s3] sm:$0xff]
    %v586 = vld [vmem:[%s3 + $0x8] sm:$0xff]
    %v587 = vld [vmem:[%s3 + $0x10] sm:$0xff]
    %v588 = vld [vmem:[%s3 + $0x18] sm:$0xff]
    %v589 = vld [vmem:[%s3 + $0x20] sm:$0xff]
    %v590 = vld [vmem:[%s3 + $0x28] sm:$0xff]
    %v591 = vld [vmem:[%s3 + $0x30] sm:$0xff]
    %v592 = vld [vmem:[%s3 + $0x38] sm:$0xff]
    %v593 = vld [vmem:[%s3 + $0x40] sm:$0xff]
    %v594 = vld [vmem:[%s3 + $0x48] sm:$0xff]
    %v595 = vld [vmem:[%s3 + $0x50] sm:$0xff]
    %v596 = vld [vmem:[%s3 + $0x58] sm:$0xff]
    %v597 = vld [vmem:[%s3 + $0x60] sm:$0xff]
    %v598 = vld [vmem:[%s3 + $0x68] sm:$0xff]
    %v599 = vld [vmem:[%s3 + $0x70] sm:$0xff]
    %v600 = vld [vmem:[%s3 + $0x78] sm:$0xff]
    %v601 = vld [vmem:[%s3 + $0x80] sm:$0xff]
    %v602 = vld [vmem:[%s3 + $0x88] sm:$0xff]
    %v603 = vld [vmem:[%s3 + $0x90] sm:$0xff]
    %v604 = vld [vmem:[%s3 + $0x98] sm:$0xff]
    %v605 = vld [vmem:[%s3 + $0xa0] sm:$0xff]
    %v606 = vld [vmem:[%s3 + $0xa8] sm:$0xff]
    %v607 = vld [vmem:[%s3 + $0xb0] sm:$0xff]
    %v608 = vld [vmem:[%s3 + $0xb8] sm:$0xff]
    %v609 = vld [vmem:[%s3 + $0xc0] sm:$0xff]
    %v610 = vld [vmem:[%s3 + $0xc8] sm:$0xff]
    %v611 = vld [vmem:[%s3 + $0xd0] sm:$0xff]
    %v612 = vld [vmem:[%s3 + $0xd8] sm:$0xff]
    %v613 = vld [vmem:[%s3 + $0xe0] sm:$0xff]
    %v614 = vld [vmem:[%s3 + $0xe8] sm:$0xff]
    %v615 = vld [vmem:[%s3 + $0xf0] sm:$0xff]
    %v616 = vld [vmem:[%s3 + $0xf8] sm:$0xff]
    %v617 = vld [vmem:[%s3 + $0x100] sm:$0xff]
    %v618 = vld [vmem:[%s3 + $0x108] sm:$0xff]
    %v619 = vld [vmem:[%s3 + $0x110] sm:$0xff]
    %v620 = vld [vmem:[%s3 + $0x118] sm:$0xff]
    %v621 = vld [vmem:[%s3 + $0x120] sm:$0xff]
    %v622 = vld [vmem:[%s3 + $0x128] sm:$0xff]
    %v623 = vld [vmem:[%s3 + $0x130] sm:$0xff]
    %v624 = vld [vmem:[%s3 + $0x138] sm:$0xff]
    %v625 = vld [vmem:[%s3 + $0x140] sm:$0xff]
    %v626 = vld [vmem:[%s3 + $0x148] sm:$0xff]
    %v627 = vld [vmem:[%s3 + $0x150] sm:$0xff]
    %v628 = vld [vmem:[%s3 + $0x158] sm:$0xff]
    %v629 = vld [vmem:[%s3 + $0x160] sm:$0xff]
    %v630 = vld [vmem:[%s3 + $0x168] sm:$0xff]
    %v631 = vld [vmem:[%s3 + $0x170] sm:$0xff]
    %v632 = vld [vmem:[%s3 + $0x178] sm:$0xff]
    %v633 = vld [vmem:[%s3 + $0x180] sm:$0xff]
    %v634 = vld [vmem:[%s3 + $0x188] sm:$0xff]
    %v635 = vld [vmem:[%s3 + $0x190] sm:$0xff]
    %v636 = vld [vmem:[%s3 + $0x198] sm:$0xff]
    %v637 = vld [vmem:[%s3 + $0x1a0] sm:$0xff]
    %v638 = vld [vmem:[%s3 + $0x1a8] sm:$0xff]
    %v639 = vld [vmem:[%s3 + $0x1b0] sm:$0xff]
    %v640 = vld [vmem:[%s3 + $0x1b8] sm:$0xff]
    %v641 = vld [vmem:[%s3 + $0x1c0] sm:$0xff]
    %v642 = vld [vmem:[%s3 + $0x1c8] sm:$0xff]
    %v643 = vld [vmem:[%s3 + $0x1d0] sm:$0xff]
    %v644 = vld [vmem:[%s3 + $0x1d8] sm:$0xff]
    %v645 = vld [vmem:[%s3 + $0x1e0] sm:$0xff]
    %v646 = vld [vmem:[%s3 + $0x1e8] sm:$0xff]
    %v647 = vld [vmem:[%s3 + $0x1f0] sm:$0xff]
    %v648 = vld [vmem:[%s3 + $0x1f8] sm:$0xff]
    %649 = vmatprep.subr.mxu0 %v586
    %650 = vmatpush1.msra.mxu0 %v585
    %651 = vmatprep.subr.mxu0 %v590
    %652 = vmatpush1.msra.mxu0 %v589
    %653 = vmatprep.subr.mxu0 %v594
    %654 = vmatpush1.msra.mxu0 %v593
    %655 = vmatprep.subr.mxu0 %v598
    %656 = vmatpush1.msra.mxu0 %v597
    %657 = vmatprep.subr.mxu0 %v602
    %658 = vmatpush1.msra.mxu0 %v601
    %659 = vmatprep.subr.mxu0 %v606
    %660 = vmatpush1.msra.mxu0 %v605
    %661 = vmatprep.subr.mxu0 %v610
    %662 = vmatpush1.msra.mxu0 %v609
    %663 = vmatprep.subr.mxu0 %v614
    %664 = vmatpush1.msra.mxu0 %v613
    %665 = vmatprep.subr.mxu0 %v618
    %666 = vmatpush1.msra.mxu0 %v617
    %667 = vmatprep.subr.mxu0 %v622
    %668 = vmatpush1.msra.mxu0 %v621
    %669 = vmatprep.subr.mxu0 %v626
    %670 = vmatpush1.msra.mxu0 %v625
    %671 = vmatprep.subr.mxu0 %v630
    %672 = vmatpush1.msra.mxu0 %v629
    %673 = vmatprep.subr.mxu0 %v634
    %674 = vmatpush1.msra.mxu0 %v633
    %675 = vmatprep.subr.mxu0 %v638
    %676 = vmatpush1.msra.mxu0 %v637
    %677 = vmatprep.subr.mxu0 %v642
    %678 = vmatpush1.msra.mxu0 %v641
    %679 = vmatprep.subr.mxu0 %v646
    %680 = vmatpush1.msra.mxu0 %v645
    %681 = vmatprep.subr.mxu0 0.0
    %682 = vmatpush1.msra.mxu0 0.0
    %683 = vmatprep.subr.mxu0 0.0
    %684 = vmatpush1.msra.mxu0 0.0
    %685 = vmatprep.subr.mxu0 0.0
    %686 = vmatpush1.msra.mxu0 0.0
    %687 = vmatprep.subr.mxu0 0.0
    %688 = vmatpush1.msra.mxu0 0.0
    %689 = vmatprep.subr.mxu0 0.0
    %690 = vmatpush1.msra.mxu0 0.0
    %691 = vmatprep.subr.mxu0 0.0
    %692 = vmatpush1.msra.mxu0 0.0
    %693 = vmatprep.subr.mxu0 0.0
    %694 = vmatpush1.msra.mxu0 0.0
    %695 = vmatprep.subr.mxu0 0.0
    %696 = vmatpush1.msra.mxu0 0.0
    %697 = vmatprep.subr.mxu0 0.0
    %698 = vmatpush1.msra.mxu0 0.0
    %699 = vmatprep.subr.mxu0 0.0
    %700 = vmatpush1.msra.mxu0 0.0
    %701 = vmatprep.subr.mxu0 0.0
    %702 = vmatpush1.msra.mxu0 0.0
    %703 = vmatprep.subr.mxu0 0.0
    %704 = vmatpush1.msra.mxu0 0.0
    %705 = vmatprep.subr.mxu0 0.0
    %706 = vmatpush1.msra.mxu0 0.0
    %707 = vmatprep.subr.mxu0 0.0
    %708 = vmatpush1.msra.mxu0 0.0
    %709 = vmatprep.subr.mxu0 0.0
    %710 = vmatpush1.msra.mxu0 0.0
    %711 = vmatprep.subr.mxu0 0.0
    %712 = vmatpush1.msra.mxu0 0.0
    %713 = vmatprep.mubr.f32.mxu0 0.0
    %714 = vmatmul.mubr.f32.gmra.mrb[0].mxu0 %v584
    %v715 = vpop.f32.mrb[0].mxu0
    %v716 = vadd.f32 0.0, %v715
    %v717 = vpop.f32.mrb[0].mxu0
    %v718 = vadd.f32 0.0, %v717
    %719 = vdwg.mxu0
    %720 = vmatprep.subr.mxu0 %v588
    %721 = vmatpush1.msra.mxu0 %v587
    %722 = vmatprep.subr.mxu0 %v592
    %723 = vmatpush1.msra.mxu0 %v591
    %724 = vmatprep.subr.mxu0 %v596
    %725 = vmatpush1.msra.mxu0 %v595
    %726 = vmatprep.subr.mxu0 %v600
    %727 = vmatpush1.msra.mxu0 %v599
    %728 = vmatprep.subr.mxu0 %v604
    %729 = vmatpush1.msra.mxu0 %v603
    %730 = vmatprep.subr.mxu0 %v608
    %731 = vmatpush1.msra.mxu0 %v607
    %732 = vmatprep.subr.mxu0 %v612
    %733 = vmatpush1.msra.mxu0 %v611
    %734 = vmatprep.subr.mxu0 %v616
    %735 = vmatpush1.msra.mxu0 %v615
    %736 = vmatprep.subr.mxu0 %v620
    %737 = vmatpush1.msra.mxu0 %v619
    %738 = vmatprep.subr.mxu0 %v624
    %739 = vmatpush1.msra.mxu0 %v623
    %740 = vmatprep.subr.mxu0 %v628
    %741 = vmatpush1.msra.mxu0 %v627
    %742 = vmatprep.subr.mxu0 %v632
    %743 = vmatpush1.msra.mxu0 %v631
    %744 = vmatprep.subr.mxu0 %v636
    %745 = vmatpush1.msra.mxu0 %v635
    %746 = vmatprep.subr.mxu0 %v640
    %747 = vmatpush1.msra.mxu0 %v639
    %748 = vmatprep.subr.mxu0 %v644
    %749 = vmatpush1.msra.mxu0 %v643
    %750 = vmatprep.subr.mxu0 %v648
    %751 = vmatpush1.msra.mxu0 %v647
    %752 = vmatprep.subr.mxu0 0.0
    %753 = vmatpush1.msra.mxu0 0.0
    %754 = vmatprep.subr.mxu0 0.0
    %755 = vmatpush1.msra.mxu0 0.0
    %756 = vmatprep.subr.mxu0 0.0
    %757 = vmatpush1.msra.mxu0 0.0
    %758 = vmatprep.subr.mxu0 0.0
    %759 = vmatpush1.msra.mxu0 0.0
    %760 = vmatprep.subr.mxu0 0.0
    %761 = vmatpush1.msra.mxu0 0.0
    %762 = vmatprep.subr.mxu0 0.0
    %763 = vmatpush1.msra.mxu0 0.0
    %764 = vmatprep.subr.mxu0 0.0
    %765 = vmatpush1.msra.mxu0 0.0
    %766 = vmatprep.subr.mxu0 0.0
    %767 = vmatpush1.msra.mxu0 0.0
    %768 = vmatprep.subr.mxu0 0.0
    %769 = vmatpush1.msra.mxu0 0.0
    %770 = vmatprep.subr.mxu0 0.0
    %771 = vmatpush1.msra.mxu0 0.0
    %772 = vmatprep.subr.mxu0 0.0
    %773 = vmatpush1.msra.mxu0 0.0
    %774 = vmatprep.subr.mxu0 0.0
    %775 = vmatpush1.msra.mxu0 0.0
    %776 = vmatprep.subr.mxu0 0.0
    %777 = vmatpush1.msra.mxu0 0.0
    %778 = vmatprep.subr.mxu0 0.0
    %779 = vmatpush1.msra.mxu0 0.0
    %780 = vmatprep.subr.mxu0 0.0
    %781 = vmatpush1.msra.mxu0 0.0
    %782 = vmatprep.subr.mxu0 0.0
    %783 = vmatpush1.msra.mxu0 0.0
    %784 = vmatprep.mubr.f32.mxu0 0.0
    %785 = vmatmul.mubr.f32.gmra.mrb[0].mxu0 %v584
    %v786 = vpop.f32.mrb[0].mxu0
    %v787 = vadd.f32 0.0, %v786
    %v788 = vpop.f32.mrb[0].mxu0
    %v789 = vadd.f32 0.0, %v788
    %790 = vdwg.mxu0
    %v791 = vadd.f32 %v580, %v716
    %v792 = vadd.f32 %v581, %v718
    %v793 = vadd.f32 %v582, %v787
    %v794 = vadd.f32 %v583, %v789
    %v795 = vxor.u32 %v791, 2147483648
    %v796 = vxor.u32 %v792, 2147483648
    %v797 = vxor.u32 %v793, 2147483648
    %v798 = vxor.u32 %v794, 2147483648
    %v799 = vmul.f32 %v795, 1.442695
    %v800 = vpow.pop %v799
    %v801 = vmul.f32 %v796, 1.442695
    %v802 = vpow.pop %v801
    %v803 = vmul.f32 %v797, 1.442695
    %v804 = vpow.pop %v803
    %v805 = vmul.f32 %v798, 1.442695
    %v806 = vpow.pop %v805
    %v807 = vadd.f32 %v800, 1.0
    %v808 = vadd.f32 %v802, 1.0
    %v809 = vadd.f32 %v804, 1.0
    %v810 = vadd.f32 %v806, 1.0
    %v811 = vrcp.pop %v807
    %v812 = vmul.f32 1.0, %v811
    %v813 = vrcp.pop %v808
    %v814 = vmul.f32 1.0, %v813
    %v815 = vrcp.pop %v809
    %v816 = vmul.f32 1.0, %v815
    %v817 = vrcp.pop %v810
    %v818 = vmul.f32 1.0, %v817
    %v819 = vmul.f32 %v816, 2.0
    %v820 = vsub.f32 %v819, 1.0
    %v821 = vld [vmem:[#allocation3] sm:$0xff]
    %v822 = vmul.f32 %v814, %v821
    %v823 = vmul.f32 %v812, %v820
    %v824 = vadd.f32 %v822, %v823
    %v825 = vtanh.pop %v824
    %v826 = vmul.f32 %v818, %v825
    %s827 = sadd.s32 %s27, 2
    %v828 = vstv %s827
    %vm829 = vcmp.lt.s32.totalorder %v828, %v53
    %v830 = vsel %vm829, 1, 0
    %831 = vset.pattern.permute.xlu0 0
    %832 = vperm.xlu0 %831, %v830
    %v833 = vpop.permute.xlu0 %832
    %vm834 = vcmp.eq.s32.totalorder %v833, 1
    %v835 = vsel %vm834, %v824, %v821
    %836 = vst [vmem:[#allocation3] sm:$0xff] %v835
    %v837 = vld [vmem:[#allocation2] sm:$0xff]
    %v838 = vsel %vm834, %v826, %v837
    %839 = vst [vmem:[#allocation2] sm:$0xff] %v838
    %v840 = vsel %vm834, %v826, 0.0
    %s841 = scalar_lea.vmem %s6, 16
    %842 = vst [vmem:[%s841] sm:$0xff] %v840
    %s843 = scalar_lea.vmem %s2, 96
    %v844 = vld [vmem:[%s843] sm:$0xff]
    %v845 = vld [vmem:[%s843 + $0x8] sm:$0xff]
    %v846 = vld [vmem:[%s843 + $0x10] sm:$0xff]
    %v847 = vld [vmem:[%s843 + $0x18] sm:$0xff]
    %v848 = vld [vmem:[#allocation2] sm:$0xff]
    %v849 = vld [vmem:[%s3] sm:$0xff]
    %v850 = vld [vmem:[%s3 + $0x8] sm:$0xff]
    %v851 = vld [vmem:[%s3 + $0x10] sm:$0xff]
    %v852 = vld [vmem:[%s3 + $0x18] sm:$0xff]
    %v853 = vld [vmem:[%s3 + $0x20] sm:$0xff]
    %v854 = vld [vmem:[%s3 + $0x28] sm:$0xff]
    %v855 = vld [vmem:[%s3 + $0x30] sm:$0xff]
    %v856 = vld [vmem:[%s3 + $0x38] sm:$0xff]
    %v857 = vld [vmem:[%s3 + $0x40] sm:$0xff]
    %v858 = vld [vmem:[%s3 + $0x48] sm:$0xff]
    %v859 = vld [vmem:[%s3 + $0x50] sm:$0xff]
    %v860 = vld [vmem:[%s3 + $0x58] sm:$0xff]
    %v861 = vld [vmem:[%s3 + $0x60] sm:$0xff]
    %v862 = vld [vmem:[%s3 + $0x68] sm:$0xff]
    %v863 = vld [vmem:[%s3 + $0x70] sm:$0xff]
    %v864 = vld [vmem:[%s3 + $0x78] sm:$0xff]
    %v865 = vld [vmem:[%s3 + $0x80] sm:$0xff]
    %v866 = vld [vmem:[%s3 + $0x88] sm:$0xff]
    %v867 = vld [vmem:[%s3 + $0x90] sm:$0xff]
    %v868 = vld [vmem:[%s3 + $0x98] sm:$0xff]
    %v869 = vld [vmem:[%s3 + $0xa0] sm:$0xff]
    %v870 = vld [vmem:[%s3 + $0xa8] sm:$0xff]
    %v871 = vld [vmem:[%s3 + $0xb0] sm:$0xff]
    %v872 = vld [vmem:[%s3 + $0xb8] sm:$0xff]
    %v873 = vld [vmem:[%s3 + $0xc0] sm:$0xff]
    %v874 = vld [vmem:[%s3 + $0xc8] sm:$0xff]
    %v875 = vld [vmem:[%s3 + $0xd0] sm:$0xff]
    %v876 = vld [vmem:[%s3 + $0xd8] sm:$0xff]
    %v877 = vld [vmem:[%s3 + $0xe0] sm:$0xff]
    %v878 = vld [vmem:[%s3 + $0xe8] sm:$0xff]
    %v879 = vld [vmem:[%s3 + $0xf0] sm:$0xff]
    %v880 = vld [vmem:[%s3 + $0xf8] sm:$0xff]
    %v881 = vld [vmem:[%s3 + $0x100] sm:$0xff]
    %v882 = vld [vmem:[%s3 + $0x108] sm:$0xff]
    %v883 = vld [vmem:[%s3 + $0x110] sm:$0xff]
    %v884 = vld [vmem:[%s3 + $0x118] sm:$0xff]
    %v885 = vld [vmem:[%s3 + $0x120] sm:$0xff]
    %v886 = vld [vmem:[%s3 + $0x128] sm:$0xff]
    %v887 = vld [vmem:[%s3 + $0x130] sm:$0xff]
    %v888 = vld [vmem:[%s3 + $0x138] sm:$0xff]
    %v889 = vld [vmem:[%s3 + $0x140] sm:$0xff]
    %v890 = vld [vmem:[%s3 + $0x148] sm:$0xff]
    %v891 = vld [vmem:[%s3 + $0x150] sm:$0xff]
    %v892 = vld [vmem:[%s3 + $0x158] sm:$0xff]
    %v893 = vld [vmem:[%s3 + $0x160] sm:$0xff]
    %v894 = vld [vmem:[%s3 + $0x168] sm:$0xff]
    %v895 = vld [vmem:[%s3 + $0x170] sm:$0xff]
    %v896 = vld [vmem:[%s3 + $0x178] sm:$0xff]
    %v897 = vld [vmem:[%s3 + $0x180] sm:$0xff]
    %v898 = vld [vmem:[%s3 + $0x188] sm:$0xff]
    %v899 = vld [vmem:[%s3 + $0x190] sm:$0xff]
    %v900 = vld [vmem:[%s3 + $0x198] sm:$0xff]
    %v901 = vld [vmem:[%s3 + $0x1a0] sm:$0xff]
    %v902 = vld [vmem:[%s3 + $0x1a8] sm:$0xff]
    %v903 = vld [vmem:[%s3 + $0x1b0] sm:$0xff]
    %v904 = vld [vmem:[%s3 + $0x1b8] sm:$0xff]
    %v905 = vld [vmem:[%s3 + $0x1c0] sm:$0xff]
    %v906 = vld [vmem:[%s3 + $0x1c8] sm:$0xff]
    %v907 = vld [vmem:[%s3 + $0x1d0] sm:$0xff]
    %v908 = vld [vmem:[%s3 + $0x1d8] sm:$0xff]
    %v909 = vld [vmem:[%s3 + $0x1e0] sm:$0xff]
    %v910 = vld [vmem:[%s3 + $0x1e8] sm:$0xff]
    %v911 = vld [vmem:[%s3 + $0x1f0] sm:$0xff]
    %v912 = vld [vmem:[%s3 + $0x1f8] sm:$0xff]
    %913 = vmatprep.subr.mxu0 %v850
    %914 = vmatpush1.msra.mxu0 %v849
    %915 = vmatprep.subr.mxu0 %v854
    %916 = vmatpush1.msra.mxu0 %v853
    %917 = vmatprep.subr.mxu0 %v858
    %918 = vmatpush1.msra.mxu0 %v857
    %919 = vmatprep.subr.mxu0 %v862
    %920 = vmatpush1.msra.mxu0 %v861
    %921 = vmatprep.subr.mxu0 %v866
    %922 = vmatpush1.msra.mxu0 %v865
    %923 = vmatprep.subr.mxu0 %v870
    %924 = vmatpush1.msra.mxu0 %v869
    %925 = vmatprep.subr.mxu0 %v874
    %926 = vmatpush1.msra.mxu0 %v873
    %927 = vmatprep.subr.mxu0 %v878
    %928 = vmatpush1.msra.mxu0 %v877
    %929 = vmatprep.subr.mxu0 %v882
    %930 = vmatpush1.msra.mxu0 %v881
    %931 = vmatprep.subr.mxu0 %v886
    %932 = vmatpush1.msra.mxu0 %v885
    %933 = vmatprep.subr.mxu0 %v890
    %934 = vmatpush1.msra.mxu0 %v889
    %935 = vmatprep.subr.mxu0 %v894
    %936 = vmatpush1.msra.mxu0 %v893
    %937 = vmatprep.subr.mxu0 %v898
    %938 = vmatpush1.msra.mxu0 %v897
    %939 = vmatprep.subr.mxu0 %v902
    %940 = vmatpush1.msra.mxu0 %v901
    %941 = vmatprep.subr.mxu0 %v906
    %942 = vmatpush1.msra.mxu0 %v905
    %943 = vmatprep.subr.mxu0 %v910
    %944 = vmatpush1.msra.mxu0 %v909
    %945 = vmatprep.subr.mxu0 0.0
    %946 = vmatpush1.msra.mxu0 0.0
    %947 = vmatprep.subr.mxu0 0.0
    %948 = vmatpush1.msra.mxu0 0.0
    %949 = vmatprep.subr.mxu0 0.0
    %950 = vmatpush1.msra.mxu0 0.0
    %951 = vmatprep.subr.mxu0 0.0
    %952 = vmatpush1.msra.mxu0 0.0
    %953 = vmatprep.subr.mxu0 0.0
    %954 = vmatpush1.msra.mxu0 0.0
    %955 = vmatprep.subr.mxu0 0.0
    %956 = vmatpush1.msra.mxu0 0.0
    %957 = vmatprep.subr.mxu0 0.0
    %958 = vmatpush1.msra.mxu0 0.0
    %959 = vmatprep.subr.mxu0 0.0
    %960 = vmatpush1.msra.mxu0 0.0
    %961 = vmatprep.subr.mxu0 0.0
    %962 = vmatpush1.msra.mxu0 0.0
    %963 = vmatprep.subr.mxu0 0.0
    %964 = vmatpush1.msra.mxu0 0.0
    %965 = vmatprep.subr.mxu0 0.0
    %966 = vmatpush1.msra.mxu0 0.0
    %967 = vmatprep.subr.mxu0 0.0
    %968 = vmatpush1.msra.mxu0 0.0
    %969 = vmatprep.subr.mxu0 0.0
    %970 = vmatpush1.msra.mxu0 0.0
    %971 = vmatprep.subr.mxu0 0.0
    %972 = vmatpush1.msra.mxu0 0.0
    %973 = vmatprep.subr.mxu0 0.0
    %974 = vmatpush1.msra.mxu0 0.0
    %975 = vmatprep.subr.mxu0 0.0
    %976 = vmatpush1.msra.mxu0 0.0
    %977 = vmatprep.mubr.f32.mxu0 0.0
    %978 = vmatmul.mubr.f32.gmra.mrb[0].mxu0 %v848
    %v979 = vpop.f32.mrb[0].mxu0
    %v980 = vadd.f32 0.0, %v979
    %v981 = vpop.f32.mrb[0].mxu0
    %v982 = vadd.f32 0.0, %v981
    %983 = vdwg.mxu0
    %984 = vmatprep.subr.mxu0 %v852
    %985 = vmatpush1.msra.mxu0 %v851
    %986 = vmatprep.subr.mxu0 %v856
    %987 = vmatpush1.msra.mxu0 %v855
    %988 = vmatprep.subr.mxu0 %v860
    %989 = vmatpush1.msra.mxu0 %v859
    %990 = vmatprep.subr.mxu0 %v864
    %991 = vmatpush1.msra.mxu0 %v863
    %992 = vmatprep.subr.mxu0 %v868
    %993 = vmatpush1.msra.mxu0 %v867
    %994 = vmatprep.subr.mxu0 %v872
    %995 = vmatpush1.msra.mxu0 %v871
    %996 = vmatprep.subr.mxu0 %v876
    %997 = vmatpush1.msra.mxu0 %v875
    %998 = vmatprep.subr.mxu0 %v880
    %999 = vmatpush1.msra.mxu0 %v879
    %1000 = vmatprep.subr.mxu0 %v884
    %1001 = vmatpush1.msra.mxu0 %v883
    %1002 = vmatprep.subr.mxu0 %v888
    %1003 = vmatpush1.msra.mxu0 %v887
    %1004 = vmatprep.subr.mxu0 %v892
    %1005 = vmatpush1.msra.mxu0 %v891
    %1006 = vmatprep.subr.mxu0 %v896
    %1007 = vmatpush1.msra.mxu0 %v895
    %1008 = vmatprep.subr.mxu0 %v900
    %1009 = vmatpush1.msra.mxu0 %v899
    %1010 = vmatprep.subr.mxu0 %v904
    %1011 = vmatpush1.msra.mxu0 %v903
    %1012 = vmatprep.subr.mxu0 %v908
    %1013 = vmatpush1.msra.mxu0 %v907
    %1014 = vmatprep.subr.mxu0 %v912
    %1015 = vmatpush1.msra.mxu0 %v911
    %1016 = vmatprep.subr.mxu0 0.0
    %1017 = vmatpush1.msra.mxu0 0.0
    %1018 = vmatprep.subr.mxu0 0.0
    %1019 = vmatpush1.msra.mxu0 0.0
    %1020 = vmatprep.subr.mxu0 0.0
    %1021 = vmatpush1.msra.mxu0 0.0
    %1022 = vmatprep.subr.mxu0 0.0
    %1023 = vmatpush1.msra.mxu0 0.0
    %1024 = vmatprep.subr.mxu0 0.0
    %1025 = vmatpush1.msra.mxu0 0.0
    %1026 = vmatprep.subr.mxu0 0.0
    %1027 = vmatpush1.msra.mxu0 0.0
    %1028 = vmatprep.subr.mxu0 0.0
    %1029 = vmatpush1.msra.mxu0 0.0
    %1030 = vmatprep.subr.mxu0 0.0
    %1031 = vmatpush1.msra.mxu0 0.0
    %1032 = vmatprep.subr.mxu0 0.0
    %1033 = vmatpush1.msra.mxu0 0.0
    %1034 = vmatprep.subr.mxu0 0.0
    %1035 = vmatpush1.msra.mxu0 0.0
    %1036 = vmatprep.subr.mxu0 0.0
    %1037 = vmatpush1.msra.mxu0 0.0
    %1038 = vmatprep.subr.mxu0 0.0
    %1039 = vmatpush1.msra.mxu0 0.0
    %1040 = vmatprep.subr.mxu0 0.0
    %1041 = vmatpush1.msra.mxu0 0.0
    %1042 = vmatprep.subr.mxu0 0.0
    %1043 = vmatpush1.msra.mxu0 0.0
    %1044 = vmatprep.subr.mxu0 0.0
    %1045 = vmatpush1.msra.mxu0 0.0
    %1046 = vmatprep.subr.mxu0 0.0
    %1047 = vmatpush1.msra.mxu0 0.0
    %1048 = vmatprep.mubr.f32.mxu0 0.0
    %1049 = vmatmul.mubr.f32.gmra.mrb[0].mxu0 %v848
    %v1050 = vpop.f32.mrb[0].mxu0
    %v1051 = vadd.f32 0.0, %v1050
    %v1052 = vpop.f32.mrb[0].mxu0
    %v1053 = vadd.f32 0.0, %v1052
    %1054 = vdwg.mxu0
    %v1055 = vadd.f32 %v844, %v980
    %v1056 = vadd.f32 %v845, %v982
    %v1057 = vadd.f32 %v846, %v1051
    %v1058 = vadd.f32 %v847, %v1053
    %v1059 = vxor.u32 %v1055, 2147483648
    %v1060 = vxor.u32 %v1056, 2147483648
    %v1061 = vxor.u32 %v1057, 2147483648
    %v1062 = vxor.u32 %v1058, 2147483648
    %v1063 = vmul.f32 %v1059, 1.442695
    %v1064 = vpow.pop %v1063
    %v1065 = vmul.f32 %v1060, 1.442695
    %v1066 = vpow.pop %v1065
    %v1067 = vmul.f32 %v1061, 1.442695
    %v1068 = vpow.pop %v1067
    %v1069 = vmul.f32 %v1062, 1.442695
    %v1070 = vpow.pop %v1069
    %v1071 = vadd.f32 %v1064, 1.0
    %v1072 = vadd.f32 %v1066, 1.0
    %v1073 = vadd.f32 %v1068, 1.0
    %v1074 = vadd.f32 %v1070, 1.0
    %v1075 = vrcp.pop %v1071
    %v1076 = vmul.f32 1.0, %v1075
    %v1077 = vrcp.pop %v1072
    %v1078 = vmul.f32 1.0, %v1077
    %v1079 = vrcp.pop %v1073
    %v1080 = vmul.f32 1.0, %v1079
    %v1081 = vrcp.pop %v1074
    %v1082 = vmul.f32 1.0, %v1081
    %v1083 = vmul.f32 %v1080, 2.0
    %v1084 = vsub.f32 %v1083, 1.0
    %v1085 = vld [vmem:[#allocation3] sm:$0xff]
    %v1086 = vmul.f32 %v1078, %v1085
    %v1087 = vmul.f32 %v1076, %v1084
    %v1088 = vadd.f32 %v1086, %v1087
    %v1089 = vtanh.pop %v1088
    %v1090 = vmul.f32 %v1082, %v1089
    %s1091 = sadd.s32 %s27, 3
    %v1092 = vstv %s1091
    %vm1093 = vcmp.lt.s32.totalorder %v1092, %v53
    %v1094 = vsel %vm1093, 1, 0
    %1095 = vset.pattern.permute.xlu0 0
    %1096 = vperm.xlu0 %1095, %v1094
    %v1097 = vpop.permute.xlu0 %1096
    %vm1098 = vcmp.eq.s32.totalorder %v1097, 1
    %v1099 = vsel %vm1098, %v1088, %v1085
    %1100 = vst [vmem:[#allocation3] sm:$0xff] %v1099
    %v1101 = vld [vmem:[#allocation2] sm:$0xff]
    %v1102 = vsel %vm1098, %v1090, %v1101
    %1103 = vst [vmem:[#allocation2] sm:$0xff] %v1102
    %v1104 = vsel %vm1098, %v1090, 0.0
    %s1105 = scalar_lea.vmem %s6, 24
    %1106 = vst [vmem:[%s1105] sm:$0xff] %v1104
    %s1107 = scalar_lea.vmem %s2, 128
    %v1108 = vld [vmem:[%s1107] sm:$0xff]
    %v1109 = vld [vmem:[%s1107 + $0x8] sm:$0xff]
    %v1110 = vld [vmem:[%s1107 + $0x10] sm:$0xff]
    %v1111 = vld [vmem:[%s1107 + $0x18] sm:$0xff]
    %v1112 = vld [vmem:[#allocation2] sm:$0xff]
    %v1113 = vld [vmem:[%s3] sm:$0xff]
    %v1114 = vld [vmem:[%s3 + $0x8] sm:$0xff]
    %v1115 = vld [vmem:[%s3 + $0x10] sm:$0xff]
    %v1116 = vld [vmem:[%s3 + $0x18] sm:$0xff]
    %v1117 = vld [vmem:[%s3 + $0x20] sm:$0xff]
    %v1118 = vld [vmem:[%s3 + $0x28] sm:$0xff]
    %v1119 = vld [vmem:[%s3 + $0x30] sm:$0xff]
    %v1120 = vld [vmem:[%s3 + $0x38] sm:$0xff]
    %v1121 = vld [vmem:[%s3 + $0x40] sm:$0xff]
    %v1122 = vld [vmem:[%s3 + $0x48] sm:$0xff]
    %v1123 = vld [vmem:[%s3 + $0x50] sm:$0xff]
    %v1124 = vld [vmem:[%s3 + $0x58] sm:$0xff]
    %v1125 = vld [vmem:[%s3 + $0x60] sm:$0xff]
    %v1126 = vld [vmem:[%s3 + $0x68] sm:$0xff]
    %v1127 = vld [vmem:[%s3 + $0x70] sm:$0xff]
    %v1128 = vld [vmem:[%s3 + $0x78] sm:$0xff]
    %v1129 = vld [vmem:[%s3 + $0x80] sm:$0xff]
    %v1130 = vld [vmem:[%s3 + $0x88] sm:$0xff]
    %v1131 = vld [vmem:[%s3 + $0x90] sm:$0xff]
    %v1132 = vld [vmem:[%s3 + $0x98] sm:$0xff]
    %v1133 = vld [vmem:[%s3 + $0xa0] sm:$0xff]
    %v1134 = vld [vmem:[%s3 + $0xa8] sm:$0xff]
    %v1135 = vld [vmem:[%s3 + $0xb0] sm:$0xff]
    %v1136 = vld [vmem:[%s3 + $0xb8] sm:$0xff]
    %v1137 = vld [vmem:[%s3 + $0xc0] sm:$0xff]
    %v1138 = vld [vmem:[%s3 + $0xc8] sm:$0xff]
    %v1139 = vld [vmem:[%s3 + $0xd0] sm:$0xff]
    %v1140 = vld [vmem:[%s3 + $0xd8] sm:$0xff]
    %v1141 = vld [vmem:[%s3 + $0xe0] sm:$0xff]
    %v1142 = vld [vmem:[%s3 + $0xe8] sm:$0xff]
    %v1143 = vld [vmem:[%s3 + $0xf0] sm:$0xff]
    %v1144 = vld [vmem:[%s3 + $0xf8] sm:$0xff]
    %v1145 = vld [vmem:[%s3 + $0x100] sm:$0xff]
    %v1146 = vld [vmem:[%s3 + $0x108] sm:$0xff]
    %v1147 = vld [vmem:[%s3 + $0x110] sm:$0xff]
    %v1148 = vld [vmem:[%s3 + $0x118] sm:$0xff]
    %v1149 = vld [vmem:[%s3 + $0x120] sm:$0xff]
    %v1150 = vld [vmem:[%s3 + $0x128] sm:$0xff]
    %v1151 = vld [vmem:[%s3 + $0x130] sm:$0xff]
    %v1152 = vld [vmem:[%s3 + $0x138] sm:$0xff]
    %v1153 = vld [vmem:[%s3 + $0x140] sm:$0xff]
    %v1154 = vld [vmem:[%s3 + $0x148] sm:$0xff]
    %v1155 = vld [vmem:[%s3 + $0x150] sm:$0xff]
    %v1156 = vld [vmem:[%s3 + $0x158] sm:$0xff]
    %v1157 = vld [vmem:[%s3 + $0x160] sm:$0xff]
    %v1158 = vld [vmem:[%s3 + $0x168] sm:$0xff]
    %v1159 = vld [vmem:[%s3 + $0x170] sm:$0xff]
    %v1160 = vld [vmem:[%s3 + $0x178] sm:$0xff]
    %v1161 = vld [vmem:[%s3 + $0x180] sm:$0xff]
    %v1162 = vld [vmem:[%s3 + $0x188] sm:$0xff]
    %v1163 = vld [vmem:[%s3 + $0x190] sm:$0xff]
    %v1164 = vld [vmem:[%s3 + $0x198] sm:$0xff]
    %v1165 = vld [vmem:[%s3 + $0x1a0] sm:$0xff]
    %v1166 = vld [vmem:[%s3 + $0x1a8] sm:$0xff]
    %v1167 = vld [vmem:[%s3 + $0x1b0] sm:$0xff]
    %v1168 = vld [vmem:[%s3 + $0x1b8] sm:$0xff]
    %v1169 = vld [vmem:[%s3 + $0x1c0] sm:$0xff]
    %v1170 = vld [vmem:[%s3 + $0x1c8] sm:$0xff]
    %v1171 = vld [vmem:[%s3 + $0x1d0] sm:$0xff]
    %v1172 = vld [vmem:[%s3 + $0x1d8] sm:$0xff]
    %v1173 = vld [vmem:[%s3 + $0x1e0] sm:$0xff]
    %v1174 = vld [vmem:[%s3 + $0x1e8] sm:$0xff]
    %v1175 = vld [vmem:[%s3 + $0x1f0] sm:$0xff]
    %v1176 = vld [vmem:[%s3 + $0x1f8] sm:$0xff]
    %1177 = vmatprep.subr.mxu0 %v1114
    %1178 = vmatpush1.msra.mxu0 %v1113
    %1179 = vmatprep.subr.mxu0 %v1118
    %1180 = vmatpush1.msra.mxu0 %v1117
    %1181 = vmatprep.subr.mxu0 %v1122
    %1182 = vmatpush1.msra.mxu0 %v1121
    %1183 = vmatprep.subr.mxu0 %v1126
    %1184 = vmatpush1.msra.mxu0 %v1125
    %1185 = vmatprep.subr.mxu0 %v1130
    %1186 = vmatpush1.msra.mxu0 %v1129
    %1187 = vmatprep.subr.mxu0 %v1134
    %1188 = vmatpush1.msra.mxu0 %v1133
    %1189 = vmatprep.subr.mxu0 %v1138
    %1190 = vmatpush1.msra.mxu0 %v1137
    %1191 = vmatprep.subr.mxu0 %v1142
    %1192 = vmatpush1.msra.mxu0 %v1141
    %1193 = vmatprep.subr.mxu0 %v1146
    %1194 = vmatpush1.msra.mxu0 %v1145
    %1195 = vmatprep.subr.mxu0 %v1150
    %1196 = vmatpush1.msra.mxu0 %v1149
    %1197 = vmatprep.subr.mxu0 %v1154
    %1198 = vmatpush1.msra.mxu0 %v1153
    %1199 = vmatprep.subr.mxu0 %v1158
    %1200 = vmatpush1.msra.mxu0 %v1157
    %1201 = vmatprep.subr.mxu0 %v1162
    %1202 = vmatpush1.msra.mxu0 %v1161
    %1203 = vmatprep.subr.mxu0 %v1166
    %1204 = vmatpush1.msra.mxu0 %v1165
    %1205 = vmatprep.subr.mxu0 %v1170
    %1206 = vmatpush1.msra.mxu0 %v1169
    %1207 = vmatprep.subr.mxu0 %v1174
    %1208 = vmatpush1.msra.mxu0 %v1173
    %1209 = vmatprep.subr.mxu0 0.0
    %1210 = vmatpush1.msra.mxu0 0.0
    %1211 = vmatprep.subr.mxu0 0.0
    %1212 = vmatpush1.msra.mxu0 0.0
    %1213 = vmatprep.subr.mxu0 0.0
    %1214 = vmatpush1.msra.mxu0 0.0
    %1215 = vmatprep.subr.mxu0 0.0
    %1216 = vmatpush1.msra.mxu0 0.0
    %1217 = vmatprep.subr.mxu0 0.0
    %1218 = vmatpush1.msra.mxu0 0.0
    %1219 = vmatprep.subr.mxu0 0.0
    %1220 = vmatpush1.msra.mxu0 0.0
    %1221 = vmatprep.subr.mxu0 0.0
    %1222 = vmatpush1.msra.mxu0 0.0
    %1223 = vmatprep.subr.mxu0 0.0
    %1224 = vmatpush1.msra.mxu0 0.0
    %1225 = vmatprep.subr.mxu0 0.0
    %1226 = vmatpush1.msra.mxu0 0.0
    %1227 = vmatprep.subr.mxu0 0.0
    %1228 = vmatpush1.msra.mxu0 0.0
    %1229 = vmatprep.subr.mxu0 0.0
    %1230 = vmatpush1.msra.mxu0 0.0
    %1231 = vmatprep.subr.mxu0 0.0
    %1232 = vmatpush1.msra.mxu0 0.0
    %1233 = vmatprep.subr.mxu0 0.0
    %1234 = vmatpush1.msra.mxu0 0.0
    %1235 = vmatprep.subr.mxu0 0.0
    %1236 = vmatpush1.msra.mxu0 0.0
    %1237 = vmatprep.subr.mxu0 0.0
    %1238 = vmatpush1.msra.mxu0 0.0
    %1239 = vmatprep.subr.mxu0 0.0
    %1240 = vmatpush1.msra.mxu0 0.0
    %1241 = vmatprep.mubr.f32.mxu0 0.0
    %1242 = vmatmul.mubr.f32.gmra.mrb[0].mxu0 %v1112
    %v1243 = vpop.f32.mrb[0].mxu0
    %v1244 = vadd.f32 0.0, %v1243
    %v1245 = vpop.f32.mrb[0].mxu0
    %v1246 = vadd.f32 0.0, %v1245
    %1247 = vdwg.mxu0
    %1248 = vmatprep.subr.mxu0 %v1116
    %1249 = vmatpush1.msra.mxu0 %v1115
    %1250 = vmatprep.subr.mxu0 %v1120
    %1251 = vmatpush1.msra.mxu0 %v1119
    %1252 = vmatprep.subr.mxu0 %v1124
    %1253 = vmatpush1.msra.mxu0 %v1123
    %1254 = vmatprep.subr.mxu0 %v1128
    %1255 = vmatpush1.msra.mxu0 %v1127
    %1256 = vmatprep.subr.mxu0 %v1132
    %1257 = vmatpush1.msra.mxu0 %v1131
    %1258 = vmatprep.subr.mxu0 %v1136
    %1259 = vmatpush1.msra.mxu0 %v1135
    %1260 = vmatprep.subr.mxu0 %v1140
    %1261 = vmatpush1.msra.mxu0 %v1139
    %1262 = vmatprep.subr.mxu0 %v1144
    %1263 = vmatpush1.msra.mxu0 %v1143
    %1264 = vmatprep.subr.mxu0 %v1148
    %1265 = vmatpush1.msra.mxu0 %v1147
    %1266 = vmatprep.subr.mxu0 %v1152
    %1267 = vmatpush1.msra.mxu0 %v1151
    %1268 = vmatprep.subr.mxu0 %v1156
    %1269 = vmatpush1.msra.mxu0 %v1155
    %1270 = vmatprep.subr.mxu0 %v1160
    %1271 = vmatpush1.msra.mxu0 %v1159
    %1272 = vmatprep.subr.mxu0 %v1164
    %1273 = vmatpush1.msra.mxu0 %v1163
    %1274 = vmatprep.subr.mxu0 %v1168
    %1275 = vmatpush1.msra.mxu0 %v1167
    %1276 = vmatprep.subr.mxu0 %v1172
    %1277 = vmatpush1.msra.mxu0 %v1171
    %1278 = vmatprep.subr.mxu0 %v1176
    %1279 = vmatpush1.msra.mxu0 %v1175
    %1280 = vmatprep.subr.mxu0 0.0
    %1281 = vmatpush1.msra.mxu0 0.0
    %1282 = vmatprep.subr.mxu0 0.0
    %1283 = vmatpush1.msra.mxu0 0.0
    %1284 = vmatprep.subr.mxu0 0.0
    %1285 = vmatpush1.msra.mxu0 0.0
    %1286 = vmatprep.subr.mxu0 0.0
    %1287 = vmatpush1.msra.mxu0 0.0
    %1288 = vmatprep.subr.mxu0 0.0
    %1289 = vmatpush1.msra.mxu0 0.0
    %1290 = vmatprep.subr.mxu0 0.0
    %1291 = vmatpush1.msra.mxu0 0.0
    %1292 = vmatprep.subr.mxu0 0.0
    %1293 = vmatpush1.msra.mxu0 0.0
    %1294 = vmatprep.subr.mxu0 0.0
    %1295 = vmatpush1.msra.mxu0 0.0
    %1296 = vmatprep.subr.mxu0 0.0
    %1297 = vmatpush1.msra.mxu0 0.0
    %1298 = vmatprep.subr.mxu0 0.0
    %1299 = vmatpush1.msra.mxu0 0.0
    %1300 = vmatprep.subr.mxu0 0.0
    %1301 = vmatpush1.msra.mxu0 0.0
    %1302 = vmatprep.subr.mxu0 0.0
    %1303 = vmatpush1.msra.mxu0 0.0
    %1304 = vmatprep.subr.mxu0 0.0
    %1305 = vmatpush1.msra.mxu0 0.0
    %1306 = vmatprep.subr.mxu0 0.0
    %1307 = vmatpush1.msra.mxu0 0.0
    %1308 = vmatprep.subr.mxu0 0.0
    %1309 = vmatpush1.msra.mxu0 0.0
    %1310 = vmatprep.subr.mxu0 0.0
    %1311 = vmatpush1.msra.mxu0 0.0
    %1312 = vmatprep.mubr.f32.mxu0 0.0
    %1313 = vmatmul.mubr.f32.gmra.mrb[0].mxu0 %v1112
    %v1314 = vpop.f32.mrb[0].mxu0
    %v1315 = vadd.f32 0.0, %v1314
    %v1316 = vpop.f32.mrb[0].mxu0
    %v1317 = vadd.f32 0.0, %v1316
    %1318 = vdwg.mxu0
    %v1319 = vadd.f32 %v1108, %v1244
    %v1320 = vadd.f32 %v1109, %v1246
    %v1321 = vadd.f32 %v1110, %v1315
    %v1322 = vadd.f32 %v1111, %v1317
    %v1323 = vxor.u32 %v1319, 2147483648
    %v1324 = vxor.u32 %v1320, 2147483648
    %v1325 = vxor.u32 %v1321, 2147483648
    %v1326 = vxor.u32 %v1322, 2147483648
    %v1327 = vmul.f32 %v1323, 1.442695
    %v1328 = vpow.pop %v1327
    %v1329 = vmul.f32 %v1324, 1.442695
    %v1330 = vpow.pop %v1329
    %v1331 = vmul.f32 %v1325, 1.442695
    %v1332 = vpow.pop %v1331
    %v1333 = vmul.f32 %v1326, 1.442695
    %v1334 = vpow.pop %v1333
    %v1335 = vadd.f32 %v1328, 1.0
    %v1336 = vadd.f32 %v1330, 1.0
    %v1337 = vadd.f32 %v1332, 1.0
    %v1338 = vadd.f32 %v1334, 1.0
    %v1339 = vrcp.pop %v1335
    %v1340 = vmul.f32 1.0, %v1339
    %v1341 = vrcp.pop %v1336
    %v1342 = vmul.f32 1.0, %v1341
    %v1343 = vrcp.pop %v1337
    %v1344 = vmul.f32 1.0, %v1343
    %v1345 = vrcp.pop %v1338
    %v1346 = vmul.f32 1.0, %v1345
    %v1347 = vmul.f32 %v1344, 2.0
    %v1348 = vsub.f32 %v1347, 1.0
    %v1349 = vld [vmem:[#allocation3] sm:$0xff]
    %v1350 = vmul.f32 %v1342, %v1349
    %v1351 = vmul.f32 %v1340, %v1348
    %v1352 = vadd.f32 %v1350, %v1351
    %v1353 = vtanh.pop %v1352
    %v1354 = vmul.f32 %v1346, %v1353
    %s1355 = sadd.s32 %s27, 4
    %v1356 = vstv %s1355
    %vm1357 = vcmp.lt.s32.totalorder %v1356, %v53
    %v1358 = vsel %vm1357, 1, 0
    %1359 = vset.pattern.permute.xlu0 0
    %1360 = vperm.xlu0 %1359, %v1358
    %v1361 = vpop.permute.xlu0 %1360
    %vm1362 = vcmp.eq.s32.totalorder %v1361, 1
    %v1363 = vsel %vm1362, %v1352, %v1349
    %1364 = vst [vmem:[#allocation3] sm:$0xff] %v1363
    %v1365 = vld [vmem:[#allocation2] sm:$0xff]
    %v1366 = vsel %vm1362, %v1354, %v1365
    %1367 = vst [vmem:[#allocation2] sm:$0xff] %v1366
    %v1368 = vsel %vm1362, %v1354, 0.0
    %s1369 = scalar_lea.vmem %s6, 32
    %1370 = vst [vmem:[%s1369] sm:$0xff] %v1368
    %s1371 = scalar_lea.vmem %s2, 160
    %v1372 = vld [vmem:[%s1371] sm:$0xff]
    %v1373 = vld [vmem:[%s1371 + $0x8] sm:$0xff]
    %v1374 = vld [vmem:[%s1371 + $0x10] sm:$0xff]
    %v1375 = vld [vmem:[%s1371 + $0x18] sm:$0xff]
    %v1376 = vld [vmem:[#allocation2] sm:$0xff]
    %v1377 = vld [vmem:[%s3] sm:$0xff]
    %v1378 = vld [vmem:[%s3 + $0x8] sm:$0xff]
    %v1379 = vld [vmem:[%s3 + $0x10] sm:$0xff]
    %v1380 = vld [vmem:[%s3 + $0x18] sm:$0xff]
    %v1381 = vld [vmem:[%s3 + $0x20] sm:$0xff]
    %v1382 = vld [vmem:[%s3 + $0x28] sm:$0xff]
    %v1383 = vld [vmem:[%s3 + $0x30] sm:$0xff]
    %v1384 = vld [vmem:[%s3 + $0x38] sm:$0xff]
    %v1385 = vld [vmem:[%s3 + $0x40] sm:$0xff]
    %v1386 = vld [vmem:[%s3 + $0x48] sm:$0xff]
    %v1387 = vld [vmem:[%s3 + $0x50] sm:$0xff]
    %v1388 = vld [vmem:[%s3 + $0x58] sm:$0xff]
    %v1389 = vld [vmem:[%s3 + $0x60] sm:$0xff]
    %v1390 = vld [vmem:[%s3 + $0x68] sm:$0xff]
    %v1391 = vld [vmem:[%s3 + $0x70] sm:$0xff]
    %v1392 = vld [vmem:[%s3 + $0x78] sm:$0xff]
    %v1393 = vld [vmem:[%s3 + $0x80] sm:$0xff]
    %v1394 = vld [vmem:[%s3 + $0x88] sm:$0xff]
    %v1395 = vld [vmem:[%s3 + $0x90] sm:$0xff]
    %v1396 = vld [vmem:[%s3 + $0x98] sm:$0xff]
    %v1397 = vld [vmem:[%s3 + $0xa0] sm:$0xff]
    %v1398 = vld [vmem:[%s3 + $0xa8] sm:$0xff]
    %v1399 = vld [vmem:[%s3 + $0xb0] sm:$0xff]
    %v1400 = vld [vmem:[%s3 + $0xb8] sm:$0xff]
    %v1401 = vld [vmem:[%s3 + $0xc0] sm:$0xff]
    %v1402 = vld [vmem:[%s3 + $0xc8] sm:$0xff]
    %v1403 = vld [vmem:[%s3 + $0xd0] sm:$0xff]
    %v1404 = vld [vmem:[%s3 + $0xd8] sm:$0xff]
    %v1405 = vld [vmem:[%s3 + $0xe0] sm:$0xff]
    %v1406 = vld [vmem:[%s3 + $0xe8] sm:$0xff]
    %v1407 = vld [vmem:[%s3 + $0xf0] sm:$0xff]
    %v1408 = vld [vmem:[%s3 + $0xf8] sm:$0xff]
    %v1409 = vld [vmem:[%s3 + $0x100] sm:$0xff]
    %v1410 = vld [vmem:[%s3 + $0x108] sm:$0xff]
    %v1411 = vld [vmem:[%s3 + $0x110] sm:$0xff]
    %v1412 = vld [vmem:[%s3 + $0x118] sm:$0xff]
    %v1413 = vld [vmem:[%s3 + $0x120] sm:$0xff]
    %v1414 = vld [vmem:[%s3 + $0x128] sm:$0xff]
    %v1415 = vld [vmem:[%s3 + $0x130] sm:$0xff]
    %v1416 = vld [vmem:[%s3 + $0x138] sm:$0xff]
    %v1417 = vld [vmem:[%s3 + $0x140] sm:$0xff]
    %v1418 = vld [vmem:[%s3 + $0x148] sm:$0xff]
    %v1419 = vld [vmem:[%s3 + $0x150] sm:$0xff]
    %v1420 = vld [vmem:[%s3 + $0x158] sm:$0xff]
    %v1421 = vld [vmem:[%s3 + $0x160] sm:$0xff]
    %v1422 = vld [vmem:[%s3 + $0x168] sm:$0xff]
    %v1423 = vld [vmem:[%s3 + $0x170] sm:$0xff]
    %v1424 = vld [vmem:[%s3 + $0x178] sm:$0xff]
    %v1425 = vld [vmem:[%s3 + $0x180] sm:$0xff]
    %v1426 = vld [vmem:[%s3 + $0x188] sm:$0xff]
    %v1427 = vld [vmem:[%s3 + $0x190] sm:$0xff]
    %v1428 = vld [vmem:[%s3 + $0x198] sm:$0xff]
    %v1429 = vld [vmem:[%s3 + $0x1a0] sm:$0xff]
    %v1430 = vld [vmem:[%s3 + $0x1a8] sm:$0xff]
    %v1431 = vld [vmem:[%s3 + $0x1b0] sm:$0xff]
    %v1432 = vld [vmem:[%s3 + $0x1b8] sm:$0xff]
    %v1433 = vld [vmem:[%s3 + $0x1c0] sm:$0xff]
    %v1434 = vld [vmem:[%s3 + $0x1c8] sm:$0xff]
    %v1435 = vld [vmem:[%s3 + $0x1d0] sm:$0xff]
    %v1436 = vld [vmem:[%s3 + $0x1d8] sm:$0xff]
    %v1437 = vld [vmem:[%s3 + $0x1e0] sm:$0xff]
    %v1438 = vld [vmem:[%s3 + $0x1e8] sm:$0xff]
    %v1439 = vld [vmem:[%s3 + $0x1f0] sm:$0xff]
    %v1440 = vld [vmem:[%s3 + $0x1f8] sm:$0xff]
    %1441 = vmatprep.subr.mxu0 %v1378
    %1442 = vmatpush1.msra.mxu0 %v1377
    %1443 = vmatprep.subr.mxu0 %v1382
    %1444 = vmatpush1.msra.mxu0 %v1381
    %1445 = vmatprep.subr.mxu0 %v1386
    %1446 = vmatpush1.msra.mxu0 %v1385
    %1447 = vmatprep.subr.mxu0 %v1390
    %1448 = vmatpush1.msra.mxu0 %v1389
    %1449 = vmatprep.subr.mxu0 %v1394
    %1450 = vmatpush1.msra.mxu0 %v1393
    %1451 = vmatprep.subr.mxu0 %v1398
    %1452 = vmatpush1.msra.mxu0 %v1397
    %1453 = vmatprep.subr.mxu0 %v1402
    %1454 = vmatpush1.msra.mxu0 %v1401
    %1455 = vmatprep.subr.mxu0 %v1406
    %1456 = vmatpush1.msra.mxu0 %v1405
    %1457 = vmatprep.subr.mxu0 %v1410
    %1458 = vmatpush1.msra.mxu0 %v1409
    %1459 = vmatprep.subr.mxu0 %v1414
    %1460 = vmatpush1.msra.mxu0 %v1413
    %1461 = vmatprep.subr.mxu0 %v1418
    %1462 = vmatpush1.msra.mxu0 %v1417
    %1463 = vmatprep.subr.mxu0 %v1422
    %1464 = vmatpush1.msra.mxu0 %v1421
    %1465 = vmatprep.subr.mxu0 %v1426
    %1466 = vmatpush1.msra.mxu0 %v1425
    %1467 = vmatprep.subr.mxu0 %v1430
    %1468 = vmatpush1.msra.mxu0 %v1429
    %1469 = vmatprep.subr.mxu0 %v1434
    %1470 = vmatpush1.msra.mxu0 %v1433
    %1471 = vmatprep.subr.mxu0 %v1438
    %1472 = vmatpush1.msra.mxu0 %v1437
    %1473 = vmatprep.subr.mxu0 0.0
    %1474 = vmatpush1.msra.mxu0 0.0
    %1475 = vmatprep.subr.mxu0 0.0
    %1476 = vmatpush1.msra.mxu0 0.0
    %1477 = vmatprep.subr.mxu0 0.0
    %1478 = vmatpush1.msra.mxu0 0.0
    %1479 = vmatprep.subr.mxu0 0.0
    %1480 = vmatpush1.msra.mxu0 0.0
    %1481 = vmatprep.subr.mxu0 0.0
    %1482 = vmatpush1.msra.mxu0 0.0
    %1483 = vmatprep.subr.mxu0 0.0
    %1484 = vmatpush1.msra.mxu0 0.0
    %1485 = vmatprep.subr.mxu0 0.0
    %1486 = vmatpush1.msra.mxu0 0.0
    %1487 = vmatprep.subr.mxu0 0.0
    %1488 = vmatpush1.msra.mxu0 0.0
    %1489 = vmatprep.subr.mxu0 0.0
    %1490 = vmatpush1.msra.mxu0 0.0
    %1491 = vmatprep.subr.mxu0 0.0
    %1492 = vmatpush1.msra.mxu0 0.0
    %1493 = vmatprep.subr.mxu0 0.0
    %1494 = vmatpush1.msra.mxu0 0.0
    %1495 = vmatprep.subr.mxu0 0.0
    %1496 = vmatpush1.msra.mxu0 0.0
    %1497 = vmatprep.subr.mxu0 0.0
    %1498 = vmatpush1.msra.mxu0 0.0
    %1499 = vmatprep.subr.mxu0 0.0
    %1500 = vmatpush1.msra.mxu0 0.0
    %1501 = vmatprep.subr.mxu0 0.0
    %1502 = vmatpush1.msra.mxu0 0.0
    %1503 = vmatprep.subr.mxu0 0.0
    %1504 = vmatpush1.msra.mxu0 0.0
    %1505 = vmatprep.mubr.f32.mxu0 0.0
    %1506 = vmatmul.mubr.f32.gmra.mrb[0].mxu0 %v1376
    %v1507 = vpop.f32.mrb[0].mxu0
    %v1508 = vadd.f32 0.0, %v1507
    %v1509 = vpop.f32.mrb[0].mxu0
    %v1510 = vadd.f32 0.0, %v1509
    %1511 = vdwg.mxu0
    %1512 = vmatprep.subr.mxu0 %v1380
    %1513 = vmatpush1.msra.mxu0 %v1379
    %1514 = vmatprep.subr.mxu0 %v1384
    %1515 = vmatpush1.msra.mxu0 %v1383
    %1516 = vmatprep.subr.mxu0 %v1388
    %1517 = vmatpush1.msra.mxu0 %v1387
    %1518 = vmatprep.subr.mxu0 %v1392
    %1519 = vmatpush1.msra.mxu0 %v1391
    %1520 = vmatprep.subr.mxu0 %v1396
    %1521 = vmatpush1.msra.mxu0 %v1395
    %1522 = vmatprep.subr.mxu0 %v1400
    %1523 = vmatpush1.msra.mxu0 %v1399
    %1524 = vmatprep.subr.mxu0 %v1404
    %1525 = vmatpush1.msra.mxu0 %v1403
    %1526 = vmatprep.subr.mxu0 %v1408
    %1527 = vmatpush1.msra.mxu0 %v1407
    %1528 = vmatprep.subr.mxu0 %v1412
    %1529 = vmatpush1.msra.mxu0 %v1411
    %1530 = vmatprep.subr.mxu0 %v1416
    %1531 = vmatpush1.msra.mxu0 %v1415
    %1532 = vmatprep.subr.mxu0 %v1420
    %1533 = vmatpush1.msra.mxu0 %v1419
    %1534 = vmatprep.subr.mxu0 %v1424
    %1535 = vmatpush1.msra.mxu0 %v1423
    %1536 = vmatprep.subr.mxu0 %v1428
    %1537 = vmatpush1.msra.mxu0 %v1427
    %1538 = vmatprep.subr.mxu0 %v1432
    %1539 = vmatpush1.msra.mxu0 %v1431
    %1540 = vmatprep.subr.mxu0 %v1436
    %1541 = vmatpush1.msra.mxu0 %v1435
    %1542 = vmatprep.subr.mxu0 %v1440
    %1543 = vmatpush1.msra.mxu0 %v1439
    %1544 = vmatprep.subr.mxu0 0.0
    %1545 = vmatpush1.msra.mxu0 0.0
    %1546 = vmatprep.subr.mxu0 0.0
    %1547 = vmatpush1.msra.mxu0 0.0
    %1548 = vmatprep.subr.mxu0 0.0
    %1549 = vmatpush1.msra.mxu0 0.0
    %1550 = vmatprep.subr.mxu0 0.0
    %1551 = vmatpush1.msra.mxu0 0.0
    %1552 = vmatprep.subr.mxu0 0.0
    %1553 = vmatpush1.msra.mxu0 0.0
    %1554 = vmatprep.subr.mxu0 0.0
    %1555 = vmatpush1.msra.mxu0 0.0
    %1556 = vmatprep.subr.mxu0 0.0
    %1557 = vmatpush1.msra.mxu0 0.0
    %1558 = vmatprep.subr.mxu0 0.0
    %1559 = vmatpush1.msra.mxu0 0.0
    %1560 = vmatprep.subr.mxu0 0.0
    %1561 = vmatpush1.msra.mxu0 0.0
    %1562 = vmatprep.subr.mxu0 0.0
    %1563 = vmatpush1.msra.mxu0 0.0
    %1564 = vmatprep.subr.mxu0 0.0
    %1565 = vmatpush1.msra.mxu0 0.0
    %1566 = vmatprep.subr.mxu0 0.0
    %1567 = vmatpush1.msra.mxu0 0.0
    %1568 = vmatprep.subr.mxu0 0.0
    %1569 = vmatpush1.msra.mxu0 0.0
    %1570 = vmatprep.subr.mxu0 0.0
    %1571 = vmatpush1.msra.mxu0 0.0
    %1572 = vmatprep.subr.mxu0 0.0
    %1573 = vmatpush1.msra.mxu0 0.0
    %1574 = vmatprep.subr.mxu0 0.0
    %1575 = vmatpush1.msra.mxu0 0.0
    %1576 = vmatprep.mubr.f32.mxu0 0.0
    %1577 = vmatmul.mubr.f32.gmra.mrb[0].mxu0 %v1376
    %v1578 = vpop.f32.mrb[0].mxu0
    %v1579 = vadd.f32 0.0, %v1578
    %v1580 = vpop.f32.mrb[0].mxu0
    %v1581 = vadd.f32 0.0, %v1580
    %1582 = vdwg.mxu0
    %v1583 = vadd.f32 %v1372, %v1508
    %v1584 = vadd.f32 %v1373, %v1510
    %v1585 = vadd.f32 %v1374, %v1579
    %v1586 = vadd.f32 %v1375, %v1581
    %v1587 = vxor.u32 %v1583, 2147483648
    %v1588 = vxor.u32 %v1584, 2147483648
    %v1589 = vxor.u32 %v1585, 2147483648
    %v1590 = vxor.u32 %v1586, 2147483648
    %v1591 = vmul.f32 %v1587, 1.442695
    %v1592 = vpow.pop %v1591
    %v1593 = vmul.f32 %v1588, 1.442695
    %v1594 = vpow.pop %v1593
    %v1595 = vmul.f32 %v1589, 1.442695
    %v1596 = vpow.pop %v1595
    %v1597 = vmul.f32 %v1590, 1.442695
    %v1598 = vpow.pop %v1597
    %v1599 = vadd.f32 %v1592, 1.0
    %v1600 = vadd.f32 %v1594, 1.0
    %v1601 = vadd.f32 %v1596, 1.0
    %v1602 = vadd.f32 %v1598, 1.0
    %v1603 = vrcp.pop %v1599
    %v1604 = vmul.f32 1.0, %v1603
    %v1605 = vrcp.pop %v1600
    %v1606 = vmul.f32 1.0, %v1605
    %v1607 = vrcp.pop %v1601
    %v1608 = vmul.f32 1.0, %v1607
    %v1609 = vrcp.pop %v1602
    %v1610 = vmul.f32 1.0, %v1609
    %v1611 = vmul.f32 %v1608, 2.0
    %v1612 = vsub.f32 %v1611, 1.0
    %v1613 = vld [vmem:[#allocation3] sm:$0xff]
    %v1614 = vmul.f32 %v1606, %v1613
    %v1615 = vmul.f32 %v1604, %v1612
    %v1616 = vadd.f32 %v1614, %v1615
    %v1617 = vtanh.pop %v1616
    %v1618 = vmul.f32 %v1610, %v1617
    %s1619 = sadd.s32 %s27, 5
    %v1620 = vstv %s1619
    %vm1621 = vcmp.lt.s32.totalorder %v1620, %v53
    %v1622 = vsel %vm1621, 1, 0
    %1623 = vset.pattern.permute.xlu0 0
    %1624 = vperm.xlu0 %1623, %v1622
    %v1625 = vpop.permute.xlu0 %1624
    %vm1626 = vcmp.eq.s32.totalorder %v1625, 1
    %v1627 = vsel %vm1626, %v1616, %v1613
    %1628 = vst [vmem:[#allocation3] sm:$0xff] %v1627
    %v1629 = vld [vmem:[#allocation2] sm:$0xff]
    %v1630 = vsel %vm1626, %v1618, %v1629
    %1631 = vst [vmem:[#allocation2] sm:$0xff] %v1630
    %v1632 = vsel %vm1626, %v1618, 0.0
    %s1633 = scalar_lea.vmem %s6, 40
    %1634 = vst [vmem:[%s1633] sm:$0xff] %v1632
    %s1635 = scalar_lea.vmem %s2, 192
    %v1636 = vld [vmem:[%s1635] sm:$0xff]
    %v1637 = vld [vmem:[%s1635 + $0x8] sm:$0xff]
    %v1638 = vld [vmem:[%s1635 + $0x10] sm:$0xff]
    %v1639 = vld [vmem:[%s1635 + $0x18] sm:$0xff]
    %v1640 = vld [vmem:[#allocation2] sm:$0xff]
    %v1641 = vld [vmem:[%s3] sm:$0xff]
    %v1642 = vld [vmem:[%s3 + $0x8] sm:$0xff]
    %v1643 = vld [vmem:[%s3 + $0x10] sm:$0xff]
    %v1644 = vld [vmem:[%s3 + $0x18] sm:$0xff]
    %v1645 = vld [vmem:[%s3 + $0x20] sm:$0xff]
    %v1646 = vld [vmem:[%s3 + $0x28] sm:$0xff]
    %v1647 = vld [vmem:[%s3 + $0x30] sm:$0xff]
    %v1648 = vld [vmem:[%s3 + $0x38] sm:$0xff]
    %v1649 = vld [vmem:[%s3 + $0x40] sm:$0xff]
    %v1650 = vld [vmem:[%s3 + $0x48] sm:$0xff]
    %v1651 = vld [vmem:[%s3 + $0x50] sm:$0xff]
    %v1652 = vld [vmem:[%s3 + $0x58] sm:$0xff]
    %v1653 = vld [vmem:[%s3 + $0x60] sm:$0xff]
    %v1654 = vld [vmem:[%s3 + $0x68] sm:$0xff]
    %v1655 = vld [vmem:[%s3 + $0x70] sm:$0xff]
    %v1656 = vld [vmem:[%s3 + $0x78] sm:$0xff]
    %v1657 = vld [vmem:[%s3 + $0x80] sm:$0xff]
    %v1658 = vld [vmem:[%s3 + $0x88] sm:$0xff]
    %v1659 = vld [vmem:[%s3 + $0x90] sm:$0xff]
    %v1660 = vld [vmem:[%s3 + $0x98] sm:$0xff]
    %v1661 = vld [vmem:[%s3 + $0xa0] sm:$0xff]
    %v1662 = vld [vmem:[%s3 + $0xa8] sm:$0xff]
    %v1663 = vld [vmem:[%s3 + $0xb0] sm:$0xff]
    %v1664 = vld [vmem:[%s3 + $0xb8] sm:$0xff]
    %v1665 = vld [vmem:[%s3 + $0xc0] sm:$0xff]
    %v1666 = vld [vmem:[%s3 + $0xc8] sm:$0xff]
    %v1667 = vld [vmem:[%s3 + $0xd0] sm:$0xff]
    %v1668 = vld [vmem:[%s3 + $0xd8] sm:$0xff]
    %v1669 = vld [vmem:[%s3 + $0xe0] sm:$0xff]
    %v1670 = vld [vmem:[%s3 + $0xe8] sm:$0xff]
    %v1671 = vld [vmem:[%s3 + $0xf0] sm:$0xff]
    %v1672 = vld [vmem:[%s3 + $0xf8] sm:$0xff]
    %v1673 = vld [vmem:[%s3 + $0x100] sm:$0xff]
    %v1674 = vld [vmem:[%s3 + $0x108] sm:$0xff]
    %v1675 = vld [vmem:[%s3 + $0x110] sm:$0xff]
    %v1676 = vld [vmem:[%s3 + $0x118] sm:$0xff]
    %v1677 = vld [vmem:[%s3 + $0x120] sm:$0xff]
    %v1678 = vld [vmem:[%s3 + $0x128] sm:$0xff]
    %v1679 = vld [vmem:[%s3 + $0x130] sm:$0xff]
    %v1680 = vld [vmem:[%s3 + $0x138] sm:$0xff]
    %v1681 = vld [vmem:[%s3 + $0x140] sm:$0xff]
    %v1682 = vld [vmem:[%s3 + $0x148] sm:$0xff]
    %v1683 = vld [vmem:[%s3 + $0x150] sm:$0xff]
    %v1684 = vld [vmem:[%s3 + $0x158] sm:$0xff]
    %v1685 = vld [vmem:[%s3 + $0x160] sm:$0xff]
    %v1686 = vld [vmem:[%s3 + $0x168] sm:$0xff]
    %v1687 = vld [vmem:[%s3 + $0x170] sm:$0xff]
    %v1688 = vld [vmem:[%s3 + $0x178] sm:$0xff]
    %v1689 = vld [vmem:[%s3 + $0x180] sm:$0xff]
    %v1690 = vld [vmem:[%s3 + $0x188] sm:$0xff]
    %v1691 = vld [vmem:[%s3 + $0x190] sm:$0xff]
    %v1692 = vld [vmem:[%s3 + $0x198] sm:$0xff]
    %v1693 = vld [vmem:[%s3 + $0x1a0] sm:$0xff]
    %v1694 = vld [vmem:[%s3 + $0x1a8] sm:$0xff]
    %v1695 = vld [vmem:[%s3 + $0x1b0] sm:$0xff]
    %v1696 = vld [vmem:[%s3 + $0x1b8] sm:$0xff]
    %v1697 = vld [vmem:[%s3 + $0x1c0] sm:$0xff]
    %v1698 = vld [vmem:[%s3 + $0x1c8] sm:$0xff]
    %v1699 = vld [vmem:[%s3 + $0x1d0] sm:$0xff]
    %v1700 = vld [vmem:[%s3 + $0x1d8] sm:$0xff]
    %v1701 = vld [vmem:[%s3 + $0x1e0] sm:$0xff]
    %v1702 = vld [vmem:[%s3 + $0x1e8] sm:$0xff]
    %v1703 = vld [vmem:[%s3 + $0x1f0] sm:$0xff]
    %v1704 = vld [vmem:[%s3 + $0x1f8] sm:$0xff]
    %1705 = vmatprep.subr.mxu0 %v1642
    %1706 = vmatpush1.msra.mxu0 %v1641
    %1707 = vmatprep.subr.mxu0 %v1646
    %1708 = vmatpush1.msra.mxu0 %v1645
    %1709 = vmatprep.subr.mxu0 %v1650
    %1710 = vmatpush1.msra.mxu0 %v1649
    %1711 = vmatprep.subr.mxu0 %v1654
    %1712 = vmatpush1.msra.mxu0 %v1653
    %1713 = vmatprep.subr.mxu0 %v1658
    %1714 = vmatpush1.msra.mxu0 %v1657
    %1715 = vmatprep.subr.mxu0 %v1662
    %1716 = vmatpush1.msra.mxu0 %v1661
    %1717 = vmatprep.subr.mxu0 %v1666
    %1718 = vmatpush1.msra.mxu0 %v1665
    %1719 = vmatprep.subr.mxu0 %v1670
    %1720 = vmatpush1.msra.mxu0 %v1669
    %1721 = vmatprep.subr.mxu0 %v1674
    %1722 = vmatpush1.msra.mxu0 %v1673
    %1723 = vmatprep.subr.mxu0 %v1678
    %1724 = vmatpush1.msra.mxu0 %v1677
    %1725 = vmatprep.subr.mxu0 %v1682
    %1726 = vmatpush1.msra.mxu0 %v1681
    %1727 = vmatprep.subr.mxu0 %v1686
    %1728 = vmatpush1.msra.mxu0 %v1685
    %1729 = vmatprep.subr.mxu0 %v1690
    %1730 = vmatpush1.msra.mxu0 %v1689
    %1731 = vmatprep.subr.mxu0 %v1694
    %1732 = vmatpush1.msra.mxu0 %v1693
    %1733 = vmatprep.subr.mxu0 %v1698
    %1734 = vmatpush1.msra.mxu0 %v1697
    %1735 = vmatprep.subr.mxu0 %v1702
    %1736 = vmatpush1.msra.mxu0 %v1701
    %1737 = vmatprep.subr.mxu0 0.0
    %1738 = vmatpush1.msra.mxu0 0.0
    %1739 = vmatprep.subr.mxu0 0.0
    %1740 = vmatpush1.msra.mxu0 0.0
    %1741 = vmatprep.subr.mxu0 0.0
    %1742 = vmatpush1.msra.mxu0 0.0
    %1743 = vmatprep.subr.mxu0 0.0
    %1744 = vmatpush1.msra.mxu0 0.0
    %1745 = vmatprep.subr.mxu0 0.0
    %1746 = vmatpush1.msra.mxu0 0.0
    %1747 = vmatprep.subr.mxu0 0.0
    %1748 = vmatpush1.msra.mxu0 0.0
    %1749 = vmatprep.subr.mxu0 0.0
    %1750 = vmatpush1.msra.mxu0 0.0
    %1751 = vmatprep.subr.mxu0 0.0
    %1752 = vmatpush1.msra.mxu0 0.0
    %1753 = vmatprep.subr.mxu0 0.0
    %1754 = vmatpush1.msra.mxu0 0.0
    %1755 = vmatprep.subr.mxu0 0.0
    %1756 = vmatpush1.msra.mxu0 0.0
    %1757 = vmatprep.subr.mxu0 0.0
    %1758 = vmatpush1.msra.mxu0 0.0
    %1759 = vmatprep.subr.mxu0 0.0
    %1760 = vmatpush1.msra.mxu0 0.0
    %1761 = vmatprep.subr.mxu0 0.0
    %1762 = vmatpush1.msra.mxu0 0.0
    %1763 = vmatprep.subr.mxu0 0.0
    %1764 = vmatpush1.msra.mxu0 0.0
    %1765 = vmatprep.subr.mxu0 0.0
    %1766 = vmatpush1.msra.mxu0 0.0
    %1767 = vmatprep.subr.mxu0 0.0
    %1768 = vmatpush1.msra.mxu0 0.0
    %1769 = vmatprep.mubr.f32.mxu0 0.0
    %1770 = vmatmul.mubr.f32.gmra.mrb[0].mxu0 %v1640
    %v1771 = vpop.f32.mrb[0].mxu0
    %v1772 = vadd.f32 0.0, %v1771
    %v1773 = vpop.f32.mrb[0].mxu0
    %v1774 = vadd.f32 0.0, %v1773
    %1775 = vdwg.mxu0
    %1776 = vmatprep.subr.mxu0 %v1644
    %1777 = vmatpush1.msra.mxu0 %v1643
    %1778 = vmatprep.subr.mxu0 %v1648
    %1779 = vmatpush1.msra.mxu0 %v1647
    %1780 = vmatprep.subr.mxu0 %v1652
    %1781 = vmatpush1.msra.mxu0 %v1651
    %1782 = vmatprep.subr.mxu0 %v1656
    %1783 = vmatpush1.msra.mxu0 %v1655
    %1784 = vmatprep.subr.mxu0 %v1660
    %1785 = vmatpush1.msra.mxu0 %v1659
    %1786 = vmatprep.subr.mxu0 %v1664
    %1787 = vmatpush1.msra.mxu0 %v1663
    %1788 = vmatprep.subr.mxu0 %v1668
    %1789 = vmatpush1.msra.mxu0 %v1667
    %1790 = vmatprep.subr.mxu0 %v1672
    %1791 = vmatpush1.msra.mxu0 %v1671
    %1792 = vmatprep.subr.mxu0 %v1676
    %1793 = vmatpush1.msra.mxu0 %v1675
    %1794 = vmatprep.subr.mxu0 %v1680
    %1795 = vmatpush1.msra.mxu0 %v1679
    %1796 = vmatprep.subr.mxu0 %v1684
    %1797 = vmatpush1.msra.mxu0 %v1683
    %1798 = vmatprep.subr.mxu0 %v1688
    %1799 = vmatpush1.msra.mxu0 %v1687
    %1800 = vmatprep.subr.mxu0 %v1692
    %1801 = vmatpush1.msra.mxu0 %v1691
    %1802 = vmatprep.subr.mxu0 %v1696
    %1803 = vmatpush1.msra.mxu0 %v1695
    %1804 = vmatprep.subr.mxu0 %v1700
    %1805 = vmatpush1.msra.mxu0 %v1699
    %1806 = vmatprep.subr.mxu0 %v1704
    %1807 = vmatpush1.msra.mxu0 %v1703
    %1808 = vmatprep.subr.mxu0 0.0
    %1809 = vmatpush1.msra.mxu0 0.0
    %1810 = vmatprep.subr.mxu0 0.0
    %1811 = vmatpush1.msra.mxu0 0.0
    %1812 = vmatprep.subr.mxu0 0.0
    %1813 = vmatpush1.msra.mxu0 0.0
    %1814 = vmatprep.subr.mxu0 0.0
    %1815 = vmatpush1.msra.mxu0 0.0
    %1816 = vmatprep.subr.mxu0 0.0
    %1817 = vmatpush1.msra.mxu0 0.0
    %1818 = vmatprep.subr.mxu0 0.0
    %1819 = vmatpush1.msra.mxu0 0.0
    %1820 = vmatprep.subr.mxu0 0.0
    %1821 = vmatpush1.msra.mxu0 0.0
    %1822 = vmatprep.subr.mxu0 0.0
    %1823 = vmatpush1.msra.mxu0 0.0
    %1824 = vmatprep.subr.mxu0 0.0
    %1825 = vmatpush1.msra.mxu0 0.0
    %1826 = vmatprep.subr.mxu0 0.0
    %1827 = vmatpush1.msra.mxu0 0.0
    %1828 = vmatprep.subr.mxu0 0.0
    %1829 = vmatpush1.msra.mxu0 0.0
    %1830 = vmatprep.subr.mxu0 0.0
    %1831 = vmatpush1.msra.mxu0 0.0
    %1832 = vmatprep.subr.mxu0 0.0
    %1833 = vmatpush1.msra.mxu0 0.0
    %1834 = vmatprep.subr.mxu0 0.0
    %1835 = vmatpush1.msra.mxu0 0.0
    %1836 = vmatprep.subr.mxu0 0.0
    %1837 = vmatpush1.msra.mxu0 0.0
    %1838 = vmatprep.subr.mxu0 0.0
    %1839 = vmatpush1.msra.mxu0 0.0
    %1840 = vmatprep.mubr.f32.mxu0 0.0
    %1841 = vmatmul.mubr.f32.gmra.mrb[0].mxu0 %v1640
    %v1842 = vpop.f32.mrb[0].mxu0
    %v1843 = vadd.f32 0.0, %v1842
    %v1844 = vpop.f32.mrb[0].mxu0
    %v1845 = vadd.f32 0.0, %v1844
    %1846 = vdwg.mxu0
    %v1847 = vadd.f32 %v1636, %v1772
    %v1848 = vadd.f32 %v1637, %v1774
    %v1849 = vadd.f32 %v1638, %v1843
    %v1850 = vadd.f32 %v1639, %v1845
    %v1851 = vxor.u32 %v1847, 2147483648
    %v1852 = vxor.u32 %v1848, 2147483648
    %v1853 = vxor.u32 %v1849, 2147483648
    %v1854 = vxor.u32 %v1850, 2147483648
    %v1855 = vmul.f32 %v1851, 1.442695
    %v1856 = vpow.pop %v1855
    %v1857 = vmul.f32 %v1852, 1.442695
    %v1858 = vpow.pop %v1857
    %v1859 = vmul.f32 %v1853, 1.442695
    %v1860 = vpow.pop %v1859
    %v1861 = vmul.f32 %v1854, 1.442695
    %v1862 = vpow.pop %v1861
    %v1863 = vadd.f32 %v1856, 1.0
    %v1864 = vadd.f32 %v1858, 1.0
    %v1865 = vadd.f32 %v1860, 1.0
    %v1866 = vadd.f32 %v1862, 1.0
    %v1867 = vrcp.pop %v1863
    %v1868 = vmul.f32 1.0, %v1867
    %v1869 = vrcp.pop %v1864
    %v1870 = vmul.f32 1.0, %v1869
    %v1871 = vrcp.pop %v1865
    %v1872 = vmul.f32 1.0, %v1871
    %v1873 = vrcp.pop %v1866
    %v1874 = vmul.f32 1.0, %v1873
    %v1875 = vmul.f32 %v1872, 2.0
    %v1876 = vsub.f32 %v1875, 1.0
    %v1877 = vld [vmem:[#allocation3] sm:$0xff]
    %v1878 = vmul.f32 %v1870, %v1877
    %v1879 = vmul.f32 %v1868, %v1876
    %v1880 = vadd.f32 %v1878, %v1879
    %v1881 = vtanh.pop %v1880
    %v1882 = vmul.f32 %v1874, %v1881
    %s1883 = sadd.s32 %s27, 6
    %v1884 = vstv %s1883
    %vm1885 = vcmp.lt.s32.totalorder %v1884, %v53
    %v1886 = vsel %vm1885, 1, 0
    %1887 = vset.pattern.permute.xlu0 0
    %1888 = vperm.xlu0 %1887, %v1886
    %v1889 = vpop.permute.xlu0 %1888
    %vm1890 = vcmp.eq.s32.totalorder %v1889, 1
    %v1891 = vsel %vm1890, %v1880, %v1877
    %1892 = vst [vmem:[#allocation3] sm:$0xff] %v1891
    %v1893 = vld [vmem:[#allocation2] sm:$0xff]
    %v1894 = vsel %vm1890, %v1882, %v1893
    %1895 = vst [vmem:[#allocation2] sm:$0xff] %v1894
    %v1896 = vsel %vm1890, %v1882, 0.0
    %s1897 = scalar_lea.vmem %s6, 48
    %1898 = vst [vmem:[%s1897] sm:$0xff] %v1896
    %s1899 = scalar_lea.vmem %s2, 224
    %v1900 = vld [vmem:[%s1899] sm:$0xff]
    %v1901 = vld [vmem:[%s1899 + $0x8] sm:$0xff]
    %v1902 = vld [vmem:[%s1899 + $0x10] sm:$0xff]
    %v1903 = vld [vmem:[%s1899 + $0x18] sm:$0xff]
    %v1904 = vld [vmem:[#allocation2] sm:$0xff]
    %v1905 = vld [vmem:[%s3] sm:$0xff]
    %v1906 = vld [vmem:[%s3 + $0x8] sm:$0xff]
    %v1907 = vld [vmem:[%s3 + $0x10] sm:$0xff]
    %v1908 = vld [vmem:[%s3 + $0x18] sm:$0xff]
    %v1909 = vld [vmem:[%s3 + $0x20] sm:$0xff]
    %v1910 = vld [vmem:[%s3 + $0x28] sm:$0xff]
    %v1911 = vld [vmem:[%s3 + $0x30] sm:$0xff]
    %v1912 = vld [vmem:[%s3 + $0x38] sm:$0xff]
    %v1913 = vld [vmem:[%s3 + $0x40] sm:$0xff]
    %v1914 = vld [vmem:[%s3 + $0x48] sm:$0xff]
    %v1915 = vld [vmem:[%s3 + $0x50] sm:$0xff]
    %v1916 = vld [vmem:[%s3 + $0x58] sm:$0xff]
    %v1917 = vld [vmem:[%s3 + $0x60] sm:$0xff]
    %v1918 = vld [vmem:[%s3 + $0x68] sm:$0xff]
    %v1919 = vld [vmem:[%s3 + $0x70] sm:$0xff]
    %v1920 = vld [vmem:[%s3 + $0x78] sm:$0xff]
    %v1921 = vld [vmem:[%s3 + $0x80] sm:$0xff]
    %v1922 = vld [vmem:[%s3 + $0x88] sm:$0xff]
    %v1923 = vld [vmem:[%s3 + $0x90] sm:$0xff]
    %v1924 = vld [vmem:[%s3 + $0x98] sm:$0xff]
    %v1925 = vld [vmem:[%s3 + $0xa0] sm:$0xff]
    %v1926 = vld [vmem:[%s3 + $0xa8] sm:$0xff]
    %v1927 = vld [vmem:[%s3 + $0xb0] sm:$0xff]
    %v1928 = vld [vmem:[%s3 + $0xb8] sm:$0xff]
    %v1929 = vld [vmem:[%s3 + $0xc0] sm:$0xff]
    %v1930 = vld [vmem:[%s3 + $0xc8] sm:$0xff]
    %v1931 = vld [vmem:[%s3 + $0xd0] sm:$0xff]
    %v1932 = vld [vmem:[%s3 + $0xd8] sm:$0xff]
    %v1933 = vld [vmem:[%s3 + $0xe0] sm:$0xff]
    %v1934 = vld [vmem:[%s3 + $0xe8] sm:$0xff]
    %v1935 = vld [vmem:[%s3 + $0xf0] sm:$0xff]
    %v1936 = vld [vmem:[%s3 + $0xf8] sm:$0xff]
    %v1937 = vld [vmem:[%s3 + $0x100] sm:$0xff]
    %v1938 = vld [vmem:[%s3 + $0x108] sm:$0xff]
    %v1939 = vld [vmem:[%s3 + $0x110] sm:$0xff]
    %v1940 = vld [vmem:[%s3 + $0x118] sm:$0xff]
    %v1941 = vld [vmem:[%s3 + $0x120] sm:$0xff]
    %v1942 = vld [vmem:[%s3 + $0x128] sm:$0xff]
    %v1943 = vld [vmem:[%s3 + $0x130] sm:$0xff]
    %v1944 = vld [vmem:[%s3 + $0x138] sm:$0xff]
    %v1945 = vld [vmem:[%s3 + $0x140] sm:$0xff]
    %v1946 = vld [vmem:[%s3 + $0x148] sm:$0xff]
    %v1947 = vld [vmem:[%s3 + $0x150] sm:$0xff]
    %v1948 = vld [vmem:[%s3 + $0x158] sm:$0xff]
    %v1949 = vld [vmem:[%s3 + $0x160] sm:$0xff]
    %v1950 = vld [vmem:[%s3 + $0x168] sm:$0xff]
    %v1951 = vld [vmem:[%s3 + $0x170] sm:$0xff]
    %v1952 = vld [vmem:[%s3 + $0x178] sm:$0xff]
    %v1953 = vld [vmem:[%s3 + $0x180] sm:$0xff]
    %v1954 = vld [vmem:[%s3 + $0x188] sm:$0xff]
    %v1955 = vld [vmem:[%s3 + $0x190] sm:$0xff]
    %v1956 = vld [vmem:[%s3 + $0x198] sm:$0xff]
    %v1957 = vld [vmem:[%s3 + $0x1a0] sm:$0xff]
    %v1958 = vld [vmem:[%s3 + $0x1a8] sm:$0xff]
    %v1959 = vld [vmem:[%s3 + $0x1b0] sm:$0xff]
    %v1960 = vld [vmem:[%s3 + $0x1b8] sm:$0xff]
    %v1961 = vld [vmem:[%s3 + $0x1c0] sm:$0xff]
    %v1962 = vld [vmem:[%s3 + $0x1c8] sm:$0xff]
    %v1963 = vld [vmem:[%s3 + $0x1d0] sm:$0xff]
    %v1964 = vld [vmem:[%s3 + $0x1d8] sm:$0xff]
    %v1965 = vld [vmem:[%s3 + $0x1e0] sm:$0xff]
    %v1966 = vld [vmem:[%s3 + $0x1e8] sm:$0xff]
    %v1967 = vld [vmem:[%s3 + $0x1f0] sm:$0xff]
    %v1968 = vld [vmem:[%s3 + $0x1f8] sm:$0xff]
    %1969 = vmatprep.subr.mxu0 %v1906
    %1970 = vmatpush1.msra.mxu0 %v1905
    %1971 = vmatprep.subr.mxu0 %v1910
    %1972 = vmatpush1.msra.mxu0 %v1909
    %1973 = vmatprep.subr.mxu0 %v1914
    %1974 = vmatpush1.msra.mxu0 %v1913
    %1975 = vmatprep.subr.mxu0 %v1918
    %1976 = vmatpush1.msra.mxu0 %v1917
    %1977 = vmatprep.subr.mxu0 %v1922
    %1978 = vmatpush1.msra.mxu0 %v1921
    %1979 = vmatprep.subr.mxu0 %v1926
    %1980 = vmatpush1.msra.mxu0 %v1925
    %1981 = vmatprep.subr.mxu0 %v1930
    %1982 = vmatpush1.msra.mxu0 %v1929
    %1983 = vmatprep.subr.mxu0 %v1934
    %1984 = vmatpush1.msra.mxu0 %v1933
    %1985 = vmatprep.subr.mxu0 %v1938
    %1986 = vmatpush1.msra.mxu0 %v1937
    %1987 = vmatprep.subr.mxu0 %v1942
    %1988 = vmatpush1.msra.mxu0 %v1941
    %1989 = vmatprep.subr.mxu0 %v1946
    %1990 = vmatpush1.msra.mxu0 %v1945
    %1991 = vmatprep.subr.mxu0 %v1950
    %1992 = vmatpush1.msra.mxu0 %v1949
    %1993 = vmatprep.subr.mxu0 %v1954
    %1994 = vmatpush1.msra.mxu0 %v1953
    %1995 = vmatprep.subr.mxu0 %v1958
    %1996 = vmatpush1.msra.mxu0 %v1957
    %1997 = vmatprep.subr.mxu0 %v1962
    %1998 = vmatpush1.msra.mxu0 %v1961
    %1999 = vmatprep.subr.mxu0 %v1966
    %2000 = vmatpush1.msra.mxu0 %v1965
    %2001 = vmatprep.subr.mxu0 0.0
    %2002 = vmatpush1.msra.mxu0 0.0
    %2003 = vmatprep.subr.mxu0 0.0
    %2004 = vmatpush1.msra.mxu0 0.0
    %2005 = vmatprep.subr.mxu0 0.0
    %2006 = vmatpush1.msra.mxu0 0.0
    %2007 = vmatprep.subr.mxu0 0.0
    %2008 = vmatpush1.msra.mxu0 0.0
    %2009 = vmatprep.subr.mxu0 0.0
    %2010 = vmatpush1.msra.mxu0 0.0
    %2011 = vmatprep.subr.mxu0 0.0
    %2012 = vmatpush1.msra.mxu0 0.0
    %2013 = vmatprep.subr.mxu0 0.0
    %2014 = vmatpush1.msra.mxu0 0.0
    %2015 = vmatprep.subr.mxu0 0.0
    %2016 = vmatpush1.msra.mxu0 0.0
    %2017 = vmatprep.subr.mxu0 0.0
    %2018 = vmatpush1.msra.mxu0 0.0
    %2019 = vmatprep.subr.mxu0 0.0
    %2020 = vmatpush1.msra.mxu0 0.0
    %2021 = vmatprep.subr.mxu0 0.0
    %2022 = vmatpush1.msra.mxu0 0.0
    %2023 = vmatprep.subr.mxu0 0.0
    %2024 = vmatpush1.msra.mxu0 0.0
    %2025 = vmatprep.subr.mxu0 0.0
    %2026 = vmatpush1.msra.mxu0 0.0
    %2027 = vmatprep.subr.mxu0 0.0
    %2028 = vmatpush1.msra.mxu0 0.0
    %2029 = vmatprep.subr.mxu0 0.0
    %2030 = vmatpush1.msra.mxu0 0.0
    %2031 = vmatprep.subr.mxu0 0.0
    %2032 = vmatpush1.msra.mxu0 0.0
    %2033 = vmatprep.mubr.f32.mxu0 0.0
    %2034 = vmatmul.mubr.f32.gmra.mrb[0].mxu0 %v1904
    %v2035 = vpop.f32.mrb[0].mxu0
    %v2036 = vadd.f32 0.0, %v2035
    %v2037 = vpop.f32.mrb[0].mxu0
    %v2038 = vadd.f32 0.0, %v2037
    %2039 = vdwg.mxu0
    %2040 = vmatprep.subr.mxu0 %v1908
    %2041 = vmatpush1.msra.mxu0 %v1907
    %2042 = vmatprep.subr.mxu0 %v1912
    %2043 = vmatpush1.msra.mxu0 %v1911
    %2044 = vmatprep.subr.mxu0 %v1916
    %2045 = vmatpush1.msra.mxu0 %v1915
    %2046 = vmatprep.subr.mxu0 %v1920
    %2047 = vmatpush1.msra.mxu0 %v1919
    %2048 = vmatprep.subr.mxu0 %v1924
    %2049 = vmatpush1.msra.mxu0 %v1923
    %2050 = vmatprep.subr.mxu0 %v1928
    %2051 = vmatpush1.msra.mxu0 %v1927
    %2052 = vmatprep.subr.mxu0 %v1932
    %2053 = vmatpush1.msra.mxu0 %v1931
    %2054 = vmatprep.subr.mxu0 %v1936
    %2055 = vmatpush1.msra.mxu0 %v1935
    %2056 = vmatprep.subr.mxu0 %v1940
    %2057 = vmatpush1.msra.mxu0 %v1939
    %2058 = vmatprep.subr.mxu0 %v1944
    %2059 = vmatpush1.msra.mxu0 %v1943
    %2060 = vmatprep.subr.mxu0 %v1948
    %2061 = vmatpush1.msra.mxu0 %v1947
    %2062 = vmatprep.subr.mxu0 %v1952
    %2063 = vmatpush1.msra.mxu0 %v1951
    %2064 = vmatprep.subr.mxu0 %v1956
    %2065 = vmatpush1.msra.mxu0 %v1955
    %2066 = vmatprep.subr.mxu0 %v1960
    %2067 = vmatpush1.msra.mxu0 %v1959
    %2068 = vmatprep.subr.mxu0 %v1964
    %2069 = vmatpush1.msra.mxu0 %v1963
    %2070 = vmatprep.subr.mxu0 %v1968
    %2071 = vmatpush1.msra.mxu0 %v1967
    %2072 = vmatprep.subr.mxu0 0.0
    %2073 = vmatpush1.msra.mxu0 0.0
    %2074 = vmatprep.subr.mxu0 0.0
    %2075 = vmatpush1.msra.mxu0 0.0
    %2076 = vmatprep.subr.mxu0 0.0
    %2077 = vmatpush1.msra.mxu0 0.0
    %2078 = vmatprep.subr.mxu0 0.0
    %2079 = vmatpush1.msra.mxu0 0.0
    %2080 = vmatprep.subr.mxu0 0.0
    %2081 = vmatpush1.msra.mxu0 0.0
    %2082 = vmatprep.subr.mxu0 0.0
    %2083 = vmatpush1.msra.mxu0 0.0
    %2084 = vmatprep.subr.mxu0 0.0
    %2085 = vmatpush1.msra.mxu0 0.0
    %2086 = vmatprep.subr.mxu0 0.0
    %2087 = vmatpush1.msra.mxu0 0.0
    %2088 = vmatprep.subr.mxu0 0.0
    %2089 = vmatpush1.msra.mxu0 0.0
    %2090 = vmatprep.subr.mxu0 0.0
    %2091 = vmatpush1.msra.mxu0 0.0
    %2092 = vmatprep.subr.mxu0 0.0
    %2093 = vmatpush1.msra.mxu0 0.0
    %2094 = vmatprep.subr.mxu0 0.0
    %2095 = vmatpush1.msra.mxu0 0.0
    %2096 = vmatprep.subr.mxu0 0.0
    %2097 = vmatpush1.msra.mxu0 0.0
    %2098 = vmatprep.subr.mxu0 0.0
    %2099 = vmatpush1.msra.mxu0 0.0
    %2100 = vmatprep.subr.mxu0 0.0
    %2101 = vmatpush1.msra.mxu0 0.0
    %2102 = vmatprep.subr.mxu0 0.0
    %2103 = vmatpush1.msra.mxu0 0.0
    %2104 = vmatprep.mubr.f32.mxu0 0.0
    %2105 = vmatmul.mubr.f32.gmra.mrb[0].mxu0 %v1904
    %v2106 = vpop.f32.mrb[0].mxu0
    %v2107 = vadd.f32 0.0, %v2106
    %v2108 = vpop.f32.mrb[0].mxu0
    %v2109 = vadd.f32 0.0, %v2108
    %2110 = vdwg.mxu0
    %v2111 = vadd.f32 %v1900, %v2036
    %v2112 = vadd.f32 %v1901, %v2038
    %v2113 = vadd.f32 %v1902, %v2107
    %v2114 = vadd.f32 %v1903, %v2109
    %v2115 = vxor.u32 %v2111, 2147483648
    %v2116 = vxor.u32 %v2112, 2147483648
    %v2117 = vxor.u32 %v2113, 2147483648
    %v2118 = vxor.u32 %v2114, 2147483648
    %v2119 = vmul.f32 %v2115, 1.442695
    %v2120 = vpow.pop %v2119
    %v2121 = vmul.f32 %v2116, 1.442695
    %v2122 = vpow.pop %v2121
    %v2123 = vmul.f32 %v2117, 1.442695
    %v2124 = vpow.pop %v2123
    %v2125 = vmul.f32 %v2118, 1.442695
    %v2126 = vpow.pop %v2125
    %v2127 = vadd.f32 %v2120, 1.0
    %v2128 = vadd.f32 %v2122, 1.0
    %v2129 = vadd.f32 %v2124, 1.0
    %v2130 = vadd.f32 %v2126, 1.0
    %v2131 = vrcp.pop %v2127
    %v2132 = vmul.f32 1.0, %v2131
    %v2133 = vrcp.pop %v2128
    %v2134 = vmul.f32 1.0, %v2133
    %v2135 = vrcp.pop %v2129
    %v2136 = vmul.f32 1.0, %v2135
    %v2137 = vrcp.pop %v2130
    %v2138 = vmul.f32 1.0, %v2137
    %v2139 = vmul.f32 %v2136, 2.0
    %v2140 = vsub.f32 %v2139, 1.0
    %v2141 = vld [vmem:[#allocation3] sm:$0xff]
    %v2142 = vmul.f32 %v2134, %v2141
    %v2143 = vmul.f32 %v2132, %v2140
    %v2144 = vadd.f32 %v2142, %v2143
    %v2145 = vtanh.pop %v2144
    %v2146 = vmul.f32 %v2138, %v2145
    %s2147 = sadd.s32 %s27, 7
    %v2148 = vstv %s2147
    %vm2149 = vcmp.lt.s32.totalorder %v2148, %v53
    %v2150 = vsel %vm2149, 1, 0
    %2151 = vset.pattern.permute.xlu0 0
    %2152 = vperm.xlu0 %2151, %v2150
    %v2153 = vpop.permute.xlu0 %2152
    %vm2154 = vcmp.eq.s32.totalorder %v2153, 1
    %v2155 = vsel %vm2154, %v2144, %v2141
    %2156 = vst [vmem:[#allocation3] sm:$0xff] %v2155
    %v2157 = vld [vmem:[#allocation2] sm:$0xff]
    %v2158 = vsel %vm2154, %v2146, %v2157
    %2159 = vst [vmem:[#allocation2] sm:$0xff] %v2158
    %v2160 = vsel %vm2154, %v2146, 0.0
    %s2161 = scalar_lea.vmem %s6, 56
    %2162 = vst [vmem:[%s2161] sm:$0xff] %v2160
  $region37: #{lstm_lm_forward.4} parent=0 // pred_fallthru
    _
  // Predicated region
  $region38: #{lstm_lm_forward.4} parent=0 // pred_check
    %p2163 = pneg %p28
  $region39: #{lstm_lm_forward.4} parent=0 // pred_check_branch
    %2165 = sbr.rel (%p2163) target = $region41
  $region40: #{lstm_lm_forward.4} parent=0 // pred_region
    %v2166 = vld [vmem:[#allocation2] sm:$0xff]
    %2167 = vst [vmem:[%s7] sm:$0xff] %v2166
    %v2168 = vld [vmem:[#allocation3] sm:$0xff]
    %2169 = vst [vmem:[%s8] sm:$0xff] %v2168
  $region41: #{lstm_lm_forward.4} parent=0 // pred_fallthru
    _
  // Predicated region
  $region42: #{lstm_lm_forward.4} parent=0 // pred_check
    _
  $region43: #{lstm_lm_forward.4} parent=0 // pred_check_branch
    %2171 = sbr.rel (0) target = $region45
  $region44: #{lstm_lm_forward.4} parent=0 // pred_region
    _
  $region45: #{lstm_lm_forward.4} parent=0 // pred_fallthru
    _
  // Predicated region
  $region46: #{lstm_lm_forward.4} parent=0 // pred_check
    _
  $region47: #{lstm_lm_forward.4} parent=0 // pred_check_branch
    %2173 = sbr.rel (0) target = $region49
  $region48: #{lstm_lm_forward.4} parent=0 // pred_region
    _
  $region49: #{lstm_lm_forward.4} parent=0 // pred_fallthru
    _
  // Predicated region
  $region50: #{lstm_lm_forward.4} parent=0 // pred_check
    _
  $region51: #{lstm_lm_forward.4} parent=0 // pred_check_branch
    %2175 = sbr.rel (0) target = $region53
  $region52: #{lstm_lm_forward.4} parent=0 // pred_region
    _
  $region53: #{lstm_lm_forward.4} parent=0 // pred_fallthru
    _
  // Predicated region
  $region54: #{lstm_lm_forward.4} parent=0 // pred_check
    _
  $region55: #{lstm_lm_forward.4} parent=0 // pred_check_branch
    %2177 = sbr.rel (0) target = $region57
  $region56: #{lstm_lm_forward.4} parent=0 // pred_region
    _
  $region57: #{lstm_lm_forward.4} parent=0 // pred_fallthru
    _
  // Predicated region
  $region58: #{lstm_lm_forward.4} parent=0 // pred_check
    _
  $region59: #{lstm_lm_forward.4} parent=0 // pred_check_branch
    %2179 = sbr.rel (0) target = $region61
  $region60: #{lstm_lm_forward.4} parent=0 // pred_region
    _
  $region61: #{lstm_lm_forward.4} parent=0 // pred_fallthru
    _
  // Predicated region
  $region62: #{lstm_lm_forward.4} parent=0 // pred_check
    _
  $region63: #{lstm_lm_forward.4} parent=0 // pred_check_branch
    %2181 = sbr.rel (0) target = $region65
  $region64: #{lstm_lm_forward.4} parent=0 // pred_region
    _
  $region65: #{lstm_lm_forward.4} parent=0 // pred_fallthru
    _

</llo_original>
